<compile_context>
chip_gen: v7x
topology: tpu7x:2x2x1
jax: 0.10.0
libtpu: 0.0.40
codegen_flags: <defaults>
</compile_context>

<pallas_src>
import jax
import jax.numpy as jnp
from jax.experimental import pallas as pl
from jax.experimental.pallas import tpu as pltpu

LANE = 128
SUBLANE = 8

IN_F, HID_F, OUT_F = 784, 800, 10     # logical (PyTorch) feature sizes
HID_P, OUT_P = 896, 128               # lane-padded (multiples of 128)


def _round_up(x, m):
    return (x + m - 1) // m * m


# ----------------------------------------------------------------------------
# Fused kernel: one batch tile per grid step, all weights resident in VMEM.
# Matmuls in bf16 on the MXU, accumulation + bias + ReLU epilogue in f32.
# ----------------------------------------------------------------------------
def _fused_mlp_kernel(x_ref, w1_ref, b1_ref, w2_ref, b2_ref, w3_ref, b3_ref,
                      o_ref):
    # fc1 + ReLU  (x already bf16, K = 784 unpadded)
    h = jnp.dot(x_ref[...], w1_ref[...], preferred_element_type=jnp.float32)
    h = jnp.maximum(h + b1_ref[...], 0.0)
    # fc2 + ReLU
    h = jnp.dot(h.astype(w2_ref.dtype), w2_ref[...],
                preferred_element_type=jnp.float32)
    h = jnp.maximum(h + b2_ref[...], 0.0)
    # fc3 (no ReLU)
    y = jnp.dot(h.astype(w3_ref.dtype), w3_ref[...],
                preferred_element_type=jnp.float32)
    o_ref[...] = (y + b3_ref[...]).astype(o_ref.dtype)


def _fused_mlp(xp, w1t, b1p, w2t, b2p, w3t, b3p, *, tb):
    """xp: (Bp, IN_F) bf16 input (batch padded to a multiple of tb).
    Returns (Bp, OUT_P) f32 padded logits."""
    Bp = xp.shape[0]
    grid = (Bp // tb,)

    flops = 2 * Bp * (IN_F * HID_P + HID_P * HID_P + HID_P * OUT_P)
    bytes_accessed = (
        xp.size * xp.dtype.itemsize
        + (w1t.size + w2t.size + w3t.size) * w1t.dtype.itemsize
        + (b1p.size + b2p.size + b3p.size) * 4
        + Bp * OUT_P * 4)

    # Weights/biases: constant index_map -> fetched once -> single-buffered.
    resident = dict(pipeline_mode=pl.Buffered(1))

    return pl.pallas_call(
        _fused_mlp_kernel,
        out_shape=jax.ShapeDtypeStruct((Bp, OUT_P), jnp.float32),
        grid_spec=pltpu.PrefetchScalarGridSpec(
            num_scalar_prefetch=0,
            grid=grid,
            in_specs=[
                pl.BlockSpec((tb, IN_F), lambda i: (i, 0)),                # x tile
                pl.BlockSpec((IN_F, HID_P), lambda i: (0, 0), **resident),  # w1t
                pl.BlockSpec((1, HID_P), lambda i: (0, 0), **resident),     # b1
                pl.BlockSpec((HID_P, HID_P), lambda i: (0, 0), **resident), # w2t
                pl.BlockSpec((1, HID_P), lambda i: (0, 0), **resident),     # b2
                pl.BlockSpec((HID_P, OUT_P), lambda i: (0, 0), **resident), # w3t
                pl.BlockSpec((1, OUT_P), lambda i: (0, 0), **resident),     # b3
            ],
            out_specs=pl.BlockSpec((tb, OUT_P), lambda i: (i, 0)),
        ),
        compiler_params=pltpu.CompilerParams(
            dimension_semantics=("parallel",),
            vmem_limit_bytes=20 << 20,   # ~6-10 MiB actually needed
        ),
        cost_estimate=pl.CostEstimate(
            flops=flops, transcendentals=0, bytes_accessed=bytes_accessed),
    )(xp, w1t, b1p, w2t, b2p, w3t, b3p)


# ----------------------------------------------------------------------------
# Parameter init (PyTorch-style) and one-time prep (transpose + pad + bf16).
# ----------------------------------------------------------------------------
def init_params(key):
    """PyTorch-style init: U(-1/sqrt(fan_in), 1/sqrt(fan_in)).
    Weights stored PyTorch-style as (out_features, in_features)."""
    sizes = [(HID_F, IN_F), (HID_F, HID_F), (OUT_F, HID_F)]
    params = []
    for i, (out_f, in_f) in enumerate(sizes):
        kw, kb = jax.random.split(jax.random.fold_in(key, i))
        bound = 1.0 / jnp.sqrt(jnp.float32(in_f))
        w = jax.random.uniform(kw, (out_f, in_f), jnp.float32, -bound, bound)
        b = jax.random.uniform(kb, (out_f,), jnp.float32, -bound, bound)
        params.append((w, b))
    return params


def prepare_params(params, compute_dtype=jnp.bfloat16):
    """Transpose to (in, out), zero-pad to lane multiples, cast to bf16 (once).

    w1t keeps its true K=784 (no feature-dim padding of x needed); biases stay
    in f32 for the f32 epilogue."""
    (w1, b1), (w2, b2), (w3, b3) = params

    def prep(w, b, in_p, out_p):
        out_f, in_f = w.shape
        wt = jnp.zeros((in_p, out_p), compute_dtype)
        wt = wt.at[:in_f, :out_f].set(w.T.astype(compute_dtype))
        bp = jnp.zeros((1, out_p), jnp.float32)
        bp = bp.at[0, :out_f].set(b.astype(jnp.float32))
        return wt, bp

    w1t, b1p = prep(w1, b1, IN_F, HID_P)    # (784, 896)
    w2t, b2p = prep(w2, b2, HID_P, HID_P)   # (896, 896)
    w3t, b3p = prep(w3, b3, HID_P, OUT_P)   # (896, 128)
    return (w1t, b1p, w2t, b2p, w3t, b3p)


# ----------------------------------------------------------------------------
# Forward pass matching FC_Net2: flatten -> fc1 -> relu -> fc2 -> relu -> fc3.
# ----------------------------------------------------------------------------
@jax.jit
def fc_net2_forward(x, prepped):
    w1t = prepped[0]
    B = x.shape[0]
    h = x.reshape(B, -1).astype(w1t.dtype)   # torch.flatten(x, 1), cast to bf16

    # Batch tile selection:
    #  * small B: single tile padded to >=8 sublanes (weight-load bound anyway)
    #  * large B: 128/256/512-row tiles, always >=2 parallel grid steps once
    #    B > 128 so both v7x TensorCores get work.
    if B <= 128:
        tb = max(SUBLANE, _round_up(B, SUBLANE))
    elif B <= 512:
        tb = 128
    elif B <= 1024:
        tb = 256
    else:
        tb = 512
    Bp = _round_up(B, tb)

    # Pad the batch dim only (feature dim stays 784 -> no materialized re-pad).
    if Bp != B:
        h = jnp.pad(h, ((0, Bp - B), (0, 0)))

    out_p = _fused_mlp(h, *prepped, tb=tb)
    return out_p[:B, :OUT_F]


if __name__ == "__main__":
    key = jax.random.PRNGKey(0)
    k_x, k_p = jax.random.split(key)

    # MNIST-like NCHW input: batch=2, 1 channel, 28x28 -> flattened 784 features.
    x = jax.random.normal(k_x, (2, 1, 28, 28), dtype=jnp.float32)
    params = init_params(k_p)
    prepped = prepare_params(params)   # transpose + pad + bf16 once, outside forward

    out = fc_net2_forward(x, prepped)
    jax.block_until_ready(out)

    assert out.shape == (2, 10), out.shape
    assert out.dtype == jnp.float32, out.dtype

    # Reference checks against plain JAX (unpadded, PyTorch-layout weights).
    (w1, b1), (w2, b2), (w3, b3) = params
    xf = x.reshape(2, -1)

    # (a) bf16-matched reference (same operand dtypes as the kernel): tight tol.
    def bdot(a, w):
        return jnp.dot(a.astype(jnp.bfloat16), w.T.astype(jnp.bfloat16),
                       preferred_element_type=jnp.float32)
    hb = jnp.maximum(bdot(xf, w1) + b1, 0.0)
    hb = jnp.maximum(bdot(hb, w2) + b2, 0.0)
    ref_bf16 = bdot(hb, w3) + b3
    assert jnp.allclose(out, ref_bf16, atol=1e-2, rtol=1e-2)

    # (b) full-f32 reference: loosened tolerance for bf16 operand rounding.
    hf = jnp.maximum(xf @ w1.T + b1, 0.0)
    hf = jnp.maximum(hf @ w2.T + b2, 0.0)
    ref_f32 = hf @ w3.T + b3
    assert jnp.allclose(out, ref_f32, atol=5e-2, rtol=5e-2)

    print("KERNEL_OK")
</pallas_src>

<mosaic_0001>
module attributes {stable_mosaic.version = 11 : i64} {
  func.func @_fused_mlp_kernel(%arg0: i32, %arg1: memref<8x784xbf16, #tpu.memory_space<vmem>>, %arg2: memref<784x896xbf16, #tpu.memory_space<vmem>>, %arg3: memref<1x896xf32, #tpu.memory_space<vmem>>, %arg4: memref<896x896xbf16, #tpu.memory_space<vmem>>, %arg5: memref<1x896xf32, #tpu.memory_space<vmem>>, %arg6: memref<896x128xbf16, #tpu.memory_space<vmem>>, %arg7: memref<1x128xf32, #tpu.memory_space<vmem>>, %arg8: memref<8x128xf32, #tpu.memory_space<vmem>>) attributes {dimension_semantics = [#tpu.dimension_semantics<parallel>], iteration_bounds = array<i64: 1>, scalar_prefetch = 0 : i64, scratch_operands = 0 : i64, tpu.core_type = #tpu.core_type<tc>, window_params = [{transform_indices = @transform_0, window_bounds = array<i64: 8, 784>}, {pipeline_mode = #tpu.pipeline_mode<synchronous>, transform_indices = @transform_1, window_bounds = array<i64: 784, 896>}, {pipeline_mode = #tpu.pipeline_mode<synchronous>, transform_indices = @transform_2, window_bounds = array<i64: 1, 896>}, {pipeline_mode = #tpu.pipeline_mode<synchronous>, transform_indices = @transform_3, window_bounds = array<i64: 896, 896>}, {pipeline_mode = #tpu.pipeline_mode<synchronous>, transform_indices = @transform_4, window_bounds = array<i64: 1, 896>}, {pipeline_mode = #tpu.pipeline_mode<synchronous>, transform_indices = @transform_5, window_bounds = array<i64: 896, 128>}, {pipeline_mode = #tpu.pipeline_mode<synchronous>, transform_indices = @transform_6, window_bounds = array<i64: 1, 128>}, {transform_indices = @transform_7, window_bounds = array<i64: 8, 128>}]} {
    %c0 = arith.constant 0 : index
    %c0_0 = arith.constant 0 : index
    %0 = vector.load %arg1[%c0, %c0_0] : memref<8x784xbf16, #tpu.memory_space<vmem>>, vector<8x784xbf16>
    %c0_1 = arith.constant 0 : index
    %c0_2 = arith.constant 0 : index
    %1 = vector.load %arg2[%c0_1, %c0_2] : memref<784x896xbf16, #tpu.memory_space<vmem>>, vector<784x896xbf16>
    %cst = arith.constant dense<0.000000e+00> : vector<8x896xf32>
    %2 = tpu.matmul %0, %1, %cst {dimension_numbers = #tpu.dot_dimension_numbers<[1], [0], [0], [1], [0, 0, 1, 1], [], []>} : vector<8x784xbf16>, vector<784x896xbf16>, vector<8x896xf32> -> vector<8x896xf32>
    %c0_3 = arith.constant 0 : index
    %c0_4 = arith.constant 0 : index
    %3 = vector.load %arg3[%c0_3, %c0_4] : memref<1x896xf32, #tpu.memory_space<vmem>>, vector<1x896xf32>
    %4 = vector.broadcast %3 : vector<1x896xf32> to vector<8x896xf32>
    %5 = arith.addf %2, %4 : vector<8x896xf32>
    %cst_5 = arith.constant 0.000000e+00 : f32
    %6 = vector.broadcast %cst_5 : f32 to vector<8x896xf32>
    %7 = arith.maximumf %5, %6 : vector<8x896xf32>
    %8 = arith.truncf %7 : vector<8x896xf32> to vector<8x896xbf16>
    %c0_6 = arith.constant 0 : index
    %c0_7 = arith.constant 0 : index
    %9 = vector.load %arg4[%c0_6, %c0_7] : memref<896x896xbf16, #tpu.memory_space<vmem>>, vector<896x896xbf16>
    %cst_8 = arith.constant dense<0.000000e+00> : vector<8x896xf32>
    %10 = tpu.matmul %8, %9, %cst_8 {dimension_numbers = #tpu.dot_dimension_numbers<[1], [0], [0], [1], [0, 0, 1, 1], [], []>} : vector<8x896xbf16>, vector<896x896xbf16>, vector<8x896xf32> -> vector<8x896xf32>
    %c0_9 = arith.constant 0 : index
    %c0_10 = arith.constant 0 : index
    %11 = vector.load %arg5[%c0_9, %c0_10] : memref<1x896xf32, #tpu.memory_space<vmem>>, vector<1x896xf32>
    %12 = vector.broadcast %11 : vector<1x896xf32> to vector<8x896xf32>
    %13 = arith.addf %10, %12 : vector<8x896xf32>
    %cst_11 = arith.constant 0.000000e+00 : f32
    %14 = vector.broadcast %cst_11 : f32 to vector<8x896xf32>
    %15 = arith.maximumf %13, %14 : vector<8x896xf32>
    %16 = arith.truncf %15 : vector<8x896xf32> to vector<8x896xbf16>
    %c0_12 = arith.constant 0 : index
    %c0_13 = arith.constant 0 : index
    %17 = vector.load %arg6[%c0_12, %c0_13] : memref<896x128xbf16, #tpu.memory_space<vmem>>, vector<896x128xbf16>
    %cst_14 = arith.constant dense<0.000000e+00> : vector<8x128xf32>
    %18 = tpu.matmul %16, %17, %cst_14 {dimension_numbers = #tpu.dot_dimension_numbers<[1], [0], [0], [1], [0, 0, 1, 1], [], []>} : vector<8x896xbf16>, vector<896x128xbf16>, vector<8x128xf32> -> vector<8x128xf32>
    %c0_15 = arith.constant 0 : index
    %c0_16 = arith.constant 0 : index
    %19 = vector.load %arg7[%c0_15, %c0_16] : memref<1x128xf32, #tpu.memory_space<vmem>>, vector<1x128xf32>
    %20 = vector.broadcast %19 : vector<1x128xf32> to vector<8x128xf32>
    %21 = arith.addf %18, %20 : vector<8x128xf32>
    %c0_17 = arith.constant 0 : index
    %c0_18 = arith.constant 0 : index
    %22 = vector.load %arg8[%c0_17, %c0_18] : memref<8x128xf32, #tpu.memory_space<vmem>>, vector<8x128xf32>
    tpu.vector_store %arg8[%c0_17, %c0_18], %21 {strides = array<i32>} : memref<8x128xf32, #tpu.memory_space<vmem>>, vector<8x128xf32>,
    return
  }
  func.func @transform_0(%arg0: i32) -> (i32, i32) {
    %c0_i32 = arith.constant 0 : i32
    %c0_i32_0 = arith.constant 0 : i32
    return %arg0, %c0_i32 : i32, i32
  }
  func.func @transform_1(%arg0: i32) -> (i32, i32) {
    %c0_i32 = arith.constant 0 : i32
    %c0_i32_0 = arith.constant 0 : i32
    %c0_i32_1 = arith.constant 0 : i32
    return %c0_i32, %c0_i32_0 : i32, i32
  }
  func.func @transform_2(%arg0: i32) -> (i32, i32) {
    %c0_i32 = arith.constant 0 : i32
    %c0_i32_0 = arith.constant 0 : i32
    %c0_i32_1 = arith.constant 0 : i32
    return %c0_i32, %c0_i32_0 : i32, i32
  }
  func.func @transform_3(%arg0: i32) -> (i32, i32) {
    %c0_i32 = arith.constant 0 : i32
    %c0_i32_0 = arith.constant 0 : i32
    %c0_i32_1 = arith.constant 0 : i32
    return %c0_i32, %c0_i32_0 : i32, i32
  }
  func.func @transform_4(%arg0: i32) -> (i32, i32) {
    %c0_i32 = arith.constant 0 : i32
    %c0_i32_0 = arith.constant 0 : i32
    %c0_i32_1 = arith.constant 0 : i32
    return %c0_i32, %c0_i32_0 : i32, i32
  }
  func.func @transform_5(%arg0: i32) -> (i32, i32) {
    %c0_i32 = arith.constant 0 : i32
    %c0_i32_0 = arith.constant 0 : i32
    %c0_i32_1 = arith.constant 0 : i32
    return %c0_i32, %c0_i32_0 : i32, i32
  }
  func.func @transform_6(%arg0: i32) -> (i32, i32) {
    %c0_i32 = arith.constant 0 : i32
    %c0_i32_0 = arith.constant 0 : i32
    %c0_i32_1 = arith.constant 0 : i32
    return %c0_i32, %c0_i32_0 : i32, i32
  }
  func.func @transform_7(%arg0: i32) -> (i32, i32) {
    %c0_i32 = arith.constant 0 : i32
    %c0_i32_0 = arith.constant 0 : i32
    return %arg0, %c0_i32 : i32, i32
  }
}

</mosaic_0001>

<llo_original>
// kernel: fc_net2_forward.1
$region0: #{fc_net2_forward.1}
  #allocation0 [shape = 'u32[]', space=smem, size = 0x4, offset = 0x4, fixed_abs, tag = 'smem constant byte address 0x4 - core index']
  #allocation1 [shape = 'u32[144,128]{1,0:T(1,128)}', space=vmem, size = 0x12000, scoped, tag = 'internal scratch']
  %s0 = inlined_call_operand.vmem [shape: bf16[8,784], index: 0, kind: input, shape index: {}]
  %s1 = inlined_call_operand.hbm [shape: bf16[784,896], index: 1, kind: input, shape index: {}]
  %s2 = inlined_call_operand.hbm [shape: f32[1,896], index: 2, kind: input, shape index: {}]
  %s3 = inlined_call_operand.hbm [shape: bf16[896,896], index: 3, kind: input, shape index: {}]
  %s4 = inlined_call_operand.hbm [shape: f32[1,896], index: 4, kind: input, shape index: {}]
  %s5 = inlined_call_operand.hbm [shape: bf16[896,128], index: 5, kind: input, shape index: {}]
  %s6 = inlined_call_operand.hbm [shape: f32[1,128], index: 6, kind: input, shape index: {}]
  %s7 = inlined_call_operand.vmem [shape: f32[8,128], index: 7, kind: output, shape index: {}]
  %s8 = sld [smem:[#allocation0]]
  $region62: #{fc_net2_forward.1} parent=0
    _
  %s10 = ssub.s32 1, %s8
  %s11 = scalar_select 0, %s10, %s8
  $region1: #{fc_net2_forward.1} parent=0
    #allocation2 [shape = 'u8[1404928]{0}', space=vmem, size = 0x157000, scoped, tag = 'input window, operand 1, single buffered']
    #allocation3 [shape = 's32[1]{0}', space=sflag, size = 0x4, scoped, tag = 'scoped memory for fc_net2_forward.1']
    #allocation4 [shape = 'u8[3584]{0}', space=vmem, size = 0x1000, scoped, tag = 'input window, operand 2, single buffered']
    #allocation5 [shape = 's32[1]{0}', space=sflag, size = 0x4, scoped, tag = 'scoped memory for fc_net2_forward.1']
    #allocation6 [shape = 'u8[1605632]{0}', space=vmem, size = 0x188000, scoped, tag = 'input window, operand 3, single buffered']
    #allocation7 [shape = 'u8[3584]{0}', space=vmem, size = 0x1000, scoped, tag = 'input window, operand 4, single buffered']
    #allocation8 [shape = 's32[1]{0}', space=sflag, size = 0x4, scoped, tag = 'scoped memory for fc_net2_forward.1']
    #allocation9 [shape = 'u8[229376]{0}', space=vmem, size = 0x38000, scoped, tag = 'input window, operand 5, single buffered']
    #allocation10 [shape = 'u8[512]{0}', space=vmem, size = 0x400, scoped, tag = 'input window, operand 6, single buffered']
    #allocation11 [shape = 's32[1]{0}', space=sflag, size = 0x4, scoped, tag = 'scoped memory for fc_net2_forward.1']
    %12 = vsyncpa [#allocation3], 0
    %13 = vsyncpa [#allocation5], 0
    %14 = vsyncpa [#allocation8], 0
    %15 = vsyncpa [#allocation11], 0
    // Predicated region
    $region2: #{fc_net2_forward.1} parent=1 // pred_check
      _
    $region3: #{fc_net2_forward.1} parent=1 // pred_check_branch
      %17 = sbr.rel (0) target = $region5
    $region4: #{fc_net2_forward.1} parent=1 // pred_region
      _
    $region5: #{fc_net2_forward.1} parent=1 // pred_fallthru
      _
    // Predicated region
    $region6: #{fc_net2_forward.1} parent=1 // pred_check
      _
    $region7: #{fc_net2_forward.1} parent=1 // pred_check_branch
      %19 = sbr.rel (0) target = $region9
    $region8: #{fc_net2_forward.1} parent=1 // pred_region
      %s21 = ssub.s32 43904, 43904
      %22 = vsyncadd [#allocation3], %s21
      %s23 = sshll.u32 [#allocation2], 4
      %s24 = int_to_ptr.vmem [resolvable:$true] %s23
      %29 = dma.hbm_to_vmem [thread:$0]  %s1, 43904, %s24, [#allocation3], 448, 448, 28
    $region9: #{fc_net2_forward.1} parent=1 // pred_fallthru
      _
    // Predicated region
    $region10: #{fc_net2_forward.1} parent=1 // pred_check
      _
    $region11: #{fc_net2_forward.1} parent=1 // pred_check_branch
      %31 = sbr.rel (0) target = $region13
    $region12: #{fc_net2_forward.1} parent=1 // pred_region
      %s33 = ssub.s32 112, 112
      %34 = vsyncadd [#allocation5], %s33
      %s36 = sshll.u32 [#allocation4], 4
      %s37 = int_to_ptr.vmem [resolvable:$true] %s36
      %39 = dma.hbm_to_vmem [thread:$0]  %s2, 112, %s37, [#allocation5]
    $region13: #{fc_net2_forward.1} parent=1 // pred_fallthru
      _
    // Predicated region
    $region14: #{fc_net2_forward.1} parent=1 // pred_check
      _
    $region15: #{fc_net2_forward.1} parent=1 // pred_check_branch
      %41 = sbr.rel (0) target = $region17
    $region16: #{fc_net2_forward.1} parent=1 // pred_region
      %s43 = ssub.s32 50176, 50176
      %44 = vsyncadd [#allocation5], %s43
      %s45 = sshll.u32 [#allocation6], 4
      %s46 = int_to_ptr.vmem [resolvable:$true] %s45
      %51 = dma.hbm_to_vmem [thread:$0]  %s3, 50176, %s46, [#allocation5], 448, 448, 28
    $region17: #{fc_net2_forward.1} parent=1 // pred_fallthru
      _
    // Predicated region
    $region18: #{fc_net2_forward.1} parent=1 // pred_check
      _
    $region19: #{fc_net2_forward.1} parent=1 // pred_check_branch
      %53 = sbr.rel (0) target = $region21
    $region20: #{fc_net2_forward.1} parent=1 // pred_region
      %s55 = ssub.s32 112, 112
      %56 = vsyncadd [#allocation8], %s55
      %s58 = sshll.u32 [#allocation7], 4
      %s59 = int_to_ptr.vmem [resolvable:$true] %s58
      %61 = dma.hbm_to_vmem [thread:$0]  %s4, 112, %s59, [#allocation8]
    $region21: #{fc_net2_forward.1} parent=1 // pred_fallthru
      _
    // Predicated region
    $region22: #{fc_net2_forward.1} parent=1 // pred_check
      _
    $region23: #{fc_net2_forward.1} parent=1 // pred_check_branch
      %63 = sbr.rel (0) target = $region25
    $region24: #{fc_net2_forward.1} parent=1 // pred_region
      %s65 = ssub.s32 7168, 7168
      %66 = vsyncadd [#allocation8], %s65
      %s67 = sshll.u32 [#allocation9], 4
      %s68 = int_to_ptr.vmem [resolvable:$true] %s67
      %73 = dma.hbm_to_vmem [thread:$0]  %s5, 7168, %s68, [#allocation8], 64, 64, 4
    $region25: #{fc_net2_forward.1} parent=1 // pred_fallthru
      _
    // Predicated region
    $region26: #{fc_net2_forward.1} parent=1 // pred_check
      _
    $region27: #{fc_net2_forward.1} parent=1 // pred_check_branch
      %75 = sbr.rel (0) target = $region29
    $region28: #{fc_net2_forward.1} parent=1 // pred_region
      %s77 = ssub.s32 16, 16
      %78 = vsyncadd [#allocation11], %s77
      %s80 = sshll.u32 [#allocation10], 4
      %s81 = int_to_ptr.vmem [resolvable:$true] %s80
      %83 = dma.hbm_to_vmem [thread:$0]  %s6, 16, %s81, [#allocation11]
    $region29: #{fc_net2_forward.1} parent=1 // pred_fallthru
      _
    // Predicated region
    $region30: #{fc_net2_forward.1} parent=1 // pred_check
      _
    $region31: #{fc_net2_forward.1} parent=1 // pred_check_branch
      %85 = sbr.rel (0) target = $region33
    $region32: #{fc_net2_forward.1} parent=1 // pred_region
      %86 = dma.done [#allocation3], 43904
    $region33: #{fc_net2_forward.1} parent=1 // pred_fallthru
      _
    // Predicated region
    $region34: #{fc_net2_forward.1} parent=1 // pred_check
      _
    $region35: #{fc_net2_forward.1} parent=1 // pred_check_branch
      %88 = sbr.rel (0) target = $region37
    $region36: #{fc_net2_forward.1} parent=1 // pred_region
      %89 = dma.done [#allocation5], 112
    $region37: #{fc_net2_forward.1} parent=1 // pred_fallthru
      _
    // Predicated region
    $region38: #{fc_net2_forward.1} parent=1 // pred_check
      _
    $region39: #{fc_net2_forward.1} parent=1 // pred_check_branch
      %91 = sbr.rel (0) target = $region41
    $region40: #{fc_net2_forward.1} parent=1 // pred_region
      %92 = dma.done [#allocation5], 50176
    $region41: #{fc_net2_forward.1} parent=1 // pred_fallthru
      _
    // Predicated region
    $region42: #{fc_net2_forward.1} parent=1 // pred_check
      _
    $region43: #{fc_net2_forward.1} parent=1 // pred_check_branch
      %94 = sbr.rel (0) target = $region45
    $region44: #{fc_net2_forward.1} parent=1 // pred_region
      %95 = dma.done [#allocation8], 112
    $region45: #{fc_net2_forward.1} parent=1 // pred_fallthru
      _
    // Predicated region
    $region46: #{fc_net2_forward.1} parent=1 // pred_check
      _
    $region47: #{fc_net2_forward.1} parent=1 // pred_check_branch
      %97 = sbr.rel (0) target = $region49
    $region48: #{fc_net2_forward.1} parent=1 // pred_region
      %98 = dma.done [#allocation8], 7168
    $region49: #{fc_net2_forward.1} parent=1 // pred_fallthru
      _
    // Predicated region
    $region50: #{fc_net2_forward.1} parent=1 // pred_check
      _
    $region51: #{fc_net2_forward.1} parent=1 // pred_check_branch
      %100 = sbr.rel (0) target = $region53
    $region52: #{fc_net2_forward.1} parent=1 // pred_region
      %101 = dma.done [#allocation11], 16
    $region53: #{fc_net2_forward.1} parent=1 // pred_fallthru
      _
    %v103 = vld [vmem:[%s0] sm:$0xff]
    %v104 = vld [vmem:[%s0 + $0x8] sm:$0xff]
    %v105 = vld [vmem:[%s0 + $0x10] sm:$0xff]
    %v106 = vld [vmem:[%s0 + $0x18] sm:$0xf]
    %v107 = vld [vmem:[#allocation2] sm:$0xff]
    %v108 = vld [vmem:[#allocation2 + $0x8] sm:$0xff]
    %v109 = vld [vmem:[#allocation2 + $0x10] sm:$0xff]
    %v110 = vld [vmem:[#allocation2 + $0x18] sm:$0xf]
    %v111 = vld [vmem:[#allocation2 + $0x1c] sm:$0xff]
    %v112 = vld [vmem:[#allocation2 + $0x24] sm:$0xff]
    %v113 = vld [vmem:[#allocation2 + $0x2c] sm:$0xff]
    %v114 = vld [vmem:[#allocation2 + $0x34] sm:$0xf]
    %v115 = vld [vmem:[#allocation2 + $0x38] sm:$0xff]
    %v116 = vld [vmem:[#allocation2 + $0x40] sm:$0xff]
    %v117 = vld [vmem:[#allocation2 + $0x48] sm:$0xff]
    %v118 = vld [vmem:[#allocation2 + $0x50] sm:$0xf]
    %v119 = vld [vmem:[#allocation2 + $0x54] sm:$0xff]
    %v120 = vld [vmem:[#allocation2 + $0x5c] sm:$0xff]
    %v121 = vld [vmem:[#allocation2 + $0x64] sm:$0xff]
    %v122 = vld [vmem:[#allocation2 + $0x6c] sm:$0xf]
    %v123 = vld [vmem:[#allocation2 + $0x70] sm:$0xff]
    %v124 = vld [vmem:[#allocation2 + $0x78] sm:$0xff]
    %v125 = vld [vmem:[#allocation2 + $0x80] sm:$0xff]
    %v126 = vld [vmem:[#allocation2 + $0x88] sm:$0xf]
    %v127 = vld [vmem:[#allocation2 + $0x8c] sm:$0xff]
    %v128 = vld [vmem:[#allocation2 + $0x94] sm:$0xff]
    %v129 = vld [vmem:[#allocation2 + $0x9c] sm:$0xff]
    %v130 = vld [vmem:[#allocation2 + $0xa4] sm:$0xf]
    %v131 = vld [vmem:[#allocation2 + $0xa8] sm:$0xff]
    %v132 = vld [vmem:[#allocation2 + $0xb0] sm:$0xff]
    %v133 = vld [vmem:[#allocation2 + $0xb8] sm:$0xff]
    %v134 = vld [vmem:[#allocation2 + $0xc0] sm:$0xf]
    %v135 = vld [vmem:[#allocation2 + $0xc4] sm:$0xff]
    %v136 = vld [vmem:[#allocation2 + $0xcc] sm:$0xff]
    %v137 = vld [vmem:[#allocation2 + $0xd4] sm:$0xff]
    %v138 = vld [vmem:[#allocation2 + $0xdc] sm:$0xf]
    %v139 = vld [vmem:[#allocation2 + $0xe0] sm:$0xff]
    %v140 = vld [vmem:[#allocation2 + $0xe8] sm:$0xff]
    %v141 = vld [vmem:[#allocation2 + $0xf0] sm:$0xff]
    %v142 = vld [vmem:[#allocation2 + $0xf8] sm:$0xf]
    %v143 = vld [vmem:[#allocation2 + $0xfc] sm:$0xff]
    %v144 = vld [vmem:[#allocation2 + $0x104] sm:$0xff]
    %v145 = vld [vmem:[#allocation2 + $0x10c] sm:$0xff]
    %v146 = vld [vmem:[#allocation2 + $0x114] sm:$0xf]
    %v147 = vld [vmem:[#allocation2 + $0x118] sm:$0xff]
    %v148 = vld [vmem:[#allocation2 + $0x120] sm:$0xff]
    %v149 = vld [vmem:[#allocation2 + $0x128] sm:$0xff]
    %v150 = vld [vmem:[#allocation2 + $0x130] sm:$0xf]
    %v151 = vld [vmem:[#allocation2 + $0x134] sm:$0xff]
    %v152 = vld [vmem:[#allocation2 + $0x13c] sm:$0xff]
    %v153 = vld [vmem:[#allocation2 + $0x144] sm:$0xff]
    %v154 = vld [vmem:[#allocation2 + $0x14c] sm:$0xf]
    %v155 = vld [vmem:[#allocation2 + $0x150] sm:$0xff]
    %v156 = vld [vmem:[#allocation2 + $0x158] sm:$0xff]
    %v157 = vld [vmem:[#allocation2 + $0x160] sm:$0xff]
    %v158 = vld [vmem:[#allocation2 + $0x168] sm:$0xf]
    %v159 = vld [vmem:[#allocation2 + $0x16c] sm:$0xff]
    %v160 = vld [vmem:[#allocation2 + $0x174] sm:$0xff]
    %v161 = vld [vmem:[#allocation2 + $0x17c] sm:$0xff]
    %v162 = vld [vmem:[#allocation2 + $0x184] sm:$0xf]
    %v163 = vld [vmem:[#allocation2 + $0x188] sm:$0xff]
    %v164 = vld [vmem:[#allocation2 + $0x190] sm:$0xff]
    %v165 = vld [vmem:[#allocation2 + $0x198] sm:$0xff]
    %v166 = vld [vmem:[#allocation2 + $0x1a0] sm:$0xf]
    %v167 = vld [vmem:[#allocation2 + $0x1a4] sm:$0xff]
    %v168 = vld [vmem:[#allocation2 + $0x1ac] sm:$0xff]
    %v169 = vld [vmem:[#allocation2 + $0x1b4] sm:$0xff]
    %v170 = vld [vmem:[#allocation2 + $0x1bc] sm:$0xf]
    %v171 = vld [vmem:[#allocation2 + $0x1c0] sm:$0xff]
    %v172 = vld [vmem:[#allocation2 + $0x1c8] sm:$0xff]
    %v173 = vld [vmem:[#allocation2 + $0x1d0] sm:$0xff]
    %v174 = vld [vmem:[#allocation2 + $0x1d8] sm:$0xf]
    %v175 = vld [vmem:[#allocation2 + $0x1dc] sm:$0xff]
    %v176 = vld [vmem:[#allocation2 + $0x1e4] sm:$0xff]
    %v177 = vld [vmem:[#allocation2 + $0x1ec] sm:$0xff]
    %v178 = vld [vmem:[#allocation2 + $0x1f4] sm:$0xf]
    %v179 = vld [vmem:[#allocation2 + $0x1f8] sm:$0xff]
    %v180 = vld [vmem:[#allocation2 + $0x200] sm:$0xff]
    %v181 = vld [vmem:[#allocation2 + $0x208] sm:$0xff]
    %v182 = vld [vmem:[#allocation2 + $0x210] sm:$0xf]
    %v183 = vld [vmem:[#allocation2 + $0x214] sm:$0xff]
    %v184 = vld [vmem:[#allocation2 + $0x21c] sm:$0xff]
    %v185 = vld [vmem:[#allocation2 + $0x224] sm:$0xff]
    %v186 = vld [vmem:[#allocation2 + $0x22c] sm:$0xf]
    %v187 = vld [vmem:[#allocation2 + $0x230] sm:$0xff]
    %v188 = vld [vmem:[#allocation2 + $0x238] sm:$0xff]
    %v189 = vld [vmem:[#allocation2 + $0x240] sm:$0xff]
    %v190 = vld [vmem:[#allocation2 + $0x248] sm:$0xf]
    %v191 = vld [vmem:[#allocation2 + $0x24c] sm:$0xff]
    %v192 = vld [vmem:[#allocation2 + $0x254] sm:$0xff]
    %v193 = vld [vmem:[#allocation2 + $0x25c] sm:$0xff]
    %v194 = vld [vmem:[#allocation2 + $0x264] sm:$0xf]
    %v195 = vld [vmem:[#allocation2 + $0x268] sm:$0xff]
    %v196 = vld [vmem:[#allocation2 + $0x270] sm:$0xff]
    %v197 = vld [vmem:[#allocation2 + $0x278] sm:$0xff]
    %v198 = vld [vmem:[#allocation2 + $0x280] sm:$0xf]
    %v199 = vld [vmem:[#allocation2 + $0x284] sm:$0xff]
    %v200 = vld [vmem:[#allocation2 + $0x28c] sm:$0xff]
    %v201 = vld [vmem:[#allocation2 + $0x294] sm:$0xff]
    %v202 = vld [vmem:[#allocation2 + $0x29c] sm:$0xf]
    %v203 = vld [vmem:[#allocation2 + $0x2a0] sm:$0xff]
    %v204 = vld [vmem:[#allocation2 + $0x2a8] sm:$0xff]
    %v205 = vld [vmem:[#allocation2 + $0x2b0] sm:$0xff]
    %v206 = vld [vmem:[#allocation2 + $0x2b8] sm:$0xf]
    %v207 = vld [vmem:[#allocation2 + $0x2bc] sm:$0xff]
    %v208 = vld [vmem:[#allocation2 + $0x2c4] sm:$0xff]
    %v209 = vld [vmem:[#allocation2 + $0x2cc] sm:$0xff]
    %v210 = vld [vmem:[#allocation2 + $0x2d4] sm:$0xf]
    %v211 = vld [vmem:[#allocation2 + $0x2d8] sm:$0xff]
    %v212 = vld [vmem:[#allocation2 + $0x2e0] sm:$0xff]
    %v213 = vld [vmem:[#allocation2 + $0x2e8] sm:$0xff]
    %v214 = vld [vmem:[#allocation2 + $0x2f0] sm:$0xf]
    %v215 = vld [vmem:[#allocation2 + $0x2f4] sm:$0xff]
    %v216 = vld [vmem:[#allocation2 + $0x2fc] sm:$0xff]
    %v217 = vld [vmem:[#allocation2 + $0x304] sm:$0xff]
    %v218 = vld [vmem:[#allocation2 + $0x30c] sm:$0xf]
    %v219 = vld [vmem:[#allocation2 + $0x310] sm:$0xff]
    %v220 = vld [vmem:[#allocation2 + $0x318] sm:$0xff]
    %v221 = vld [vmem:[#allocation2 + $0x320] sm:$0xff]
    %v222 = vld [vmem:[#allocation2 + $0x328] sm:$0xf]
    %v223 = vld [vmem:[#allocation2 + $0x32c] sm:$0xff]
    %v224 = vld [vmem:[#allocation2 + $0x334] sm:$0xff]
    %v225 = vld [vmem:[#allocation2 + $0x33c] sm:$0xff]
    %v226 = vld [vmem:[#allocation2 + $0x344] sm:$0xf]
    %v227 = vld [vmem:[#allocation2 + $0x348] sm:$0xff]
    %v228 = vld [vmem:[#allocation2 + $0x350] sm:$0xff]
    %v229 = vld [vmem:[#allocation2 + $0x358] sm:$0xff]
    %v230 = vld [vmem:[#allocation2 + $0x360] sm:$0xf]
    %v231 = vld [vmem:[#allocation2 + $0x364] sm:$0xff]
    %v232 = vld [vmem:[#allocation2 + $0x36c] sm:$0xff]
    %v233 = vld [vmem:[#allocation2 + $0x374] sm:$0xff]
    %v234 = vld [vmem:[#allocation2 + $0x37c] sm:$0xf]
    %v235 = vld [vmem:[#allocation2 + $0x380] sm:$0xff]
    %v236 = vld [vmem:[#allocation2 + $0x388] sm:$0xff]
    %v237 = vld [vmem:[#allocation2 + $0x390] sm:$0xff]
    %v238 = vld [vmem:[#allocation2 + $0x398] sm:$0xf]
    %v239 = vld [vmem:[#allocation2 + $0x39c] sm:$0xff]
    %v240 = vld [vmem:[#allocation2 + $0x3a4] sm:$0xff]
    %v241 = vld [vmem:[#allocation2 + $0x3ac] sm:$0xff]
    %v242 = vld [vmem:[#allocation2 + $0x3b4] sm:$0xf]
    %v243 = vld [vmem:[#allocation2 + $0x3b8] sm:$0xff]
    %v244 = vld [vmem:[#allocation2 + $0x3c0] sm:$0xff]
    %v245 = vld [vmem:[#allocation2 + $0x3c8] sm:$0xff]
    %v246 = vld [vmem:[#allocation2 + $0x3d0] sm:$0xf]
    %v247 = vld [vmem:[#allocation2 + $0x3d4] sm:$0xff]
    %v248 = vld [vmem:[#allocation2 + $0x3dc] sm:$0xff]
    %v249 = vld [vmem:[#allocation2 + $0x3e4] sm:$0xff]
    %v250 = vld [vmem:[#allocation2 + $0x3ec] sm:$0xf]
    %v251 = vld [vmem:[#allocation2 + $0x3f0] sm:$0xff]
    %v252 = vld [vmem:[#allocation2 + $0x3f8] sm:$0xff]
    %v253 = vld [vmem:[#allocation2 + $0x400] sm:$0xff]
    %v254 = vld [vmem:[#allocation2 + $0x408] sm:$0xf]
    %v255 = vld [vmem:[#allocation2 + $0x40c] sm:$0xff]
    %v256 = vld [vmem:[#allocation2 + $0x414] sm:$0xff]
    %v257 = vld [vmem:[#allocation2 + $0x41c] sm:$0xff]
    %v258 = vld [vmem:[#allocation2 + $0x424] sm:$0xf]
    %v259 = vld [vmem:[#allocation2 + $0x428] sm:$0xff]
    %v260 = vld [vmem:[#allocation2 + $0x430] sm:$0xff]
    %v261 = vld [vmem:[#allocation2 + $0x438] sm:$0xff]
    %v262 = vld [vmem:[#allocation2 + $0x440] sm:$0xf]
    %v263 = vld [vmem:[#allocation2 + $0x444] sm:$0xff]
    %v264 = vld [vmem:[#allocation2 + $0x44c] sm:$0xff]
    %v265 = vld [vmem:[#allocation2 + $0x454] sm:$0xff]
    %v266 = vld [vmem:[#allocation2 + $0x45c] sm:$0xf]
    %v267 = vld [vmem:[#allocation2 + $0x460] sm:$0xff]
    %v268 = vld [vmem:[#allocation2 + $0x468] sm:$0xff]
    %v269 = vld [vmem:[#allocation2 + $0x470] sm:$0xff]
    %v270 = vld [vmem:[#allocation2 + $0x478] sm:$0xf]
    %v271 = vld [vmem:[#allocation2 + $0x47c] sm:$0xff]
    %v272 = vld [vmem:[#allocation2 + $0x484] sm:$0xff]
    %v273 = vld [vmem:[#allocation2 + $0x48c] sm:$0xff]
    %v274 = vld [vmem:[#allocation2 + $0x494] sm:$0xf]
    %v275 = vld [vmem:[#allocation2 + $0x498] sm:$0xff]
    %v276 = vld [vmem:[#allocation2 + $0x4a0] sm:$0xff]
    %v277 = vld [vmem:[#allocation2 + $0x4a8] sm:$0xff]
    %v278 = vld [vmem:[#allocation2 + $0x4b0] sm:$0xf]
    %v279 = vld [vmem:[#allocation2 + $0x4b4] sm:$0xff]
    %v280 = vld [vmem:[#allocation2 + $0x4bc] sm:$0xff]
    %v281 = vld [vmem:[#allocation2 + $0x4c4] sm:$0xff]
    %v282 = vld [vmem:[#allocation2 + $0x4cc] sm:$0xf]
    %v283 = vld [vmem:[#allocation2 + $0x4d0] sm:$0xff]
    %v284 = vld [vmem:[#allocation2 + $0x4d8] sm:$0xff]
    %v285 = vld [vmem:[#allocation2 + $0x4e0] sm:$0xff]
    %v286 = vld [vmem:[#allocation2 + $0x4e8] sm:$0xf]
    %v287 = vld [vmem:[#allocation2 + $0x4ec] sm:$0xff]
    %v288 = vld [vmem:[#allocation2 + $0x4f4] sm:$0xff]
    %v289 = vld [vmem:[#allocation2 + $0x4fc] sm:$0xff]
    %v290 = vld [vmem:[#allocation2 + $0x504] sm:$0xf]
    %v291 = vld [vmem:[#allocation2 + $0x508] sm:$0xff]
    %v292 = vld [vmem:[#allocation2 + $0x510] sm:$0xff]
    %v293 = vld [vmem:[#allocation2 + $0x518] sm:$0xff]
    %v294 = vld [vmem:[#allocation2 + $0x520] sm:$0xf]
    %v295 = vld [vmem:[#allocation2 + $0x524] sm:$0xff]
    %v296 = vld [vmem:[#allocation2 + $0x52c] sm:$0xff]
    %v297 = vld [vmem:[#allocation2 + $0x534] sm:$0xff]
    %v298 = vld [vmem:[#allocation2 + $0x53c] sm:$0xf]
    %v299 = vld [vmem:[#allocation2 + $0x540] sm:$0xff]
    %v300 = vld [vmem:[#allocation2 + $0x548] sm:$0xff]
    %v301 = vld [vmem:[#allocation2 + $0x550] sm:$0xff]
    %v302 = vld [vmem:[#allocation2 + $0x558] sm:$0xf]
    %v303 = vld [vmem:[#allocation2 + $0x55c] sm:$0xff]
    %v304 = vld [vmem:[#allocation2 + $0x564] sm:$0xff]
    %v305 = vld [vmem:[#allocation2 + $0x56c] sm:$0xff]
    %v306 = vld [vmem:[#allocation2 + $0x574] sm:$0xf]
    %v307 = vld [vmem:[#allocation2 + $0x578] sm:$0xff]
    %v308 = vld [vmem:[#allocation2 + $0x580] sm:$0xff]
    %v309 = vld [vmem:[#allocation2 + $0x588] sm:$0xff]
    %v310 = vld [vmem:[#allocation2 + $0x590] sm:$0xf]
    %v311 = vld [vmem:[#allocation2 + $0x594] sm:$0xff]
    %v312 = vld [vmem:[#allocation2 + $0x59c] sm:$0xff]
    %v313 = vld [vmem:[#allocation2 + $0x5a4] sm:$0xff]
    %v314 = vld [vmem:[#allocation2 + $0x5ac] sm:$0xf]
    %v315 = vld [vmem:[#allocation2 + $0x5b0] sm:$0xff]
    %v316 = vld [vmem:[#allocation2 + $0x5b8] sm:$0xff]
    %v317 = vld [vmem:[#allocation2 + $0x5c0] sm:$0xff]
    %v318 = vld [vmem:[#allocation2 + $0x5c8] sm:$0xf]
    %v319 = vld [vmem:[#allocation2 + $0x5cc] sm:$0xff]
    %v320 = vld [vmem:[#allocation2 + $0x5d4] sm:$0xff]
    %v321 = vld [vmem:[#allocation2 + $0x5dc] sm:$0xff]
    %v322 = vld [vmem:[#allocation2 + $0x5e4] sm:$0xf]
    %v323 = vld [vmem:[#allocation2 + $0x5e8] sm:$0xff]
    %v324 = vld [vmem:[#allocation2 + $0x5f0] sm:$0xff]
    %v325 = vld [vmem:[#allocation2 + $0x5f8] sm:$0xff]
    %v326 = vld [vmem:[#allocation2 + $0x600] sm:$0xf]
    %v327 = vld [vmem:[#allocation2 + $0x604] sm:$0xff]
    %v328 = vld [vmem:[#allocation2 + $0x60c] sm:$0xff]
    %v329 = vld [vmem:[#allocation2 + $0x614] sm:$0xff]
    %v330 = vld [vmem:[#allocation2 + $0x61c] sm:$0xf]
    %v331 = vld [vmem:[#allocation2 + $0x620] sm:$0xff]
    %v332 = vld [vmem:[#allocation2 + $0x628] sm:$0xff]
    %v333 = vld [vmem:[#allocation2 + $0x630] sm:$0xff]
    %v334 = vld [vmem:[#allocation2 + $0x638] sm:$0xf]
    %v335 = vld [vmem:[#allocation2 + $0x63c] sm:$0xff]
    %v336 = vld [vmem:[#allocation2 + $0x644] sm:$0xff]
    %v337 = vld [vmem:[#allocation2 + $0x64c] sm:$0xff]
    %v338 = vld [vmem:[#allocation2 + $0x654] sm:$0xf]
    %v339 = vld [vmem:[#allocation2 + $0x658] sm:$0xff]
    %v340 = vld [vmem:[#allocation2 + $0x660] sm:$0xff]
    %v341 = vld [vmem:[#allocation2 + $0x668] sm:$0xff]
    %v342 = vld [vmem:[#allocation2 + $0x670] sm:$0xf]
    %v343 = vld [vmem:[#allocation2 + $0x674] sm:$0xff]
    %v344 = vld [vmem:[#allocation2 + $0x67c] sm:$0xff]
    %v345 = vld [vmem:[#allocation2 + $0x684] sm:$0xff]
    %v346 = vld [vmem:[#allocation2 + $0x68c] sm:$0xf]
    %v347 = vld [vmem:[#allocation2 + $0x690] sm:$0xff]
    %v348 = vld [vmem:[#allocation2 + $0x698] sm:$0xff]
    %v349 = vld [vmem:[#allocation2 + $0x6a0] sm:$0xff]
    %v350 = vld [vmem:[#allocation2 + $0x6a8] sm:$0xf]
    %v351 = vld [vmem:[#allocation2 + $0x6ac] sm:$0xff]
    %v352 = vld [vmem:[#allocation2 + $0x6b4] sm:$0xff]
    %v353 = vld [vmem:[#allocation2 + $0x6bc] sm:$0xff]
    %v354 = vld [vmem:[#allocation2 + $0x6c4] sm:$0xf]
    %v355 = vld [vmem:[#allocation2 + $0x6c8] sm:$0xff]
    %v356 = vld [vmem:[#allocation2 + $0x6d0] sm:$0xff]
    %v357 = vld [vmem:[#allocation2 + $0x6d8] sm:$0xff]
    %v358 = vld [vmem:[#allocation2 + $0x6e0] sm:$0xf]
    %v359 = vld [vmem:[#allocation2 + $0x6e4] sm:$0xff]
    %v360 = vld [vmem:[#allocation2 + $0x6ec] sm:$0xff]
    %v361 = vld [vmem:[#allocation2 + $0x6f4] sm:$0xff]
    %v362 = vld [vmem:[#allocation2 + $0x6fc] sm:$0xf]
    %v363 = vld [vmem:[#allocation2 + $0x700] sm:$0xff]
    %v364 = vld [vmem:[#allocation2 + $0x708] sm:$0xff]
    %v365 = vld [vmem:[#allocation2 + $0x710] sm:$0xff]
    %v366 = vld [vmem:[#allocation2 + $0x718] sm:$0xf]
    %v367 = vld [vmem:[#allocation2 + $0x71c] sm:$0xff]
    %v368 = vld [vmem:[#allocation2 + $0x724] sm:$0xff]
    %v369 = vld [vmem:[#allocation2 + $0x72c] sm:$0xff]
    %v370 = vld [vmem:[#allocation2 + $0x734] sm:$0xf]
    %v371 = vld [vmem:[#allocation2 + $0x738] sm:$0xff]
    %v372 = vld [vmem:[#allocation2 + $0x740] sm:$0xff]
    %v373 = vld [vmem:[#allocation2 + $0x748] sm:$0xff]
    %v374 = vld [vmem:[#allocation2 + $0x750] sm:$0xf]
    %v375 = vld [vmem:[#allocation2 + $0x754] sm:$0xff]
    %v376 = vld [vmem:[#allocation2 + $0x75c] sm:$0xff]
    %v377 = vld [vmem:[#allocation2 + $0x764] sm:$0xff]
    %v378 = vld [vmem:[#allocation2 + $0x76c] sm:$0xf]
    %v379 = vld [vmem:[#allocation2 + $0x770] sm:$0xff]
    %v380 = vld [vmem:[#allocation2 + $0x778] sm:$0xff]
    %v381 = vld [vmem:[#allocation2 + $0x780] sm:$0xff]
    %v382 = vld [vmem:[#allocation2 + $0x788] sm:$0xf]
    %v383 = vld [vmem:[#allocation2 + $0x78c] sm:$0xff]
    %v384 = vld [vmem:[#allocation2 + $0x794] sm:$0xff]
    %v385 = vld [vmem:[#allocation2 + $0x79c] sm:$0xff]
    %v386 = vld [vmem:[#allocation2 + $0x7a4] sm:$0xf]
    %v387 = vld [vmem:[#allocation2 + $0x7a8] sm:$0xff]
    %v388 = vld [vmem:[#allocation2 + $0x7b0] sm:$0xff]
    %v389 = vld [vmem:[#allocation2 + $0x7b8] sm:$0xff]
    %v390 = vld [vmem:[#allocation2 + $0x7c0] sm:$0xf]
    %v391 = vld [vmem:[#allocation2 + $0x7c4] sm:$0xff]
    %v392 = vld [vmem:[#allocation2 + $0x7cc] sm:$0xff]
    %v393 = vld [vmem:[#allocation2 + $0x7d4] sm:$0xff]
    %v394 = vld [vmem:[#allocation2 + $0x7dc] sm:$0xf]
    %v395 = vld [vmem:[#allocation2 + $0x7e0] sm:$0xff]
    %v396 = vld [vmem:[#allocation2 + $0x7e8] sm:$0xff]
    %v397 = vld [vmem:[#allocation2 + $0x7f0] sm:$0xff]
    %v398 = vld [vmem:[#allocation2 + $0x7f8] sm:$0xf]
    %v399 = vld [vmem:[#allocation2 + $0x7fc] sm:$0xff]
    %v400 = vld [vmem:[#allocation2 + $0x804] sm:$0xff]
    %v401 = vld [vmem:[#allocation2 + $0x80c] sm:$0xff]
    %v402 = vld [vmem:[#allocation2 + $0x814] sm:$0xf]
    %v403 = vld [vmem:[#allocation2 + $0x818] sm:$0xff]
    %v404 = vld [vmem:[#allocation2 + $0x820] sm:$0xff]
    %v405 = vld [vmem:[#allocation2 + $0x828] sm:$0xff]
    %v406 = vld [vmem:[#allocation2 + $0x830] sm:$0xf]
    %v407 = vld [vmem:[#allocation2 + $0x834] sm:$0xff]
    %v408 = vld [vmem:[#allocation2 + $0x83c] sm:$0xff]
    %v409 = vld [vmem:[#allocation2 + $0x844] sm:$0xff]
    %v410 = vld [vmem:[#allocation2 + $0x84c] sm:$0xf]
    %v411 = vld [vmem:[#allocation2 + $0x850] sm:$0xff]
    %v412 = vld [vmem:[#allocation2 + $0x858] sm:$0xff]
    %v413 = vld [vmem:[#allocation2 + $0x860] sm:$0xff]
    %v414 = vld [vmem:[#allocation2 + $0x868] sm:$0xf]
    %v415 = vld [vmem:[#allocation2 + $0x86c] sm:$0xff]
    %v416 = vld [vmem:[#allocation2 + $0x874] sm:$0xff]
    %v417 = vld [vmem:[#allocation2 + $0x87c] sm:$0xff]
    %v418 = vld [vmem:[#allocation2 + $0x884] sm:$0xf]
    %v419 = vld [vmem:[#allocation2 + $0x888] sm:$0xff]
    %v420 = vld [vmem:[#allocation2 + $0x890] sm:$0xff]
    %v421 = vld [vmem:[#allocation2 + $0x898] sm:$0xff]
    %v422 = vld [vmem:[#allocation2 + $0x8a0] sm:$0xf]
    %v423 = vld [vmem:[#allocation2 + $0x8a4] sm:$0xff]
    %v424 = vld [vmem:[#allocation2 + $0x8ac] sm:$0xff]
    %v425 = vld [vmem:[#allocation2 + $0x8b4] sm:$0xff]
    %v426 = vld [vmem:[#allocation2 + $0x8bc] sm:$0xf]
    %v427 = vld [vmem:[#allocation2 + $0x8c0] sm:$0xff]
    %v428 = vld [vmem:[#allocation2 + $0x8c8] sm:$0xff]
    %v429 = vld [vmem:[#allocation2 + $0x8d0] sm:$0xff]
    %v430 = vld [vmem:[#allocation2 + $0x8d8] sm:$0xf]
    %v431 = vld [vmem:[#allocation2 + $0x8dc] sm:$0xff]
    %v432 = vld [vmem:[#allocation2 + $0x8e4] sm:$0xff]
    %v433 = vld [vmem:[#allocation2 + $0x8ec] sm:$0xff]
    %v434 = vld [vmem:[#allocation2 + $0x8f4] sm:$0xf]
    %v435 = vld [vmem:[#allocation2 + $0x8f8] sm:$0xff]
    %v436 = vld [vmem:[#allocation2 + $0x900] sm:$0xff]
    %v437 = vld [vmem:[#allocation2 + $0x908] sm:$0xff]
    %v438 = vld [vmem:[#allocation2 + $0x910] sm:$0xf]
    %v439 = vld [vmem:[#allocation2 + $0x914] sm:$0xff]
    %v440 = vld [vmem:[#allocation2 + $0x91c] sm:$0xff]
    %v441 = vld [vmem:[#allocation2 + $0x924] sm:$0xff]
    %v442 = vld [vmem:[#allocation2 + $0x92c] sm:$0xf]
    %v443 = vld [vmem:[#allocation2 + $0x930] sm:$0xff]
    %v444 = vld [vmem:[#allocation2 + $0x938] sm:$0xff]
    %v445 = vld [vmem:[#allocation2 + $0x940] sm:$0xff]
    %v446 = vld [vmem:[#allocation2 + $0x948] sm:$0xf]
    %v447 = vld [vmem:[#allocation2 + $0x94c] sm:$0xff]
    %v448 = vld [vmem:[#allocation2 + $0x954] sm:$0xff]
    %v449 = vld [vmem:[#allocation2 + $0x95c] sm:$0xff]
    %v450 = vld [vmem:[#allocation2 + $0x964] sm:$0xf]
    %v451 = vld [vmem:[#allocation2 + $0x968] sm:$0xff]
    %v452 = vld [vmem:[#allocation2 + $0x970] sm:$0xff]
    %v453 = vld [vmem:[#allocation2 + $0x978] sm:$0xff]
    %v454 = vld [vmem:[#allocation2 + $0x980] sm:$0xf]
    %v455 = vld [vmem:[#allocation2 + $0x984] sm:$0xff]
    %v456 = vld [vmem:[#allocation2 + $0x98c] sm:$0xff]
    %v457 = vld [vmem:[#allocation2 + $0x994] sm:$0xff]
    %v458 = vld [vmem:[#allocation2 + $0x99c] sm:$0xf]
    %v459 = vld [vmem:[#allocation2 + $0x9a0] sm:$0xff]
    %v460 = vld [vmem:[#allocation2 + $0x9a8] sm:$0xff]
    %v461 = vld [vmem:[#allocation2 + $0x9b0] sm:$0xff]
    %v462 = vld [vmem:[#allocation2 + $0x9b8] sm:$0xf]
    %v463 = vld [vmem:[#allocation2 + $0x9bc] sm:$0xff]
    %v464 = vld [vmem:[#allocation2 + $0x9c4] sm:$0xff]
    %v465 = vld [vmem:[#allocation2 + $0x9cc] sm:$0xff]
    %v466 = vld [vmem:[#allocation2 + $0x9d4] sm:$0xf]
    %v467 = vld [vmem:[#allocation2 + $0x9d8] sm:$0xff]
    %v468 = vld [vmem:[#allocation2 + $0x9e0] sm:$0xff]
    %v469 = vld [vmem:[#allocation2 + $0x9e8] sm:$0xff]
    %v470 = vld [vmem:[#allocation2 + $0x9f0] sm:$0xf]
    %v471 = vld [vmem:[#allocation2 + $0x9f4] sm:$0xff]
    %v472 = vld [vmem:[#allocation2 + $0x9fc] sm:$0xff]
    %v473 = vld [vmem:[#allocation2 + $0xa04] sm:$0xff]
    %v474 = vld [vmem:[#allocation2 + $0xa0c] sm:$0xf]
    %v475 = vld [vmem:[#allocation2 + $0xa10] sm:$0xff]
    %v476 = vld [vmem:[#allocation2 + $0xa18] sm:$0xff]
    %v477 = vld [vmem:[#allocation2 + $0xa20] sm:$0xff]
    %v478 = vld [vmem:[#allocation2 + $0xa28] sm:$0xf]
    %v479 = vld [vmem:[#allocation2 + $0xa2c] sm:$0xff]
    %v480 = vld [vmem:[#allocation2 + $0xa34] sm:$0xff]
    %v481 = vld [vmem:[#allocation2 + $0xa3c] sm:$0xff]
    %v482 = vld [vmem:[#allocation2 + $0xa44] sm:$0xf]
    %v483 = vld [vmem:[#allocation2 + $0xa48] sm:$0xff]
    %v484 = vld [vmem:[#allocation2 + $0xa50] sm:$0xff]
    %v485 = vld [vmem:[#allocation2 + $0xa58] sm:$0xff]
    %v486 = vld [vmem:[#allocation2 + $0xa60] sm:$0xf]
    %v487 = vld [vmem:[#allocation2 + $0xa64] sm:$0xff]
    %v488 = vld [vmem:[#allocation2 + $0xa6c] sm:$0xff]
    %v489 = vld [vmem:[#allocation2 + $0xa74] sm:$0xff]
    %v490 = vld [vmem:[#allocation2 + $0xa7c] sm:$0xf]
    %v491 = vld [vmem:[#allocation2 + $0xa80] sm:$0xff]
    %v492 = vld [vmem:[#allocation2 + $0xa88] sm:$0xff]
    %v493 = vld [vmem:[#allocation2 + $0xa90] sm:$0xff]
    %v494 = vld [vmem:[#allocation2 + $0xa98] sm:$0xf]
    %v495 = vld [vmem:[#allocation2 + $0xa9c] sm:$0xff]
    %v496 = vld [vmem:[#allocation2 + $0xaa4] sm:$0xff]
    %v497 = vld [vmem:[#allocation2 + $0xaac] sm:$0xff]
    %v498 = vld [vmem:[#allocation2 + $0xab4] sm:$0xf]
    %v499 = vld [vmem:[#allocation4] sm:$0xff]
    %v501 = vlaneseq
    %v502 = vshrl.u32 %v501, 7
    %v503 = vsub.s32 0, %v502
    %v504 = vrot.slane %v499, %v503
    %v505 = vlaneseq
    %v506 = vshrl.u32 %v505, 7
    %v507 = vsub.s32 1, %v506
    %v508 = vrot.slane %v499, %v507
    %v509 = vlaneseq
    %v510 = vshrl.u32 %v509, 7
    %v511 = vsub.s32 2, %v510
    %v512 = vrot.slane %v499, %v511
    %v513 = vlaneseq
    %v514 = vshrl.u32 %v513, 7
    %v515 = vsub.s32 3, %v514
    %v516 = vrot.slane %v499, %v515
    %v517 = vlaneseq
    %v518 = vshrl.u32 %v517, 7
    %v519 = vsub.s32 4, %v518
    %v520 = vrot.slane %v499, %v519
    %v521 = vlaneseq
    %v522 = vshrl.u32 %v521, 7
    %v523 = vsub.s32 5, %v522
    %v524 = vrot.slane %v499, %v523
    %v525 = vlaneseq
    %v526 = vshrl.u32 %v525, 7
    %v527 = vsub.s32 6, %v526
    %v528 = vrot.slane %v499, %v527
    %v540 = vunpack.c.l.b16 %v103
    %v541 = vunpack.c.h.b16 %v103
    %v542 = vunpack.c.l.b16 %v104
    %v543 = vunpack.c.h.b16 %v104
    %v544 = vunpack.c.l.b16 %v105
    %v545 = vunpack.c.h.b16 %v105
    %v546 = vunpack.c.l.b16 %v106
    %v547 = vpack.c.b16 %v540, %v540
    %v548 = vpack.c.b16 %v541, %v541
    %v549 = vpack.c.b16 %v542, %v542
    %v550 = vpack.c.b16 %v543, %v543
    %v551 = vpack.c.b16 %v544, %v544
    %v552 = vpack.c.b16 %v545, %v545
    %v553 = vpack.c.b16 %v546, %v546
    %v952 = vunpack.c.l.b16 %v107
    %v953 = vunpack.c.h.b16 %v107
    %v954 = vunpack.c.l.b16 %v108
    %v955 = vunpack.c.h.b16 %v108
    %v956 = vunpack.c.l.b16 %v109
    %v957 = vunpack.c.h.b16 %v109
    %v958 = vunpack.c.l.b16 %v110
    %v959 = vunpack.c.l.b16 %v111
    %v960 = vunpack.c.h.b16 %v111
    %v961 = vunpack.c.l.b16 %v112
    %v962 = vunpack.c.h.b16 %v112
    %v963 = vunpack.c.l.b16 %v113
    %v964 = vunpack.c.h.b16 %v113
    %v965 = vunpack.c.l.b16 %v114
    %v966 = vunpack.c.l.b16 %v115
    %v967 = vunpack.c.h.b16 %v115
    %v968 = vunpack.c.l.b16 %v116
    %v969 = vunpack.c.h.b16 %v116
    %v970 = vunpack.c.l.b16 %v117
    %v971 = vunpack.c.h.b16 %v117
    %v972 = vunpack.c.l.b16 %v118
    %v973 = vunpack.c.l.b16 %v119
    %v974 = vunpack.c.h.b16 %v119
    %v975 = vunpack.c.l.b16 %v120
    %v976 = vunpack.c.h.b16 %v120
    %v977 = vunpack.c.l.b16 %v121
    %v978 = vunpack.c.h.b16 %v121
    %v979 = vunpack.c.l.b16 %v122
    %v980 = vunpack.c.l.b16 %v123
    %v981 = vunpack.c.h.b16 %v123
    %v982 = vunpack.c.l.b16 %v124
    %v983 = vunpack.c.h.b16 %v124
    %v984 = vunpack.c.l.b16 %v125
    %v985 = vunpack.c.h.b16 %v125
    %v986 = vunpack.c.l.b16 %v126
    %v987 = vunpack.c.l.b16 %v127
    %v988 = vunpack.c.h.b16 %v127
    %v989 = vunpack.c.l.b16 %v128
    %v990 = vunpack.c.h.b16 %v128
    %v991 = vunpack.c.l.b16 %v129
    %v992 = vunpack.c.h.b16 %v129
    %v993 = vunpack.c.l.b16 %v130
    %v994 = vunpack.c.l.b16 %v131
    %v995 = vunpack.c.h.b16 %v131
    %v996 = vunpack.c.l.b16 %v132
    %v997 = vunpack.c.h.b16 %v132
    %v998 = vunpack.c.l.b16 %v133
    %v999 = vunpack.c.h.b16 %v133
    %v1000 = vunpack.c.l.b16 %v134
    %v1001 = vunpack.c.l.b16 %v135
    %v1002 = vunpack.c.h.b16 %v135
    %v1003 = vunpack.c.l.b16 %v136
    %v1004 = vunpack.c.h.b16 %v136
    %v1005 = vunpack.c.l.b16 %v137
    %v1006 = vunpack.c.h.b16 %v137
    %v1007 = vunpack.c.l.b16 %v138
    %v1008 = vunpack.c.l.b16 %v139
    %v1009 = vunpack.c.h.b16 %v139
    %v1010 = vunpack.c.l.b16 %v140
    %v1011 = vunpack.c.h.b16 %v140
    %v1012 = vunpack.c.l.b16 %v141
    %v1013 = vunpack.c.h.b16 %v141
    %v1014 = vunpack.c.l.b16 %v142
    %v1015 = vunpack.c.l.b16 %v143
    %v1016 = vunpack.c.h.b16 %v143
    %v1017 = vunpack.c.l.b16 %v144
    %v1018 = vunpack.c.h.b16 %v144
    %v1019 = vunpack.c.l.b16 %v145
    %v1020 = vunpack.c.h.b16 %v145
    %v1021 = vunpack.c.l.b16 %v146
    %v1022 = vunpack.c.l.b16 %v147
    %v1023 = vunpack.c.h.b16 %v147
    %v1024 = vunpack.c.l.b16 %v148
    %v1025 = vunpack.c.h.b16 %v148
    %v1026 = vunpack.c.l.b16 %v149
    %v1027 = vunpack.c.h.b16 %v149
    %v1028 = vunpack.c.l.b16 %v150
    %v1029 = vunpack.c.l.b16 %v151
    %v1030 = vunpack.c.h.b16 %v151
    %v1031 = vunpack.c.l.b16 %v152
    %v1032 = vunpack.c.h.b16 %v152
    %v1033 = vunpack.c.l.b16 %v153
    %v1034 = vunpack.c.h.b16 %v153
    %v1035 = vunpack.c.l.b16 %v154
    %v1036 = vunpack.c.l.b16 %v155
    %v1037 = vunpack.c.h.b16 %v155
    %v1038 = vunpack.c.l.b16 %v156
    %v1039 = vunpack.c.h.b16 %v156
    %v1040 = vunpack.c.l.b16 %v157
    %v1041 = vunpack.c.h.b16 %v157
    %v1042 = vunpack.c.l.b16 %v158
    %v1043 = vunpack.c.l.b16 %v159
    %v1044 = vunpack.c.h.b16 %v159
    %v1045 = vunpack.c.l.b16 %v160
    %v1046 = vunpack.c.h.b16 %v160
    %v1047 = vunpack.c.l.b16 %v161
    %v1048 = vunpack.c.h.b16 %v161
    %v1049 = vunpack.c.l.b16 %v162
    %v1050 = vunpack.c.l.b16 %v163
    %v1051 = vunpack.c.h.b16 %v163
    %v1052 = vunpack.c.l.b16 %v164
    %v1053 = vunpack.c.h.b16 %v164
    %v1054 = vunpack.c.l.b16 %v165
    %v1055 = vunpack.c.h.b16 %v165
    %v1056 = vunpack.c.l.b16 %v166
    %v1057 = vunpack.c.l.b16 %v167
    %v1058 = vunpack.c.h.b16 %v167
    %v1059 = vunpack.c.l.b16 %v168
    %v1060 = vunpack.c.h.b16 %v168
    %v1061 = vunpack.c.l.b16 %v169
    %v1062 = vunpack.c.h.b16 %v169
    %v1063 = vunpack.c.l.b16 %v170
    %v1064 = vunpack.c.l.b16 %v171
    %v1065 = vunpack.c.h.b16 %v171
    %v1066 = vunpack.c.l.b16 %v172
    %v1067 = vunpack.c.h.b16 %v172
    %v1068 = vunpack.c.l.b16 %v173
    %v1069 = vunpack.c.h.b16 %v173
    %v1070 = vunpack.c.l.b16 %v174
    %v1071 = vunpack.c.l.b16 %v175
    %v1072 = vunpack.c.h.b16 %v175
    %v1073 = vunpack.c.l.b16 %v176
    %v1074 = vunpack.c.h.b16 %v176
    %v1075 = vunpack.c.l.b16 %v177
    %v1076 = vunpack.c.h.b16 %v177
    %v1077 = vunpack.c.l.b16 %v178
    %v1078 = vunpack.c.l.b16 %v179
    %v1079 = vunpack.c.h.b16 %v179
    %v1080 = vunpack.c.l.b16 %v180
    %v1081 = vunpack.c.h.b16 %v180
    %v1082 = vunpack.c.l.b16 %v181
    %v1083 = vunpack.c.h.b16 %v181
    %v1084 = vunpack.c.l.b16 %v182
    %v1085 = vunpack.c.l.b16 %v183
    %v1086 = vunpack.c.h.b16 %v183
    %v1087 = vunpack.c.l.b16 %v184
    %v1088 = vunpack.c.h.b16 %v184
    %v1089 = vunpack.c.l.b16 %v185
    %v1090 = vunpack.c.h.b16 %v185
    %v1091 = vunpack.c.l.b16 %v186
    %v1092 = vunpack.c.l.b16 %v187
    %v1093 = vunpack.c.h.b16 %v187
    %v1094 = vunpack.c.l.b16 %v188
    %v1095 = vunpack.c.h.b16 %v188
    %v1096 = vunpack.c.l.b16 %v189
    %v1097 = vunpack.c.h.b16 %v189
    %v1098 = vunpack.c.l.b16 %v190
    %v1099 = vunpack.c.l.b16 %v191
    %v1100 = vunpack.c.h.b16 %v191
    %v1101 = vunpack.c.l.b16 %v192
    %v1102 = vunpack.c.h.b16 %v192
    %v1103 = vunpack.c.l.b16 %v193
    %v1104 = vunpack.c.h.b16 %v193
    %v1105 = vunpack.c.l.b16 %v194
    %v1106 = vunpack.c.l.b16 %v195
    %v1107 = vunpack.c.h.b16 %v195
    %v1108 = vunpack.c.l.b16 %v196
    %v1109 = vunpack.c.h.b16 %v196
    %v1110 = vunpack.c.l.b16 %v197
    %v1111 = vunpack.c.h.b16 %v197
    %v1112 = vunpack.c.l.b16 %v198
    %v1113 = vunpack.c.l.b16 %v199
    %v1114 = vunpack.c.h.b16 %v199
    %v1115 = vunpack.c.l.b16 %v200
    %v1116 = vunpack.c.h.b16 %v200
    %v1117 = vunpack.c.l.b16 %v201
    %v1118 = vunpack.c.h.b16 %v201
    %v1119 = vunpack.c.l.b16 %v202
    %v1120 = vunpack.c.l.b16 %v203
    %v1121 = vunpack.c.h.b16 %v203
    %v1122 = vunpack.c.l.b16 %v204
    %v1123 = vunpack.c.h.b16 %v204
    %v1124 = vunpack.c.l.b16 %v205
    %v1125 = vunpack.c.h.b16 %v205
    %v1126 = vunpack.c.l.b16 %v206
    %v1127 = vunpack.c.l.b16 %v207
    %v1128 = vunpack.c.h.b16 %v207
    %v1129 = vunpack.c.l.b16 %v208
    %v1130 = vunpack.c.h.b16 %v208
    %v1131 = vunpack.c.l.b16 %v209
    %v1132 = vunpack.c.h.b16 %v209
    %v1133 = vunpack.c.l.b16 %v210
    %v1134 = vunpack.c.l.b16 %v211
    %v1135 = vunpack.c.h.b16 %v211
    %v1136 = vunpack.c.l.b16 %v212
    %v1137 = vunpack.c.h.b16 %v212
    %v1138 = vunpack.c.l.b16 %v213
    %v1139 = vunpack.c.h.b16 %v213
    %v1140 = vunpack.c.l.b16 %v214
    %v1141 = vunpack.c.l.b16 %v215
    %v1142 = vunpack.c.h.b16 %v215
    %v1143 = vunpack.c.l.b16 %v216
    %v1144 = vunpack.c.h.b16 %v216
    %v1145 = vunpack.c.l.b16 %v217
    %v1146 = vunpack.c.h.b16 %v217
    %v1147 = vunpack.c.l.b16 %v218
    %v1148 = vunpack.c.l.b16 %v219
    %v1149 = vunpack.c.h.b16 %v219
    %v1150 = vunpack.c.l.b16 %v220
    %v1151 = vunpack.c.h.b16 %v220
    %v1152 = vunpack.c.l.b16 %v221
    %v1153 = vunpack.c.h.b16 %v221
    %v1154 = vunpack.c.l.b16 %v222
    %v1155 = vunpack.c.l.b16 %v223
    %v1156 = vunpack.c.h.b16 %v223
    %v1157 = vunpack.c.l.b16 %v224
    %v1158 = vunpack.c.h.b16 %v224
    %v1159 = vunpack.c.l.b16 %v225
    %v1160 = vunpack.c.h.b16 %v225
    %v1161 = vunpack.c.l.b16 %v226
    %v1162 = vunpack.c.l.b16 %v227
    %v1163 = vunpack.c.h.b16 %v227
    %v1164 = vunpack.c.l.b16 %v228
    %v1165 = vunpack.c.h.b16 %v228
    %v1166 = vunpack.c.l.b16 %v229
    %v1167 = vunpack.c.h.b16 %v229
    %v1168 = vunpack.c.l.b16 %v230
    %v1169 = vunpack.c.l.b16 %v231
    %v1170 = vunpack.c.h.b16 %v231
    %v1171 = vunpack.c.l.b16 %v232
    %v1172 = vunpack.c.h.b16 %v232
    %v1173 = vunpack.c.l.b16 %v233
    %v1174 = vunpack.c.h.b16 %v233
    %v1175 = vunpack.c.l.b16 %v234
    %v1176 = vunpack.c.l.b16 %v235
    %v1177 = vunpack.c.h.b16 %v235
    %v1178 = vunpack.c.l.b16 %v236
    %v1179 = vunpack.c.h.b16 %v236
    %v1180 = vunpack.c.l.b16 %v237
    %v1181 = vunpack.c.h.b16 %v237
    %v1182 = vunpack.c.l.b16 %v238
    %v1183 = vunpack.c.l.b16 %v239
    %v1184 = vunpack.c.h.b16 %v239
    %v1185 = vunpack.c.l.b16 %v240
    %v1186 = vunpack.c.h.b16 %v240
    %v1187 = vunpack.c.l.b16 %v241
    %v1188 = vunpack.c.h.b16 %v241
    %v1189 = vunpack.c.l.b16 %v242
    %v1190 = vunpack.c.l.b16 %v243
    %v1191 = vunpack.c.h.b16 %v243
    %v1192 = vunpack.c.l.b16 %v244
    %v1193 = vunpack.c.h.b16 %v244
    %v1194 = vunpack.c.l.b16 %v245
    %v1195 = vunpack.c.h.b16 %v245
    %v1196 = vunpack.c.l.b16 %v246
    %v1197 = vunpack.c.l.b16 %v247
    %v1198 = vunpack.c.h.b16 %v247
    %v1199 = vunpack.c.l.b16 %v248
    %v1200 = vunpack.c.h.b16 %v248
    %v1201 = vunpack.c.l.b16 %v249
    %v1202 = vunpack.c.h.b16 %v249
    %v1203 = vunpack.c.l.b16 %v250
    %v1204 = vunpack.c.l.b16 %v251
    %v1205 = vunpack.c.h.b16 %v251
    %v1206 = vunpack.c.l.b16 %v252
    %v1207 = vunpack.c.h.b16 %v252
    %v1208 = vunpack.c.l.b16 %v253
    %v1209 = vunpack.c.h.b16 %v253
    %v1210 = vunpack.c.l.b16 %v254
    %v1211 = vunpack.c.l.b16 %v255
    %v1212 = vunpack.c.h.b16 %v255
    %v1213 = vunpack.c.l.b16 %v256
    %v1214 = vunpack.c.h.b16 %v256
    %v1215 = vunpack.c.l.b16 %v257
    %v1216 = vunpack.c.h.b16 %v257
    %v1217 = vunpack.c.l.b16 %v258
    %v1218 = vunpack.c.l.b16 %v259
    %v1219 = vunpack.c.h.b16 %v259
    %v1220 = vunpack.c.l.b16 %v260
    %v1221 = vunpack.c.h.b16 %v260
    %v1222 = vunpack.c.l.b16 %v261
    %v1223 = vunpack.c.h.b16 %v261
    %v1224 = vunpack.c.l.b16 %v262
    %v1225 = vunpack.c.l.b16 %v263
    %v1226 = vunpack.c.h.b16 %v263
    %v1227 = vunpack.c.l.b16 %v264
    %v1228 = vunpack.c.h.b16 %v264
    %v1229 = vunpack.c.l.b16 %v265
    %v1230 = vunpack.c.h.b16 %v265
    %v1231 = vunpack.c.l.b16 %v266
    %v1232 = vunpack.c.l.b16 %v267
    %v1233 = vunpack.c.h.b16 %v267
    %v1234 = vunpack.c.l.b16 %v268
    %v1235 = vunpack.c.h.b16 %v268
    %v1236 = vunpack.c.l.b16 %v269
    %v1237 = vunpack.c.h.b16 %v269
    %v1238 = vunpack.c.l.b16 %v270
    %v1239 = vunpack.c.l.b16 %v271
    %v1240 = vunpack.c.h.b16 %v271
    %v1241 = vunpack.c.l.b16 %v272
    %v1242 = vunpack.c.h.b16 %v272
    %v1243 = vunpack.c.l.b16 %v273
    %v1244 = vunpack.c.h.b16 %v273
    %v1245 = vunpack.c.l.b16 %v274
    %v1246 = vunpack.c.l.b16 %v275
    %v1247 = vunpack.c.h.b16 %v275
    %v1248 = vunpack.c.l.b16 %v276
    %v1249 = vunpack.c.h.b16 %v276
    %v1250 = vunpack.c.l.b16 %v277
    %v1251 = vunpack.c.h.b16 %v277
    %v1252 = vunpack.c.l.b16 %v278
    %v1253 = vunpack.c.l.b16 %v279
    %v1254 = vunpack.c.h.b16 %v279
    %v1255 = vunpack.c.l.b16 %v280
    %v1256 = vunpack.c.h.b16 %v280
    %v1257 = vunpack.c.l.b16 %v281
    %v1258 = vunpack.c.h.b16 %v281
    %v1259 = vunpack.c.l.b16 %v282
    %v1260 = vunpack.c.l.b16 %v283
    %v1261 = vunpack.c.h.b16 %v283
    %v1262 = vunpack.c.l.b16 %v284
    %v1263 = vunpack.c.h.b16 %v284
    %v1264 = vunpack.c.l.b16 %v285
    %v1265 = vunpack.c.h.b16 %v285
    %v1266 = vunpack.c.l.b16 %v286
    %v1267 = vunpack.c.l.b16 %v287
    %v1268 = vunpack.c.h.b16 %v287
    %v1269 = vunpack.c.l.b16 %v288
    %v1270 = vunpack.c.h.b16 %v288
    %v1271 = vunpack.c.l.b16 %v289
    %v1272 = vunpack.c.h.b16 %v289
    %v1273 = vunpack.c.l.b16 %v290
    %v1274 = vunpack.c.l.b16 %v291
    %v1275 = vunpack.c.h.b16 %v291
    %v1276 = vunpack.c.l.b16 %v292
    %v1277 = vunpack.c.h.b16 %v292
    %v1278 = vunpack.c.l.b16 %v293
    %v1279 = vunpack.c.h.b16 %v293
    %v1280 = vunpack.c.l.b16 %v294
    %v1281 = vunpack.c.l.b16 %v295
    %v1282 = vunpack.c.h.b16 %v295
    %v1283 = vunpack.c.l.b16 %v296
    %v1284 = vunpack.c.h.b16 %v296
    %v1285 = vunpack.c.l.b16 %v297
    %v1286 = vunpack.c.h.b16 %v297
    %v1287 = vunpack.c.l.b16 %v298
    %v1288 = vunpack.c.l.b16 %v299
    %v1289 = vunpack.c.h.b16 %v299
    %v1290 = vunpack.c.l.b16 %v300
    %v1291 = vunpack.c.h.b16 %v300
    %v1292 = vunpack.c.l.b16 %v301
    %v1293 = vunpack.c.h.b16 %v301
    %v1294 = vunpack.c.l.b16 %v302
    %v1295 = vunpack.c.l.b16 %v303
    %v1296 = vunpack.c.h.b16 %v303
    %v1297 = vunpack.c.l.b16 %v304
    %v1298 = vunpack.c.h.b16 %v304
    %v1299 = vunpack.c.l.b16 %v305
    %v1300 = vunpack.c.h.b16 %v305
    %v1301 = vunpack.c.l.b16 %v306
    %v1302 = vunpack.c.l.b16 %v307
    %v1303 = vunpack.c.h.b16 %v307
    %v1304 = vunpack.c.l.b16 %v308
    %v1305 = vunpack.c.h.b16 %v308
    %v1306 = vunpack.c.l.b16 %v309
    %v1307 = vunpack.c.h.b16 %v309
    %v1308 = vunpack.c.l.b16 %v310
    %v1309 = vunpack.c.l.b16 %v311
    %v1310 = vunpack.c.h.b16 %v311
    %v1311 = vunpack.c.l.b16 %v312
    %v1312 = vunpack.c.h.b16 %v312
    %v1313 = vunpack.c.l.b16 %v313
    %v1314 = vunpack.c.h.b16 %v313
    %v1315 = vunpack.c.l.b16 %v314
    %v1316 = vunpack.c.l.b16 %v315
    %v1317 = vunpack.c.h.b16 %v315
    %v1318 = vunpack.c.l.b16 %v316
    %v1319 = vunpack.c.h.b16 %v316
    %v1320 = vunpack.c.l.b16 %v317
    %v1321 = vunpack.c.h.b16 %v317
    %v1322 = vunpack.c.l.b16 %v318
    %v1323 = vunpack.c.l.b16 %v319
    %v1324 = vunpack.c.h.b16 %v319
    %v1325 = vunpack.c.l.b16 %v320
    %v1326 = vunpack.c.h.b16 %v320
    %v1327 = vunpack.c.l.b16 %v321
    %v1328 = vunpack.c.h.b16 %v321
    %v1329 = vunpack.c.l.b16 %v322
    %v1330 = vunpack.c.l.b16 %v323
    %v1331 = vunpack.c.h.b16 %v323
    %v1332 = vunpack.c.l.b16 %v324
    %v1333 = vunpack.c.h.b16 %v324
    %v1334 = vunpack.c.l.b16 %v325
    %v1335 = vunpack.c.h.b16 %v325
    %v1336 = vunpack.c.l.b16 %v326
    %v1337 = vunpack.c.l.b16 %v327
    %v1338 = vunpack.c.h.b16 %v327
    %v1339 = vunpack.c.l.b16 %v328
    %v1340 = vunpack.c.h.b16 %v328
    %v1341 = vunpack.c.l.b16 %v329
    %v1342 = vunpack.c.h.b16 %v329
    %v1343 = vunpack.c.l.b16 %v330
    %v1344 = vunpack.c.l.b16 %v331
    %v1345 = vunpack.c.h.b16 %v331
    %v1346 = vunpack.c.l.b16 %v332
    %v1347 = vunpack.c.h.b16 %v332
    %v1348 = vunpack.c.l.b16 %v333
    %v1349 = vunpack.c.h.b16 %v333
    %v1350 = vunpack.c.l.b16 %v334
    %v1351 = vunpack.c.l.b16 %v335
    %v1352 = vunpack.c.h.b16 %v335
    %v1353 = vunpack.c.l.b16 %v336
    %v1354 = vunpack.c.h.b16 %v336
    %v1355 = vunpack.c.l.b16 %v337
    %v1356 = vunpack.c.h.b16 %v337
    %v1357 = vunpack.c.l.b16 %v338
    %v1358 = vunpack.c.l.b16 %v339
    %v1359 = vunpack.c.h.b16 %v339
    %v1360 = vunpack.c.l.b16 %v340
    %v1361 = vunpack.c.h.b16 %v340
    %v1362 = vunpack.c.l.b16 %v341
    %v1363 = vunpack.c.h.b16 %v341
    %v1364 = vunpack.c.l.b16 %v342
    %v1365 = vunpack.c.l.b16 %v343
    %v1366 = vunpack.c.h.b16 %v343
    %v1367 = vunpack.c.l.b16 %v344
    %v1368 = vunpack.c.h.b16 %v344
    %v1369 = vunpack.c.l.b16 %v345
    %v1370 = vunpack.c.h.b16 %v345
    %v1371 = vunpack.c.l.b16 %v346
    %v1372 = vunpack.c.l.b16 %v347
    %v1373 = vunpack.c.h.b16 %v347
    %v1374 = vunpack.c.l.b16 %v348
    %v1375 = vunpack.c.h.b16 %v348
    %v1376 = vunpack.c.l.b16 %v349
    %v1377 = vunpack.c.h.b16 %v349
    %v1378 = vunpack.c.l.b16 %v350
    %v1379 = vunpack.c.l.b16 %v351
    %v1380 = vunpack.c.h.b16 %v351
    %v1381 = vunpack.c.l.b16 %v352
    %v1382 = vunpack.c.h.b16 %v352
    %v1383 = vunpack.c.l.b16 %v353
    %v1384 = vunpack.c.h.b16 %v353
    %v1385 = vunpack.c.l.b16 %v354
    %v1386 = vunpack.c.l.b16 %v355
    %v1387 = vunpack.c.h.b16 %v355
    %v1388 = vunpack.c.l.b16 %v356
    %v1389 = vunpack.c.h.b16 %v356
    %v1390 = vunpack.c.l.b16 %v357
    %v1391 = vunpack.c.h.b16 %v357
    %v1392 = vunpack.c.l.b16 %v358
    %v1393 = vunpack.c.l.b16 %v359
    %v1394 = vunpack.c.h.b16 %v359
    %v1395 = vunpack.c.l.b16 %v360
    %v1396 = vunpack.c.h.b16 %v360
    %v1397 = vunpack.c.l.b16 %v361
    %v1398 = vunpack.c.h.b16 %v361
    %v1399 = vunpack.c.l.b16 %v362
    %v1400 = vunpack.c.l.b16 %v363
    %v1401 = vunpack.c.h.b16 %v363
    %v1402 = vunpack.c.l.b16 %v364
    %v1403 = vunpack.c.h.b16 %v364
    %v1404 = vunpack.c.l.b16 %v365
    %v1405 = vunpack.c.h.b16 %v365
    %v1406 = vunpack.c.l.b16 %v366
    %v1407 = vunpack.c.l.b16 %v367
    %v1408 = vunpack.c.h.b16 %v367
    %v1409 = vunpack.c.l.b16 %v368
    %v1410 = vunpack.c.h.b16 %v368
    %v1411 = vunpack.c.l.b16 %v369
    %v1412 = vunpack.c.h.b16 %v369
    %v1413 = vunpack.c.l.b16 %v370
    %v1414 = vunpack.c.l.b16 %v371
    %v1415 = vunpack.c.h.b16 %v371
    %v1416 = vunpack.c.l.b16 %v372
    %v1417 = vunpack.c.h.b16 %v372
    %v1418 = vunpack.c.l.b16 %v373
    %v1419 = vunpack.c.h.b16 %v373
    %v1420 = vunpack.c.l.b16 %v374
    %v1421 = vunpack.c.l.b16 %v375
    %v1422 = vunpack.c.h.b16 %v375
    %v1423 = vunpack.c.l.b16 %v376
    %v1424 = vunpack.c.h.b16 %v376
    %v1425 = vunpack.c.l.b16 %v377
    %v1426 = vunpack.c.h.b16 %v377
    %v1427 = vunpack.c.l.b16 %v378
    %v1428 = vunpack.c.l.b16 %v379
    %v1429 = vunpack.c.h.b16 %v379
    %v1430 = vunpack.c.l.b16 %v380
    %v1431 = vunpack.c.h.b16 %v380
    %v1432 = vunpack.c.l.b16 %v381
    %v1433 = vunpack.c.h.b16 %v381
    %v1434 = vunpack.c.l.b16 %v382
    %v1435 = vunpack.c.l.b16 %v383
    %v1436 = vunpack.c.h.b16 %v383
    %v1437 = vunpack.c.l.b16 %v384
    %v1438 = vunpack.c.h.b16 %v384
    %v1439 = vunpack.c.l.b16 %v385
    %v1440 = vunpack.c.h.b16 %v385
    %v1441 = vunpack.c.l.b16 %v386
    %v1442 = vunpack.c.l.b16 %v387
    %v1443 = vunpack.c.h.b16 %v387
    %v1444 = vunpack.c.l.b16 %v388
    %v1445 = vunpack.c.h.b16 %v388
    %v1446 = vunpack.c.l.b16 %v389
    %v1447 = vunpack.c.h.b16 %v389
    %v1448 = vunpack.c.l.b16 %v390
    %v1449 = vunpack.c.l.b16 %v391
    %v1450 = vunpack.c.h.b16 %v391
    %v1451 = vunpack.c.l.b16 %v392
    %v1452 = vunpack.c.h.b16 %v392
    %v1453 = vunpack.c.l.b16 %v393
    %v1454 = vunpack.c.h.b16 %v393
    %v1455 = vunpack.c.l.b16 %v394
    %v1456 = vunpack.c.l.b16 %v395
    %v1457 = vunpack.c.h.b16 %v395
    %v1458 = vunpack.c.l.b16 %v396
    %v1459 = vunpack.c.h.b16 %v396
    %v1460 = vunpack.c.l.b16 %v397
    %v1461 = vunpack.c.h.b16 %v397
    %v1462 = vunpack.c.l.b16 %v398
    %v1463 = vunpack.c.l.b16 %v399
    %v1464 = vunpack.c.h.b16 %v399
    %v1465 = vunpack.c.l.b16 %v400
    %v1466 = vunpack.c.h.b16 %v400
    %v1467 = vunpack.c.l.b16 %v401
    %v1468 = vunpack.c.h.b16 %v401
    %v1469 = vunpack.c.l.b16 %v402
    %v1470 = vunpack.c.l.b16 %v403
    %v1471 = vunpack.c.h.b16 %v403
    %v1472 = vunpack.c.l.b16 %v404
    %v1473 = vunpack.c.h.b16 %v404
    %v1474 = vunpack.c.l.b16 %v405
    %v1475 = vunpack.c.h.b16 %v405
    %v1476 = vunpack.c.l.b16 %v406
    %v1477 = vunpack.c.l.b16 %v407
    %v1478 = vunpack.c.h.b16 %v407
    %v1479 = vunpack.c.l.b16 %v408
    %v1480 = vunpack.c.h.b16 %v408
    %v1481 = vunpack.c.l.b16 %v409
    %v1482 = vunpack.c.h.b16 %v409
    %v1483 = vunpack.c.l.b16 %v410
    %v1484 = vunpack.c.l.b16 %v411
    %v1485 = vunpack.c.h.b16 %v411
    %v1486 = vunpack.c.l.b16 %v412
    %v1487 = vunpack.c.h.b16 %v412
    %v1488 = vunpack.c.l.b16 %v413
    %v1489 = vunpack.c.h.b16 %v413
    %v1490 = vunpack.c.l.b16 %v414
    %v1491 = vunpack.c.l.b16 %v415
    %v1492 = vunpack.c.h.b16 %v415
    %v1493 = vunpack.c.l.b16 %v416
    %v1494 = vunpack.c.h.b16 %v416
    %v1495 = vunpack.c.l.b16 %v417
    %v1496 = vunpack.c.h.b16 %v417
    %v1497 = vunpack.c.l.b16 %v418
    %v1498 = vunpack.c.l.b16 %v419
    %v1499 = vunpack.c.h.b16 %v419
    %v1500 = vunpack.c.l.b16 %v420
    %v1501 = vunpack.c.h.b16 %v420
    %v1502 = vunpack.c.l.b16 %v421
    %v1503 = vunpack.c.h.b16 %v421
    %v1504 = vunpack.c.l.b16 %v422
    %v1505 = vunpack.c.l.b16 %v423
    %v1506 = vunpack.c.h.b16 %v423
    %v1507 = vunpack.c.l.b16 %v424
    %v1508 = vunpack.c.h.b16 %v424
    %v1509 = vunpack.c.l.b16 %v425
    %v1510 = vunpack.c.h.b16 %v425
    %v1511 = vunpack.c.l.b16 %v426
    %v1512 = vunpack.c.l.b16 %v427
    %v1513 = vunpack.c.h.b16 %v427
    %v1514 = vunpack.c.l.b16 %v428
    %v1515 = vunpack.c.h.b16 %v428
    %v1516 = vunpack.c.l.b16 %v429
    %v1517 = vunpack.c.h.b16 %v429
    %v1518 = vunpack.c.l.b16 %v430
    %v1519 = vunpack.c.l.b16 %v431
    %v1520 = vunpack.c.h.b16 %v431
    %v1521 = vunpack.c.l.b16 %v432
    %v1522 = vunpack.c.h.b16 %v432
    %v1523 = vunpack.c.l.b16 %v433
    %v1524 = vunpack.c.h.b16 %v433
    %v1525 = vunpack.c.l.b16 %v434
    %v1526 = vunpack.c.l.b16 %v435
    %v1527 = vunpack.c.h.b16 %v435
    %v1528 = vunpack.c.l.b16 %v436
    %v1529 = vunpack.c.h.b16 %v436
    %v1530 = vunpack.c.l.b16 %v437
    %v1531 = vunpack.c.h.b16 %v437
    %v1532 = vunpack.c.l.b16 %v438
    %v1533 = vunpack.c.l.b16 %v439
    %v1534 = vunpack.c.h.b16 %v439
    %v1535 = vunpack.c.l.b16 %v440
    %v1536 = vunpack.c.h.b16 %v440
    %v1537 = vunpack.c.l.b16 %v441
    %v1538 = vunpack.c.h.b16 %v441
    %v1539 = vunpack.c.l.b16 %v442
    %v1540 = vunpack.c.l.b16 %v443
    %v1541 = vunpack.c.h.b16 %v443
    %v1542 = vunpack.c.l.b16 %v444
    %v1543 = vunpack.c.h.b16 %v444
    %v1544 = vunpack.c.l.b16 %v445
    %v1545 = vunpack.c.h.b16 %v445
    %v1546 = vunpack.c.l.b16 %v446
    %v1547 = vunpack.c.l.b16 %v447
    %v1548 = vunpack.c.h.b16 %v447
    %v1549 = vunpack.c.l.b16 %v448
    %v1550 = vunpack.c.h.b16 %v448
    %v1551 = vunpack.c.l.b16 %v449
    %v1552 = vunpack.c.h.b16 %v449
    %v1553 = vunpack.c.l.b16 %v450
    %v1554 = vunpack.c.l.b16 %v451
    %v1555 = vunpack.c.h.b16 %v451
    %v1556 = vunpack.c.l.b16 %v452
    %v1557 = vunpack.c.h.b16 %v452
    %v1558 = vunpack.c.l.b16 %v453
    %v1559 = vunpack.c.h.b16 %v453
    %v1560 = vunpack.c.l.b16 %v454
    %v1561 = vunpack.c.l.b16 %v455
    %v1562 = vunpack.c.h.b16 %v455
    %v1563 = vunpack.c.l.b16 %v456
    %v1564 = vunpack.c.h.b16 %v456
    %v1565 = vunpack.c.l.b16 %v457
    %v1566 = vunpack.c.h.b16 %v457
    %v1567 = vunpack.c.l.b16 %v458
    %v1568 = vunpack.c.l.b16 %v459
    %v1569 = vunpack.c.h.b16 %v459
    %v1570 = vunpack.c.l.b16 %v460
    %v1571 = vunpack.c.h.b16 %v460
    %v1572 = vunpack.c.l.b16 %v461
    %v1573 = vunpack.c.h.b16 %v461
    %v1574 = vunpack.c.l.b16 %v462
    %v1575 = vunpack.c.l.b16 %v463
    %v1576 = vunpack.c.h.b16 %v463
    %v1577 = vunpack.c.l.b16 %v464
    %v1578 = vunpack.c.h.b16 %v464
    %v1579 = vunpack.c.l.b16 %v465
    %v1580 = vunpack.c.h.b16 %v465
    %v1581 = vunpack.c.l.b16 %v466
    %v1582 = vunpack.c.l.b16 %v467
    %v1583 = vunpack.c.h.b16 %v467
    %v1584 = vunpack.c.l.b16 %v468
    %v1585 = vunpack.c.h.b16 %v468
    %v1586 = vunpack.c.l.b16 %v469
    %v1587 = vunpack.c.h.b16 %v469
    %v1588 = vunpack.c.l.b16 %v470
    %v1589 = vunpack.c.l.b16 %v471
    %v1590 = vunpack.c.h.b16 %v471
    %v1591 = vunpack.c.l.b16 %v472
    %v1592 = vunpack.c.h.b16 %v472
    %v1593 = vunpack.c.l.b16 %v473
    %v1594 = vunpack.c.h.b16 %v473
    %v1595 = vunpack.c.l.b16 %v474
    %v1596 = vunpack.c.l.b16 %v475
    %v1597 = vunpack.c.h.b16 %v475
    %v1598 = vunpack.c.l.b16 %v476
    %v1599 = vunpack.c.h.b16 %v476
    %v1600 = vunpack.c.l.b16 %v477
    %v1601 = vunpack.c.h.b16 %v477
    %v1602 = vunpack.c.l.b16 %v478
    %v1603 = vunpack.c.l.b16 %v479
    %v1604 = vunpack.c.h.b16 %v479
    %v1605 = vunpack.c.l.b16 %v480
    %v1606 = vunpack.c.h.b16 %v480
    %v1607 = vunpack.c.l.b16 %v481
    %v1608 = vunpack.c.h.b16 %v481
    %v1609 = vunpack.c.l.b16 %v482
    %v1610 = vunpack.c.l.b16 %v483
    %v1611 = vunpack.c.h.b16 %v483
    %v1612 = vunpack.c.l.b16 %v484
    %v1613 = vunpack.c.h.b16 %v484
    %v1614 = vunpack.c.l.b16 %v485
    %v1615 = vunpack.c.h.b16 %v485
    %v1616 = vunpack.c.l.b16 %v486
    %v1617 = vunpack.c.l.b16 %v487
    %v1618 = vunpack.c.h.b16 %v487
    %v1619 = vunpack.c.l.b16 %v488
    %v1620 = vunpack.c.h.b16 %v488
    %v1621 = vunpack.c.l.b16 %v489
    %v1622 = vunpack.c.h.b16 %v489
    %v1623 = vunpack.c.l.b16 %v490
    %v1624 = vunpack.c.l.b16 %v491
    %v1625 = vunpack.c.h.b16 %v491
    %v1626 = vunpack.c.l.b16 %v492
    %v1627 = vunpack.c.h.b16 %v492
    %v1628 = vunpack.c.l.b16 %v493
    %v1629 = vunpack.c.h.b16 %v493
    %v1630 = vunpack.c.l.b16 %v494
    %v1631 = vunpack.c.l.b16 %v495
    %v1632 = vunpack.c.h.b16 %v495
    %v1633 = vunpack.c.l.b16 %v496
    %v1634 = vunpack.c.h.b16 %v496
    %v1635 = vunpack.c.l.b16 %v497
    %v1636 = vunpack.c.h.b16 %v497
    %v1637 = vunpack.c.l.b16 %v498
    %v1638 = vpack.c.b16 %v959, %v952
    %v1639 = vpack.c.b16 %v960, %v953
    %v1640 = vpack.c.b16 %v961, %v954
    %v1641 = vpack.c.b16 %v962, %v955
    %v1642 = vpack.c.b16 %v963, %v956
    %v1643 = vpack.c.b16 %v964, %v957
    %v1644 = vpack.c.b16 %v965, %v958
    %v1645 = vpack.c.b16 %v973, %v966
    %v1646 = vpack.c.b16 %v974, %v967
    %v1647 = vpack.c.b16 %v975, %v968
    %v1648 = vpack.c.b16 %v976, %v969
    %v1649 = vpack.c.b16 %v977, %v970
    %v1650 = vpack.c.b16 %v978, %v971
    %v1651 = vpack.c.b16 %v979, %v972
    %v1652 = vpack.c.b16 %v987, %v980
    %v1653 = vpack.c.b16 %v988, %v981
    %v1654 = vpack.c.b16 %v989, %v982
    %v1655 = vpack.c.b16 %v990, %v983
    %v1656 = vpack.c.b16 %v991, %v984
    %v1657 = vpack.c.b16 %v992, %v985
    %v1658 = vpack.c.b16 %v993, %v986
    %v1659 = vpack.c.b16 %v1001, %v994
    %v1660 = vpack.c.b16 %v1002, %v995
    %v1661 = vpack.c.b16 %v1003, %v996
    %v1662 = vpack.c.b16 %v1004, %v997
    %v1663 = vpack.c.b16 %v1005, %v998
    %v1664 = vpack.c.b16 %v1006, %v999
    %v1665 = vpack.c.b16 %v1007, %v1000
    %v1666 = vpack.c.b16 %v1015, %v1008
    %v1667 = vpack.c.b16 %v1016, %v1009
    %v1668 = vpack.c.b16 %v1017, %v1010
    %v1669 = vpack.c.b16 %v1018, %v1011
    %v1670 = vpack.c.b16 %v1019, %v1012
    %v1671 = vpack.c.b16 %v1020, %v1013
    %v1672 = vpack.c.b16 %v1021, %v1014
    %v1673 = vpack.c.b16 %v1029, %v1022
    %v1674 = vpack.c.b16 %v1030, %v1023
    %v1675 = vpack.c.b16 %v1031, %v1024
    %v1676 = vpack.c.b16 %v1032, %v1025
    %v1677 = vpack.c.b16 %v1033, %v1026
    %v1678 = vpack.c.b16 %v1034, %v1027
    %v1679 = vpack.c.b16 %v1035, %v1028
    %v1680 = vpack.c.b16 %v1043, %v1036
    %v1681 = vpack.c.b16 %v1044, %v1037
    %v1682 = vpack.c.b16 %v1045, %v1038
    %v1683 = vpack.c.b16 %v1046, %v1039
    %v1684 = vpack.c.b16 %v1047, %v1040
    %v1685 = vpack.c.b16 %v1048, %v1041
    %v1686 = vpack.c.b16 %v1049, %v1042
    %v1687 = vpack.c.b16 %v1057, %v1050
    %v1688 = vpack.c.b16 %v1058, %v1051
    %v1689 = vpack.c.b16 %v1059, %v1052
    %v1690 = vpack.c.b16 %v1060, %v1053
    %v1691 = vpack.c.b16 %v1061, %v1054
    %v1692 = vpack.c.b16 %v1062, %v1055
    %v1693 = vpack.c.b16 %v1063, %v1056
    %v1694 = vpack.c.b16 %v1071, %v1064
    %v1695 = vpack.c.b16 %v1072, %v1065
    %v1696 = vpack.c.b16 %v1073, %v1066
    %v1697 = vpack.c.b16 %v1074, %v1067
    %v1698 = vpack.c.b16 %v1075, %v1068
    %v1699 = vpack.c.b16 %v1076, %v1069
    %v1700 = vpack.c.b16 %v1077, %v1070
    %v1701 = vpack.c.b16 %v1085, %v1078
    %v1702 = vpack.c.b16 %v1086, %v1079
    %v1703 = vpack.c.b16 %v1087, %v1080
    %v1704 = vpack.c.b16 %v1088, %v1081
    %v1705 = vpack.c.b16 %v1089, %v1082
    %v1706 = vpack.c.b16 %v1090, %v1083
    %v1707 = vpack.c.b16 %v1091, %v1084
    %v1708 = vpack.c.b16 %v1099, %v1092
    %v1709 = vpack.c.b16 %v1100, %v1093
    %v1710 = vpack.c.b16 %v1101, %v1094
    %v1711 = vpack.c.b16 %v1102, %v1095
    %v1712 = vpack.c.b16 %v1103, %v1096
    %v1713 = vpack.c.b16 %v1104, %v1097
    %v1714 = vpack.c.b16 %v1105, %v1098
    %v1715 = vpack.c.b16 %v1113, %v1106
    %v1716 = vpack.c.b16 %v1114, %v1107
    %v1717 = vpack.c.b16 %v1115, %v1108
    %v1718 = vpack.c.b16 %v1116, %v1109
    %v1719 = vpack.c.b16 %v1117, %v1110
    %v1720 = vpack.c.b16 %v1118, %v1111
    %v1721 = vpack.c.b16 %v1119, %v1112
    %v1722 = vpack.c.b16 %v1127, %v1120
    %v1723 = vpack.c.b16 %v1128, %v1121
    %v1724 = vpack.c.b16 %v1129, %v1122
    %v1725 = vpack.c.b16 %v1130, %v1123
    %v1726 = vpack.c.b16 %v1131, %v1124
    %v1727 = vpack.c.b16 %v1132, %v1125
    %v1728 = vpack.c.b16 %v1133, %v1126
    %v1729 = vpack.c.b16 %v1141, %v1134
    %v1730 = vpack.c.b16 %v1142, %v1135
    %v1731 = vpack.c.b16 %v1143, %v1136
    %v1732 = vpack.c.b16 %v1144, %v1137
    %v1733 = vpack.c.b16 %v1145, %v1138
    %v1734 = vpack.c.b16 %v1146, %v1139
    %v1735 = vpack.c.b16 %v1147, %v1140
    %v1736 = vpack.c.b16 %v1155, %v1148
    %v1737 = vpack.c.b16 %v1156, %v1149
    %v1738 = vpack.c.b16 %v1157, %v1150
    %v1739 = vpack.c.b16 %v1158, %v1151
    %v1740 = vpack.c.b16 %v1159, %v1152
    %v1741 = vpack.c.b16 %v1160, %v1153
    %v1742 = vpack.c.b16 %v1161, %v1154
    %v1743 = vpack.c.b16 %v1169, %v1162
    %v1744 = vpack.c.b16 %v1170, %v1163
    %v1745 = vpack.c.b16 %v1171, %v1164
    %v1746 = vpack.c.b16 %v1172, %v1165
    %v1747 = vpack.c.b16 %v1173, %v1166
    %v1748 = vpack.c.b16 %v1174, %v1167
    %v1749 = vpack.c.b16 %v1175, %v1168
    %v1750 = vpack.c.b16 %v1183, %v1176
    %v1751 = vpack.c.b16 %v1184, %v1177
    %v1752 = vpack.c.b16 %v1185, %v1178
    %v1753 = vpack.c.b16 %v1186, %v1179
    %v1754 = vpack.c.b16 %v1187, %v1180
    %v1755 = vpack.c.b16 %v1188, %v1181
    %v1756 = vpack.c.b16 %v1189, %v1182
    %v1757 = vpack.c.b16 %v1197, %v1190
    %v1758 = vpack.c.b16 %v1198, %v1191
    %v1759 = vpack.c.b16 %v1199, %v1192
    %v1760 = vpack.c.b16 %v1200, %v1193
    %v1761 = vpack.c.b16 %v1201, %v1194
    %v1762 = vpack.c.b16 %v1202, %v1195
    %v1763 = vpack.c.b16 %v1203, %v1196
    %v1764 = vpack.c.b16 %v1211, %v1204
    %v1765 = vpack.c.b16 %v1212, %v1205
    %v1766 = vpack.c.b16 %v1213, %v1206
    %v1767 = vpack.c.b16 %v1214, %v1207
    %v1768 = vpack.c.b16 %v1215, %v1208
    %v1769 = vpack.c.b16 %v1216, %v1209
    %v1770 = vpack.c.b16 %v1217, %v1210
    %v1771 = vpack.c.b16 %v1225, %v1218
    %v1772 = vpack.c.b16 %v1226, %v1219
    %v1773 = vpack.c.b16 %v1227, %v1220
    %v1774 = vpack.c.b16 %v1228, %v1221
    %v1775 = vpack.c.b16 %v1229, %v1222
    %v1776 = vpack.c.b16 %v1230, %v1223
    %v1777 = vpack.c.b16 %v1231, %v1224
    %v1778 = vpack.c.b16 %v1239, %v1232
    %v1779 = vpack.c.b16 %v1240, %v1233
    %v1780 = vpack.c.b16 %v1241, %v1234
    %v1781 = vpack.c.b16 %v1242, %v1235
    %v1782 = vpack.c.b16 %v1243, %v1236
    %v1783 = vpack.c.b16 %v1244, %v1237
    %v1784 = vpack.c.b16 %v1245, %v1238
    %v1785 = vpack.c.b16 %v1253, %v1246
    %v1786 = vpack.c.b16 %v1254, %v1247
    %v1787 = vpack.c.b16 %v1255, %v1248
    %v1788 = vpack.c.b16 %v1256, %v1249
    %v1789 = vpack.c.b16 %v1257, %v1250
    %v1790 = vpack.c.b16 %v1258, %v1251
    %v1791 = vpack.c.b16 %v1259, %v1252
    %v1792 = vpack.c.b16 %v1267, %v1260
    %v1793 = vpack.c.b16 %v1268, %v1261
    %v1794 = vpack.c.b16 %v1269, %v1262
    %v1795 = vpack.c.b16 %v1270, %v1263
    %v1796 = vpack.c.b16 %v1271, %v1264
    %v1797 = vpack.c.b16 %v1272, %v1265
    %v1798 = vpack.c.b16 %v1273, %v1266
    %v1799 = vpack.c.b16 %v1281, %v1274
    %v1800 = vpack.c.b16 %v1282, %v1275
    %v1801 = vpack.c.b16 %v1283, %v1276
    %v1802 = vpack.c.b16 %v1284, %v1277
    %v1803 = vpack.c.b16 %v1285, %v1278
    %v1804 = vpack.c.b16 %v1286, %v1279
    %v1805 = vpack.c.b16 %v1287, %v1280
    %v1806 = vpack.c.b16 %v1295, %v1288
    %v1807 = vpack.c.b16 %v1296, %v1289
    %v1808 = vpack.c.b16 %v1297, %v1290
    %v1809 = vpack.c.b16 %v1298, %v1291
    %v1810 = vpack.c.b16 %v1299, %v1292
    %v1811 = vpack.c.b16 %v1300, %v1293
    %v1812 = vpack.c.b16 %v1301, %v1294
    %v1813 = vpack.c.b16 %v1309, %v1302
    %v1814 = vpack.c.b16 %v1310, %v1303
    %v1815 = vpack.c.b16 %v1311, %v1304
    %v1816 = vpack.c.b16 %v1312, %v1305
    %v1817 = vpack.c.b16 %v1313, %v1306
    %v1818 = vpack.c.b16 %v1314, %v1307
    %v1819 = vpack.c.b16 %v1315, %v1308
    %v1820 = vpack.c.b16 %v1323, %v1316
    %v1821 = vpack.c.b16 %v1324, %v1317
    %v1822 = vpack.c.b16 %v1325, %v1318
    %v1823 = vpack.c.b16 %v1326, %v1319
    %v1824 = vpack.c.b16 %v1327, %v1320
    %v1825 = vpack.c.b16 %v1328, %v1321
    %v1826 = vpack.c.b16 %v1329, %v1322
    %v1827 = vpack.c.b16 %v1337, %v1330
    %v1828 = vpack.c.b16 %v1338, %v1331
    %v1829 = vpack.c.b16 %v1339, %v1332
    %v1830 = vpack.c.b16 %v1340, %v1333
    %v1831 = vpack.c.b16 %v1341, %v1334
    %v1832 = vpack.c.b16 %v1342, %v1335
    %v1833 = vpack.c.b16 %v1343, %v1336
    %v1834 = vpack.c.b16 %v1351, %v1344
    %v1835 = vpack.c.b16 %v1352, %v1345
    %v1836 = vpack.c.b16 %v1353, %v1346
    %v1837 = vpack.c.b16 %v1354, %v1347
    %v1838 = vpack.c.b16 %v1355, %v1348
    %v1839 = vpack.c.b16 %v1356, %v1349
    %v1840 = vpack.c.b16 %v1357, %v1350
    %v1841 = vpack.c.b16 %v1365, %v1358
    %v1842 = vpack.c.b16 %v1366, %v1359
    %v1843 = vpack.c.b16 %v1367, %v1360
    %v1844 = vpack.c.b16 %v1368, %v1361
    %v1845 = vpack.c.b16 %v1369, %v1362
    %v1846 = vpack.c.b16 %v1370, %v1363
    %v1847 = vpack.c.b16 %v1371, %v1364
    %v1848 = vpack.c.b16 %v1379, %v1372
    %v1849 = vpack.c.b16 %v1380, %v1373
    %v1850 = vpack.c.b16 %v1381, %v1374
    %v1851 = vpack.c.b16 %v1382, %v1375
    %v1852 = vpack.c.b16 %v1383, %v1376
    %v1853 = vpack.c.b16 %v1384, %v1377
    %v1854 = vpack.c.b16 %v1385, %v1378
    %v1855 = vpack.c.b16 %v1393, %v1386
    %v1856 = vpack.c.b16 %v1394, %v1387
    %v1857 = vpack.c.b16 %v1395, %v1388
    %v1858 = vpack.c.b16 %v1396, %v1389
    %v1859 = vpack.c.b16 %v1397, %v1390
    %v1860 = vpack.c.b16 %v1398, %v1391
    %v1861 = vpack.c.b16 %v1399, %v1392
    %v1862 = vpack.c.b16 %v1407, %v1400
    %v1863 = vpack.c.b16 %v1408, %v1401
    %v1864 = vpack.c.b16 %v1409, %v1402
    %v1865 = vpack.c.b16 %v1410, %v1403
    %v1866 = vpack.c.b16 %v1411, %v1404
    %v1867 = vpack.c.b16 %v1412, %v1405
    %v1868 = vpack.c.b16 %v1413, %v1406
    %v1869 = vpack.c.b16 %v1421, %v1414
    %v1870 = vpack.c.b16 %v1422, %v1415
    %v1871 = vpack.c.b16 %v1423, %v1416
    %v1872 = vpack.c.b16 %v1424, %v1417
    %v1873 = vpack.c.b16 %v1425, %v1418
    %v1874 = vpack.c.b16 %v1426, %v1419
    %v1875 = vpack.c.b16 %v1427, %v1420
    %v1876 = vpack.c.b16 %v1435, %v1428
    %v1877 = vpack.c.b16 %v1436, %v1429
    %v1878 = vpack.c.b16 %v1437, %v1430
    %v1879 = vpack.c.b16 %v1438, %v1431
    %v1880 = vpack.c.b16 %v1439, %v1432
    %v1881 = vpack.c.b16 %v1440, %v1433
    %v1882 = vpack.c.b16 %v1441, %v1434
    %v1883 = vpack.c.b16 %v1449, %v1442
    %v1884 = vpack.c.b16 %v1450, %v1443
    %v1885 = vpack.c.b16 %v1451, %v1444
    %v1886 = vpack.c.b16 %v1452, %v1445
    %v1887 = vpack.c.b16 %v1453, %v1446
    %v1888 = vpack.c.b16 %v1454, %v1447
    %v1889 = vpack.c.b16 %v1455, %v1448
    %v1890 = vpack.c.b16 %v1463, %v1456
    %v1891 = vpack.c.b16 %v1464, %v1457
    %v1892 = vpack.c.b16 %v1465, %v1458
    %v1893 = vpack.c.b16 %v1466, %v1459
    %v1894 = vpack.c.b16 %v1467, %v1460
    %v1895 = vpack.c.b16 %v1468, %v1461
    %v1896 = vpack.c.b16 %v1469, %v1462
    %v1897 = vpack.c.b16 %v1477, %v1470
    %v1898 = vpack.c.b16 %v1478, %v1471
    %v1899 = vpack.c.b16 %v1479, %v1472
    %v1900 = vpack.c.b16 %v1480, %v1473
    %v1901 = vpack.c.b16 %v1481, %v1474
    %v1902 = vpack.c.b16 %v1482, %v1475
    %v1903 = vpack.c.b16 %v1483, %v1476
    %v1904 = vpack.c.b16 %v1491, %v1484
    %v1905 = vpack.c.b16 %v1492, %v1485
    %v1906 = vpack.c.b16 %v1493, %v1486
    %v1907 = vpack.c.b16 %v1494, %v1487
    %v1908 = vpack.c.b16 %v1495, %v1488
    %v1909 = vpack.c.b16 %v1496, %v1489
    %v1910 = vpack.c.b16 %v1497, %v1490
    %v1911 = vpack.c.b16 %v1505, %v1498
    %v1912 = vpack.c.b16 %v1506, %v1499
    %v1913 = vpack.c.b16 %v1507, %v1500
    %v1914 = vpack.c.b16 %v1508, %v1501
    %v1915 = vpack.c.b16 %v1509, %v1502
    %v1916 = vpack.c.b16 %v1510, %v1503
    %v1917 = vpack.c.b16 %v1511, %v1504
    %v1918 = vpack.c.b16 %v1519, %v1512
    %v1919 = vpack.c.b16 %v1520, %v1513
    %v1920 = vpack.c.b16 %v1521, %v1514
    %v1921 = vpack.c.b16 %v1522, %v1515
    %v1922 = vpack.c.b16 %v1523, %v1516
    %v1923 = vpack.c.b16 %v1524, %v1517
    %v1924 = vpack.c.b16 %v1525, %v1518
    %v1925 = vpack.c.b16 %v1533, %v1526
    %v1926 = vpack.c.b16 %v1534, %v1527
    %v1927 = vpack.c.b16 %v1535, %v1528
    %v1928 = vpack.c.b16 %v1536, %v1529
    %v1929 = vpack.c.b16 %v1537, %v1530
    %v1930 = vpack.c.b16 %v1538, %v1531
    %v1931 = vpack.c.b16 %v1539, %v1532
    %v1932 = vpack.c.b16 %v1547, %v1540
    %v1933 = vpack.c.b16 %v1548, %v1541
    %v1934 = vpack.c.b16 %v1549, %v1542
    %v1935 = vpack.c.b16 %v1550, %v1543
    %v1936 = vpack.c.b16 %v1551, %v1544
    %v1937 = vpack.c.b16 %v1552, %v1545
    %v1938 = vpack.c.b16 %v1553, %v1546
    %v1939 = vpack.c.b16 %v1561, %v1554
    %v1940 = vpack.c.b16 %v1562, %v1555
    %v1941 = vpack.c.b16 %v1563, %v1556
    %v1942 = vpack.c.b16 %v1564, %v1557
    %v1943 = vpack.c.b16 %v1565, %v1558
    %v1944 = vpack.c.b16 %v1566, %v1559
    %v1945 = vpack.c.b16 %v1567, %v1560
    %v1946 = vpack.c.b16 %v1575, %v1568
    %v1947 = vpack.c.b16 %v1576, %v1569
    %v1948 = vpack.c.b16 %v1577, %v1570
    %v1949 = vpack.c.b16 %v1578, %v1571
    %v1950 = vpack.c.b16 %v1579, %v1572
    %v1951 = vpack.c.b16 %v1580, %v1573
    %v1952 = vpack.c.b16 %v1581, %v1574
    %v1953 = vpack.c.b16 %v1589, %v1582
    %v1954 = vpack.c.b16 %v1590, %v1583
    %v1955 = vpack.c.b16 %v1591, %v1584
    %v1956 = vpack.c.b16 %v1592, %v1585
    %v1957 = vpack.c.b16 %v1593, %v1586
    %v1958 = vpack.c.b16 %v1594, %v1587
    %v1959 = vpack.c.b16 %v1595, %v1588
    %v1960 = vpack.c.b16 %v1603, %v1596
    %v1961 = vpack.c.b16 %v1604, %v1597
    %v1962 = vpack.c.b16 %v1605, %v1598
    %v1963 = vpack.c.b16 %v1606, %v1599
    %v1964 = vpack.c.b16 %v1607, %v1600
    %v1965 = vpack.c.b16 %v1608, %v1601
    %v1966 = vpack.c.b16 %v1609, %v1602
    %v1967 = vpack.c.b16 %v1617, %v1610
    %v1968 = vpack.c.b16 %v1618, %v1611
    %v1969 = vpack.c.b16 %v1619, %v1612
    %v1970 = vpack.c.b16 %v1620, %v1613
    %v1971 = vpack.c.b16 %v1621, %v1614
    %v1972 = vpack.c.b16 %v1622, %v1615
    %v1973 = vpack.c.b16 %v1623, %v1616
    %v1974 = vpack.c.b16 %v1631, %v1624
    %v1975 = vpack.c.b16 %v1632, %v1625
    %v1976 = vpack.c.b16 %v1633, %v1626
    %v1977 = vpack.c.b16 %v1634, %v1627
    %v1978 = vpack.c.b16 %v1635, %v1628
    %v1979 = vpack.c.b16 %v1636, %v1629
    %v1980 = vpack.c.b16 %v1637, %v1630
    %vm2324 = vcmask 130048
    %v2326 = vsel %vm2324, %v553, 0
    %2328 = vmatprep.subr.bf16.mxu0 %v1639
    %2329 = vmatpush1.bf16.msra.mxu0 %v1638
    %2330 = vmatprep.subr.bf16.mxu0 %v1646
    %2331 = vmatpush1.bf16.msra.mxu0 %v1645
    %2332 = vmatprep.subr.bf16.mxu0 %v1653
    %2333 = vmatpush1.bf16.msra.mxu0 %v1652
    %2334 = vmatprep.subr.bf16.mxu0 %v1660
    %2335 = vmatpush1.bf16.msra.mxu0 %v1659
    %2336 = vmatprep.subr.bf16.mxu0 %v1667
    %2337 = vmatpush1.bf16.msra.mxu0 %v1666
    %2338 = vmatprep.subr.bf16.mxu0 %v1674
    %2339 = vmatpush1.bf16.msra.mxu0 %v1673
    %2340 = vmatprep.subr.bf16.mxu0 %v1681
    %2341 = vmatpush1.bf16.msra.mxu0 %v1680
    %2342 = vmatprep.subr.bf16.mxu0 %v1688
    %2343 = vmatpush1.bf16.msra.mxu0 %v1687
    %2344 = vmatprep.subr.bf16.mxu0 %v1695
    %2345 = vmatpush1.bf16.msra.mxu0 %v1694
    %2346 = vmatprep.subr.bf16.mxu0 %v1702
    %2347 = vmatpush1.bf16.msra.mxu0 %v1701
    %2348 = vmatprep.subr.bf16.mxu0 %v1709
    %2349 = vmatpush1.bf16.msra.mxu0 %v1708
    %2350 = vmatprep.subr.bf16.mxu0 %v1716
    %2351 = vmatpush1.bf16.msra.mxu0 %v1715
    %2352 = vmatprep.subr.bf16.mxu0 %v1723
    %2353 = vmatpush1.bf16.msra.mxu0 %v1722
    %2354 = vmatprep.subr.bf16.mxu0 %v1730
    %2355 = vmatpush1.bf16.msra.mxu0 %v1729
    %2356 = vmatprep.subr.bf16.mxu0 %v1737
    %2357 = vmatpush1.bf16.msra.mxu0 %v1736
    %2358 = vmatprep.subr.bf16.mxu0 %v1744
    %2359 = vmatpush1.bf16.msra.mxu0 %v1743
    %2360 = vmatprep.mubr.bf16.mxu0 %v548
    %2361 = vmatmul.mubr.bf16.gmra.mrb[0].mxu0 %v547
    %v2362 = vpop.f32.mrb[0].mxu0
    %v2363 = vadd.f32 %v504, %v2362
    %v2364 = vpop.f32.mrb[0].mxu0
    %v2365 = vadd.f32 %v508, %v2364
    %v2366 = vpop.f32.mrb[0].mxu0
    %v2367 = vpop.f32.mrb[0].mxu0
    %2368 = vdwg.mxu0
    %2369 = vmatprep.subr.bf16.mxu0 %v1751
    %2370 = vmatpush1.bf16.msra.mxu0 %v1750
    %2371 = vmatprep.subr.bf16.mxu0 %v1758
    %2372 = vmatpush1.bf16.msra.mxu0 %v1757
    %2373 = vmatprep.subr.bf16.mxu0 %v1765
    %2374 = vmatpush1.bf16.msra.mxu0 %v1764
    %2375 = vmatprep.subr.bf16.mxu0 %v1772
    %2376 = vmatpush1.bf16.msra.mxu0 %v1771
    %2377 = vmatprep.subr.bf16.mxu0 %v1779
    %2378 = vmatpush1.bf16.msra.mxu0 %v1778
    %2379 = vmatprep.subr.bf16.mxu0 %v1786
    %2380 = vmatpush1.bf16.msra.mxu0 %v1785
    %2381 = vmatprep.subr.bf16.mxu0 %v1793
    %2382 = vmatpush1.bf16.msra.mxu0 %v1792
    %2383 = vmatprep.subr.bf16.mxu0 %v1800
    %2384 = vmatpush1.bf16.msra.mxu0 %v1799
    %2385 = vmatprep.subr.bf16.mxu0 %v1807
    %2386 = vmatpush1.bf16.msra.mxu0 %v1806
    %2387 = vmatprep.subr.bf16.mxu0 %v1814
    %2388 = vmatpush1.bf16.msra.mxu0 %v1813
    %2389 = vmatprep.subr.bf16.mxu0 %v1821
    %2390 = vmatpush1.bf16.msra.mxu0 %v1820
    %2391 = vmatprep.subr.bf16.mxu0 %v1828
    %2392 = vmatpush1.bf16.msra.mxu0 %v1827
    %2393 = vmatprep.subr.bf16.mxu0 %v1835
    %2394 = vmatpush1.bf16.msra.mxu0 %v1834
    %2395 = vmatprep.subr.bf16.mxu0 %v1842
    %2396 = vmatpush1.bf16.msra.mxu0 %v1841
    %2397 = vmatprep.subr.bf16.mxu0 %v1849
    %2398 = vmatpush1.bf16.msra.mxu0 %v1848
    %2399 = vmatprep.subr.bf16.mxu0 %v1856
    %2400 = vmatpush1.bf16.msra.mxu0 %v1855
    %2401 = vmatprep.mubr.bf16.mxu0 %v550
    %2402 = vmatmul.mubr.bf16.gmra.mrb[0].mxu0 %v549
    %v2403 = vpop.f32.mrb[0].mxu0
    %v2404 = vadd.f32 %v2363, %v2403
    %v2405 = vpop.f32.mrb[0].mxu0
    %v2406 = vadd.f32 %v2365, %v2405
    %v2407 = vpop.f32.mrb[0].mxu0
    %v2408 = vpop.f32.mrb[0].mxu0
    %2409 = vdwg.mxu0
    %2410 = vmatprep.subr.bf16.mxu0 %v1863
    %2411 = vmatpush1.bf16.msra.mxu0 %v1862
    %2412 = vmatprep.subr.bf16.mxu0 %v1870
    %2413 = vmatpush1.bf16.msra.mxu0 %v1869
    %2414 = vmatprep.subr.bf16.mxu0 %v1877
    %2415 = vmatpush1.bf16.msra.mxu0 %v1876
    %2416 = vmatprep.subr.bf16.mxu0 %v1884
    %2417 = vmatpush1.bf16.msra.mxu0 %v1883
    %2418 = vmatprep.subr.bf16.mxu0 %v1891
    %2419 = vmatpush1.bf16.msra.mxu0 %v1890
    %2420 = vmatprep.subr.bf16.mxu0 %v1898
    %2421 = vmatpush1.bf16.msra.mxu0 %v1897
    %2422 = vmatprep.subr.bf16.mxu0 %v1905
    %2423 = vmatpush1.bf16.msra.mxu0 %v1904
    %2424 = vmatprep.subr.bf16.mxu0 %v1912
    %2425 = vmatpush1.bf16.msra.mxu0 %v1911
    %2426 = vmatprep.subr.bf16.mxu0 %v1919
    %2427 = vmatpush1.bf16.msra.mxu0 %v1918
    %2428 = vmatprep.subr.bf16.mxu0 %v1926
    %2429 = vmatpush1.bf16.msra.mxu0 %v1925
    %2430 = vmatprep.subr.bf16.mxu0 %v1933
    %2431 = vmatpush1.bf16.msra.mxu0 %v1932
    %2432 = vmatprep.subr.bf16.mxu0 %v1940
    %2433 = vmatpush1.bf16.msra.mxu0 %v1939
    %2434 = vmatprep.subr.bf16.mxu0 %v1947
    %2435 = vmatpush1.bf16.msra.mxu0 %v1946
    %2436 = vmatprep.subr.bf16.mxu0 %v1954
    %2437 = vmatpush1.bf16.msra.mxu0 %v1953
    %2438 = vmatprep.subr.bf16.mxu0 %v1961
    %2439 = vmatpush1.bf16.msra.mxu0 %v1960
    %2440 = vmatprep.subr.bf16.mxu0 %v1968
    %2441 = vmatpush1.bf16.msra.mxu0 %v1967
    %2442 = vmatprep.mubr.bf16.mxu0 %v552
    %2443 = vmatmul.mubr.bf16.gmra.mrb[0].mxu0 %v551
    %v2444 = vpop.f32.mrb[0].mxu0
    %v2445 = vadd.f32 %v2404, %v2444
    %v2446 = vpop.f32.mrb[0].mxu0
    %v2447 = vadd.f32 %v2406, %v2446
    %v2448 = vpop.f32.mrb[0].mxu0
    %v2449 = vpop.f32.mrb[0].mxu0
    %2450 = vdwg.mxu0
    %2451 = vmatprep.subr.bf16.mxu0 %v1975
    %2452 = vmatpush1.bf16.msra.mxu0 %v1974
    %2453 = vmatprep.subr.bf16.mxu0 0
    %2454 = vmatpush1.bf16.msra.mxu0 0
    %2455 = vmatprep.subr.bf16.mxu0 0
    %2456 = vmatpush1.bf16.msra.mxu0 0
    %2457 = vmatprep.subr.bf16.mxu0 0
    %2458 = vmatpush1.bf16.msra.mxu0 0
    %2459 = vmatprep.subr.bf16.mxu0 0
    %2460 = vmatpush1.bf16.msra.mxu0 0
    %2461 = vmatprep.subr.bf16.mxu0 0
    %2462 = vmatpush1.bf16.msra.mxu0 0
    %2463 = vmatprep.subr.bf16.mxu0 0
    %2464 = vmatpush1.bf16.msra.mxu0 0
    %2465 = vmatprep.subr.bf16.mxu0 0
    %2466 = vmatpush1.bf16.msra.mxu0 0
    %2467 = vmatprep.subr.bf16.mxu0 0
    %2468 = vmatpush1.bf16.msra.mxu0 0
    %2469 = vmatprep.subr.bf16.mxu0 0
    %2470 = vmatpush1.bf16.msra.mxu0 0
    %2471 = vmatprep.subr.bf16.mxu0 0
    %2472 = vmatpush1.bf16.msra.mxu0 0
    %2473 = vmatprep.subr.bf16.mxu0 0
    %2474 = vmatpush1.bf16.msra.mxu0 0
    %2475 = vmatprep.subr.bf16.mxu0 0
    %2476 = vmatpush1.bf16.msra.mxu0 0
    %2477 = vmatprep.subr.bf16.mxu0 0
    %2478 = vmatpush1.bf16.msra.mxu0 0
    %2479 = vmatprep.subr.bf16.mxu0 0
    %2480 = vmatpush1.bf16.msra.mxu0 0
    %2481 = vmatprep.subr.bf16.mxu0 0
    %2482 = vmatpush1.bf16.msra.mxu0 0
    %2483 = vmatprep.mubr.bf16.mxu0 0
    %2484 = vmatmul.mubr.bf16.gmra.mrb[0].mxu0 %v2326
    %v2485 = vpop.f32.mrb[0].mxu0
    %v2486 = vadd.f32 %v2445, %v2485
    %v2487 = vpop.f32.mrb[0].mxu0
    %v2488 = vadd.f32 %v2447, %v2487
    %v2489 = vpop.f32.mrb[0].mxu0
    %v2490 = vpop.f32.mrb[0].mxu0
    %2491 = vdwg.mxu0
    %2492 = vmatprep.subr.bf16.mxu0 %v1641
    %2493 = vmatpush1.bf16.msra.mxu0 %v1640
    %2494 = vmatprep.subr.bf16.mxu0 %v1648
    %2495 = vmatpush1.bf16.msra.mxu0 %v1647
    %2496 = vmatprep.subr.bf16.mxu0 %v1655
    %2497 = vmatpush1.bf16.msra.mxu0 %v1654
    %2498 = vmatprep.subr.bf16.mxu0 %v1662
    %2499 = vmatpush1.bf16.msra.mxu0 %v1661
    %2500 = vmatprep.subr.bf16.mxu0 %v1669
    %2501 = vmatpush1.bf16.msra.mxu0 %v1668
    %2502 = vmatprep.subr.bf16.mxu0 %v1676
    %2503 = vmatpush1.bf16.msra.mxu0 %v1675
    %2504 = vmatprep.subr.bf16.mxu0 %v1683
    %2505 = vmatpush1.bf16.msra.mxu0 %v1682
    %2506 = vmatprep.subr.bf16.mxu0 %v1690
    %2507 = vmatpush1.bf16.msra.mxu0 %v1689
    %2508 = vmatprep.subr.bf16.mxu0 %v1697
    %2509 = vmatpush1.bf16.msra.mxu0 %v1696
    %2510 = vmatprep.subr.bf16.mxu0 %v1704
    %2511 = vmatpush1.bf16.msra.mxu0 %v1703
    %2512 = vmatprep.subr.bf16.mxu0 %v1711
    %2513 = vmatpush1.bf16.msra.mxu0 %v1710
    %2514 = vmatprep.subr.bf16.mxu0 %v1718
    %2515 = vmatpush1.bf16.msra.mxu0 %v1717
    %2516 = vmatprep.subr.bf16.mxu0 %v1725
    %2517 = vmatpush1.bf16.msra.mxu0 %v1724
    %2518 = vmatprep.subr.bf16.mxu0 %v1732
    %2519 = vmatpush1.bf16.msra.mxu0 %v1731
    %2520 = vmatprep.subr.bf16.mxu0 %v1739
    %2521 = vmatpush1.bf16.msra.mxu0 %v1738
    %2522 = vmatprep.subr.bf16.mxu0 %v1746
    %2523 = vmatpush1.bf16.msra.mxu0 %v1745
    %2524 = vmatprep.mubr.bf16.mxu0 %v548
    %2525 = vmatmul.mubr.bf16.gmra.mrb[0].mxu0 %v547
    %v2526 = vpop.f32.mrb[0].mxu0
    %v2527 = vadd.f32 %v512, %v2526
    %v2528 = vpop.f32.mrb[0].mxu0
    %v2529 = vadd.f32 %v516, %v2528
    %v2530 = vpop.f32.mrb[0].mxu0
    %v2531 = vpop.f32.mrb[0].mxu0
    %2532 = vdwg.mxu0
    %2533 = vmatprep.subr.bf16.mxu0 %v1753
    %2534 = vmatpush1.bf16.msra.mxu0 %v1752
    %2535 = vmatprep.subr.bf16.mxu0 %v1760
    %2536 = vmatpush1.bf16.msra.mxu0 %v1759
    %2537 = vmatprep.subr.bf16.mxu0 %v1767
    %2538 = vmatpush1.bf16.msra.mxu0 %v1766
    %2539 = vmatprep.subr.bf16.mxu0 %v1774
    %2540 = vmatpush1.bf16.msra.mxu0 %v1773
    %2541 = vmatprep.subr.bf16.mxu0 %v1781
    %2542 = vmatpush1.bf16.msra.mxu0 %v1780
    %2543 = vmatprep.subr.bf16.mxu0 %v1788
    %2544 = vmatpush1.bf16.msra.mxu0 %v1787
    %2545 = vmatprep.subr.bf16.mxu0 %v1795
    %2546 = vmatpush1.bf16.msra.mxu0 %v1794
    %2547 = vmatprep.subr.bf16.mxu0 %v1802
    %2548 = vmatpush1.bf16.msra.mxu0 %v1801
    %2549 = vmatprep.subr.bf16.mxu0 %v1809
    %2550 = vmatpush1.bf16.msra.mxu0 %v1808
    %2551 = vmatprep.subr.bf16.mxu0 %v1816
    %2552 = vmatpush1.bf16.msra.mxu0 %v1815
    %2553 = vmatprep.subr.bf16.mxu0 %v1823
    %2554 = vmatpush1.bf16.msra.mxu0 %v1822
    %2555 = vmatprep.subr.bf16.mxu0 %v1830
    %2556 = vmatpush1.bf16.msra.mxu0 %v1829
    %2557 = vmatprep.subr.bf16.mxu0 %v1837
    %2558 = vmatpush1.bf16.msra.mxu0 %v1836
    %2559 = vmatprep.subr.bf16.mxu0 %v1844
    %2560 = vmatpush1.bf16.msra.mxu0 %v1843
    %2561 = vmatprep.subr.bf16.mxu0 %v1851
    %2562 = vmatpush1.bf16.msra.mxu0 %v1850
    %2563 = vmatprep.subr.bf16.mxu0 %v1858
    %2564 = vmatpush1.bf16.msra.mxu0 %v1857
    %2565 = vmatprep.mubr.bf16.mxu0 %v550
    %2566 = vmatmul.mubr.bf16.gmra.mrb[0].mxu0 %v549
    %v2567 = vpop.f32.mrb[0].mxu0
    %v2568 = vadd.f32 %v2527, %v2567
    %v2569 = vpop.f32.mrb[0].mxu0
    %v2570 = vadd.f32 %v2529, %v2569
    %v2571 = vpop.f32.mrb[0].mxu0
    %v2572 = vpop.f32.mrb[0].mxu0
    %2573 = vdwg.mxu0
    %2574 = vmatprep.subr.bf16.mxu0 %v1865
    %2575 = vmatpush1.bf16.msra.mxu0 %v1864
    %2576 = vmatprep.subr.bf16.mxu0 %v1872
    %2577 = vmatpush1.bf16.msra.mxu0 %v1871
    %2578 = vmatprep.subr.bf16.mxu0 %v1879
    %2579 = vmatpush1.bf16.msra.mxu0 %v1878
    %2580 = vmatprep.subr.bf16.mxu0 %v1886
    %2581 = vmatpush1.bf16.msra.mxu0 %v1885
    %2582 = vmatprep.subr.bf16.mxu0 %v1893
    %2583 = vmatpush1.bf16.msra.mxu0 %v1892
    %2584 = vmatprep.subr.bf16.mxu0 %v1900
    %2585 = vmatpush1.bf16.msra.mxu0 %v1899
    %2586 = vmatprep.subr.bf16.mxu0 %v1907
    %2587 = vmatpush1.bf16.msra.mxu0 %v1906
    %2588 = vmatprep.subr.bf16.mxu0 %v1914
    %2589 = vmatpush1.bf16.msra.mxu0 %v1913
    %2590 = vmatprep.subr.bf16.mxu0 %v1921
    %2591 = vmatpush1.bf16.msra.mxu0 %v1920
    %2592 = vmatprep.subr.bf16.mxu0 %v1928
    %2593 = vmatpush1.bf16.msra.mxu0 %v1927
    %2594 = vmatprep.subr.bf16.mxu0 %v1935
    %2595 = vmatpush1.bf16.msra.mxu0 %v1934
    %2596 = vmatprep.subr.bf16.mxu0 %v1942
    %2597 = vmatpush1.bf16.msra.mxu0 %v1941
    %2598 = vmatprep.subr.bf16.mxu0 %v1949
    %2599 = vmatpush1.bf16.msra.mxu0 %v1948
    %2600 = vmatprep.subr.bf16.mxu0 %v1956
    %2601 = vmatpush1.bf16.msra.mxu0 %v1955
    %2602 = vmatprep.subr.bf16.mxu0 %v1963
    %2603 = vmatpush1.bf16.msra.mxu0 %v1962
    %2604 = vmatprep.subr.bf16.mxu0 %v1970
    %2605 = vmatpush1.bf16.msra.mxu0 %v1969
    %2606 = vmatprep.mubr.bf16.mxu0 %v552
    %2607 = vmatmul.mubr.bf16.gmra.mrb[0].mxu0 %v551
    %v2608 = vpop.f32.mrb[0].mxu0
    %v2609 = vadd.f32 %v2568, %v2608
    %v2610 = vpop.f32.mrb[0].mxu0
    %v2611 = vadd.f32 %v2570, %v2610
    %v2612 = vpop.f32.mrb[0].mxu0
    %v2613 = vpop.f32.mrb[0].mxu0
    %2614 = vdwg.mxu0
    %2615 = vmatprep.subr.bf16.mxu0 %v1977
    %2616 = vmatpush1.bf16.msra.mxu0 %v1976
    %2617 = vmatprep.subr.bf16.mxu0 0
    %2618 = vmatpush1.bf16.msra.mxu0 0
    %2619 = vmatprep.subr.bf16.mxu0 0
    %2620 = vmatpush1.bf16.msra.mxu0 0
    %2621 = vmatprep.subr.bf16.mxu0 0
    %2622 = vmatpush1.bf16.msra.mxu0 0
    %2623 = vmatprep.subr.bf16.mxu0 0
    %2624 = vmatpush1.bf16.msra.mxu0 0
    %2625 = vmatprep.subr.bf16.mxu0 0
    %2626 = vmatpush1.bf16.msra.mxu0 0
    %2627 = vmatprep.subr.bf16.mxu0 0
    %2628 = vmatpush1.bf16.msra.mxu0 0
    %2629 = vmatprep.subr.bf16.mxu0 0
    %2630 = vmatpush1.bf16.msra.mxu0 0
    %2631 = vmatprep.subr.bf16.mxu0 0
    %2632 = vmatpush1.bf16.msra.mxu0 0
    %2633 = vmatprep.subr.bf16.mxu0 0
    %2634 = vmatpush1.bf16.msra.mxu0 0
    %2635 = vmatprep.subr.bf16.mxu0 0
    %2636 = vmatpush1.bf16.msra.mxu0 0
    %2637 = vmatprep.subr.bf16.mxu0 0
    %2638 = vmatpush1.bf16.msra.mxu0 0
    %2639 = vmatprep.subr.bf16.mxu0 0
    %2640 = vmatpush1.bf16.msra.mxu0 0
    %2641 = vmatprep.subr.bf16.mxu0 0
    %2642 = vmatpush1.bf16.msra.mxu0 0
    %2643 = vmatprep.subr.bf16.mxu0 0
    %2644 = vmatpush1.bf16.msra.mxu0 0
    %2645 = vmatprep.subr.bf16.mxu0 0
    %2646 = vmatpush1.bf16.msra.mxu0 0
    %2647 = vmatprep.mubr.bf16.mxu0 0
    %2648 = vmatmul.mubr.bf16.gmra.mrb[0].mxu0 %v2326
    %v2649 = vpop.f32.mrb[0].mxu0
    %v2650 = vadd.f32 %v2609, %v2649
    %v2651 = vpop.f32.mrb[0].mxu0
    %v2652 = vadd.f32 %v2611, %v2651
    %v2653 = vpop.f32.mrb[0].mxu0
    %v2654 = vpop.f32.mrb[0].mxu0
    %2655 = vdwg.mxu0
    %2656 = vmatprep.subr.bf16.mxu0 %v1643
    %2657 = vmatpush1.bf16.msra.mxu0 %v1642
    %2658 = vmatprep.subr.bf16.mxu0 %v1650
    %2659 = vmatpush1.bf16.msra.mxu0 %v1649
    %2660 = vmatprep.subr.bf16.mxu0 %v1657
    %2661 = vmatpush1.bf16.msra.mxu0 %v1656
    %2662 = vmatprep.subr.bf16.mxu0 %v1664
    %2663 = vmatpush1.bf16.msra.mxu0 %v1663
    %2664 = vmatprep.subr.bf16.mxu0 %v1671
    %2665 = vmatpush1.bf16.msra.mxu0 %v1670
    %2666 = vmatprep.subr.bf16.mxu0 %v1678
    %2667 = vmatpush1.bf16.msra.mxu0 %v1677
    %2668 = vmatprep.subr.bf16.mxu0 %v1685
    %2669 = vmatpush1.bf16.msra.mxu0 %v1684
    %2670 = vmatprep.subr.bf16.mxu0 %v1692
    %2671 = vmatpush1.bf16.msra.mxu0 %v1691
    %2672 = vmatprep.subr.bf16.mxu0 %v1699
    %2673 = vmatpush1.bf16.msra.mxu0 %v1698
    %2674 = vmatprep.subr.bf16.mxu0 %v1706
    %2675 = vmatpush1.bf16.msra.mxu0 %v1705
    %2676 = vmatprep.subr.bf16.mxu0 %v1713
    %2677 = vmatpush1.bf16.msra.mxu0 %v1712
    %2678 = vmatprep.subr.bf16.mxu0 %v1720
    %2679 = vmatpush1.bf16.msra.mxu0 %v1719
    %2680 = vmatprep.subr.bf16.mxu0 %v1727
    %2681 = vmatpush1.bf16.msra.mxu0 %v1726
    %2682 = vmatprep.subr.bf16.mxu0 %v1734
    %2683 = vmatpush1.bf16.msra.mxu0 %v1733
    %2684 = vmatprep.subr.bf16.mxu0 %v1741
    %2685 = vmatpush1.bf16.msra.mxu0 %v1740
    %2686 = vmatprep.subr.bf16.mxu0 %v1748
    %2687 = vmatpush1.bf16.msra.mxu0 %v1747
    %2688 = vmatprep.mubr.bf16.mxu0 %v548
    %2689 = vmatmul.mubr.bf16.gmra.mrb[0].mxu0 %v547
    %v2690 = vpop.f32.mrb[0].mxu0
    %v2691 = vadd.f32 %v520, %v2690
    %v2692 = vpop.f32.mrb[0].mxu0
    %v2693 = vadd.f32 %v524, %v2692
    %v2694 = vpop.f32.mrb[0].mxu0
    %v2695 = vpop.f32.mrb[0].mxu0
    %2696 = vdwg.mxu0
    %2697 = vmatprep.subr.bf16.mxu0 %v1755
    %2698 = vmatpush1.bf16.msra.mxu0 %v1754
    %2699 = vmatprep.subr.bf16.mxu0 %v1762
    %2700 = vmatpush1.bf16.msra.mxu0 %v1761
    %2701 = vmatprep.subr.bf16.mxu0 %v1769
    %2702 = vmatpush1.bf16.msra.mxu0 %v1768
    %2703 = vmatprep.subr.bf16.mxu0 %v1776
    %2704 = vmatpush1.bf16.msra.mxu0 %v1775
    %2705 = vmatprep.subr.bf16.mxu0 %v1783
    %2706 = vmatpush1.bf16.msra.mxu0 %v1782
    %2707 = vmatprep.subr.bf16.mxu0 %v1790
    %2708 = vmatpush1.bf16.msra.mxu0 %v1789
    %2709 = vmatprep.subr.bf16.mxu0 %v1797
    %2710 = vmatpush1.bf16.msra.mxu0 %v1796
    %2711 = vmatprep.subr.bf16.mxu0 %v1804
    %2712 = vmatpush1.bf16.msra.mxu0 %v1803
    %2713 = vmatprep.subr.bf16.mxu0 %v1811
    %2714 = vmatpush1.bf16.msra.mxu0 %v1810
    %2715 = vmatprep.subr.bf16.mxu0 %v1818
    %2716 = vmatpush1.bf16.msra.mxu0 %v1817
    %2717 = vmatprep.subr.bf16.mxu0 %v1825
    %2718 = vmatpush1.bf16.msra.mxu0 %v1824
    %2719 = vmatprep.subr.bf16.mxu0 %v1832
    %2720 = vmatpush1.bf16.msra.mxu0 %v1831
    %2721 = vmatprep.subr.bf16.mxu0 %v1839
    %2722 = vmatpush1.bf16.msra.mxu0 %v1838
    %2723 = vmatprep.subr.bf16.mxu0 %v1846
    %2724 = vmatpush1.bf16.msra.mxu0 %v1845
    %2725 = vmatprep.subr.bf16.mxu0 %v1853
    %2726 = vmatpush1.bf16.msra.mxu0 %v1852
    %2727 = vmatprep.subr.bf16.mxu0 %v1860
    %2728 = vmatpush1.bf16.msra.mxu0 %v1859
    %2729 = vmatprep.mubr.bf16.mxu0 %v550
    %2730 = vmatmul.mubr.bf16.gmra.mrb[0].mxu0 %v549
    %v2731 = vpop.f32.mrb[0].mxu0
    %v2732 = vadd.f32 %v2691, %v2731
    %v2733 = vpop.f32.mrb[0].mxu0
    %v2734 = vadd.f32 %v2693, %v2733
    %v2735 = vpop.f32.mrb[0].mxu0
    %v2736 = vpop.f32.mrb[0].mxu0
    %2737 = vdwg.mxu0
    %2738 = vmatprep.subr.bf16.mxu0 %v1867
    %2739 = vmatpush1.bf16.msra.mxu0 %v1866
    %2740 = vmatprep.subr.bf16.mxu0 %v1874
    %2741 = vmatpush1.bf16.msra.mxu0 %v1873
    %2742 = vmatprep.subr.bf16.mxu0 %v1881
    %2743 = vmatpush1.bf16.msra.mxu0 %v1880
    %2744 = vmatprep.subr.bf16.mxu0 %v1888
    %2745 = vmatpush1.bf16.msra.mxu0 %v1887
    %2746 = vmatprep.subr.bf16.mxu0 %v1895
    %2747 = vmatpush1.bf16.msra.mxu0 %v1894
    %2748 = vmatprep.subr.bf16.mxu0 %v1902
    %2749 = vmatpush1.bf16.msra.mxu0 %v1901
    %2750 = vmatprep.subr.bf16.mxu0 %v1909
    %2751 = vmatpush1.bf16.msra.mxu0 %v1908
    %2752 = vmatprep.subr.bf16.mxu0 %v1916
    %2753 = vmatpush1.bf16.msra.mxu0 %v1915
    %2754 = vmatprep.subr.bf16.mxu0 %v1923
    %2755 = vmatpush1.bf16.msra.mxu0 %v1922
    %2756 = vmatprep.subr.bf16.mxu0 %v1930
    %2757 = vmatpush1.bf16.msra.mxu0 %v1929
    %2758 = vmatprep.subr.bf16.mxu0 %v1937
    %2759 = vmatpush1.bf16.msra.mxu0 %v1936
    %2760 = vmatprep.subr.bf16.mxu0 %v1944
    %2761 = vmatpush1.bf16.msra.mxu0 %v1943
    %2762 = vmatprep.subr.bf16.mxu0 %v1951
    %2763 = vmatpush1.bf16.msra.mxu0 %v1950
    %2764 = vmatprep.subr.bf16.mxu0 %v1958
    %2765 = vmatpush1.bf16.msra.mxu0 %v1957
    %2766 = vmatprep.subr.bf16.mxu0 %v1965
    %2767 = vmatpush1.bf16.msra.mxu0 %v1964
    %2768 = vmatprep.subr.bf16.mxu0 %v1972
    %2769 = vmatpush1.bf16.msra.mxu0 %v1971
    %2770 = vmatprep.mubr.bf16.mxu0 %v552
    %2771 = vmatmul.mubr.bf16.gmra.mrb[0].mxu0 %v551
    %v2772 = vpop.f32.mrb[0].mxu0
    %v2773 = vadd.f32 %v2732, %v2772
    %v2774 = vpop.f32.mrb[0].mxu0
    %v2775 = vadd.f32 %v2734, %v2774
    %v2776 = vpop.f32.mrb[0].mxu0
    %v2777 = vpop.f32.mrb[0].mxu0
    %2778 = vdwg.mxu0
    %2779 = vmatprep.subr.bf16.mxu0 %v1979
    %2780 = vmatpush1.bf16.msra.mxu0 %v1978
    %2781 = vmatprep.subr.bf16.mxu0 0
    %2782 = vmatpush1.bf16.msra.mxu0 0
    %2783 = vmatprep.subr.bf16.mxu0 0
    %2784 = vmatpush1.bf16.msra.mxu0 0
    %2785 = vmatprep.subr.bf16.mxu0 0
    %2786 = vmatpush1.bf16.msra.mxu0 0
    %2787 = vmatprep.subr.bf16.mxu0 0
    %2788 = vmatpush1.bf16.msra.mxu0 0
    %2789 = vmatprep.subr.bf16.mxu0 0
    %2790 = vmatpush1.bf16.msra.mxu0 0
    %2791 = vmatprep.subr.bf16.mxu0 0
    %2792 = vmatpush1.bf16.msra.mxu0 0
    %2793 = vmatprep.subr.bf16.mxu0 0
    %2794 = vmatpush1.bf16.msra.mxu0 0
    %2795 = vmatprep.subr.bf16.mxu0 0
    %2796 = vmatpush1.bf16.msra.mxu0 0
    %2797 = vmatprep.subr.bf16.mxu0 0
    %2798 = vmatpush1.bf16.msra.mxu0 0
    %2799 = vmatprep.subr.bf16.mxu0 0
    %2800 = vmatpush1.bf16.msra.mxu0 0
    %2801 = vmatprep.subr.bf16.mxu0 0
    %2802 = vmatpush1.bf16.msra.mxu0 0
    %2803 = vmatprep.subr.bf16.mxu0 0
    %2804 = vmatpush1.bf16.msra.mxu0 0
    %2805 = vmatprep.subr.bf16.mxu0 0
    %2806 = vmatpush1.bf16.msra.mxu0 0
    %2807 = vmatprep.subr.bf16.mxu0 0
    %2808 = vmatpush1.bf16.msra.mxu0 0
    %2809 = vmatprep.subr.bf16.mxu0 0
    %2810 = vmatpush1.bf16.msra.mxu0 0
    %2811 = vmatprep.mubr.bf16.mxu0 0
    %2812 = vmatmul.mubr.bf16.gmra.mrb[0].mxu0 %v2326
    %v2813 = vpop.f32.mrb[0].mxu0
    %v2814 = vadd.f32 %v2773, %v2813
    %v2815 = vpop.f32.mrb[0].mxu0
    %v2816 = vadd.f32 %v2775, %v2815
    %v2817 = vpop.f32.mrb[0].mxu0
    %v2818 = vpop.f32.mrb[0].mxu0
    %2819 = vdwg.mxu0
    %2820 = vmatprep.subr.bf16.mxu0 0
    %2821 = vmatpush1.bf16.msra.mxu0 %v1644
    %2822 = vmatprep.subr.bf16.mxu0 0
    %2823 = vmatpush1.bf16.msra.mxu0 %v1651
    %2824 = vmatprep.subr.bf16.mxu0 0
    %2825 = vmatpush1.bf16.msra.mxu0 %v1658
    %2826 = vmatprep.subr.bf16.mxu0 0
    %2827 = vmatpush1.bf16.msra.mxu0 %v1665
    %2828 = vmatprep.subr.bf16.mxu0 0
    %2829 = vmatpush1.bf16.msra.mxu0 %v1672
    %2830 = vmatprep.subr.bf16.mxu0 0
    %2831 = vmatpush1.bf16.msra.mxu0 %v1679
    %2832 = vmatprep.subr.bf16.mxu0 0
    %2833 = vmatpush1.bf16.msra.mxu0 %v1686
    %2834 = vmatprep.subr.bf16.mxu0 0
    %2835 = vmatpush1.bf16.msra.mxu0 %v1693
    %2836 = vmatprep.subr.bf16.mxu0 0
    %2837 = vmatpush1.bf16.msra.mxu0 %v1700
    %2838 = vmatprep.subr.bf16.mxu0 0
    %2839 = vmatpush1.bf16.msra.mxu0 %v1707
    %2840 = vmatprep.subr.bf16.mxu0 0
    %2841 = vmatpush1.bf16.msra.mxu0 %v1714
    %2842 = vmatprep.subr.bf16.mxu0 0
    %2843 = vmatpush1.bf16.msra.mxu0 %v1721
    %2844 = vmatprep.subr.bf16.mxu0 0
    %2845 = vmatpush1.bf16.msra.mxu0 %v1728
    %2846 = vmatprep.subr.bf16.mxu0 0
    %2847 = vmatpush1.bf16.msra.mxu0 %v1735
    %2848 = vmatprep.subr.bf16.mxu0 0
    %2849 = vmatpush1.bf16.msra.mxu0 %v1742
    %2850 = vmatprep.subr.bf16.mxu0 0
    %2851 = vmatpush1.bf16.msra.mxu0 %v1749
    %2852 = vmatprep.mubr.bf16.mxu0 %v548
    %2853 = vmatmul.mubr.bf16.gmra.mrb[0].mxu0 %v547
    %v2854 = vpop.f32.mrb[0].mxu0
    %v2855 = vadd.f32 %v528, %v2854
    %v2856 = vpop.f32.mrb[0].mxu0
    %v2857 = vpop.f32.mrb[0].mxu0
    %v2858 = vpop.f32.mrb[0].mxu0
    %2859 = vdwg.mxu0
    %2860 = vmatprep.subr.bf16.mxu0 0
    %2861 = vmatpush1.bf16.msra.mxu0 %v1756
    %2862 = vmatprep.subr.bf16.mxu0 0
    %2863 = vmatpush1.bf16.msra.mxu0 %v1763
    %2864 = vmatprep.subr.bf16.mxu0 0
    %2865 = vmatpush1.bf16.msra.mxu0 %v1770
    %2866 = vmatprep.subr.bf16.mxu0 0
    %2867 = vmatpush1.bf16.msra.mxu0 %v1777
    %2868 = vmatprep.subr.bf16.mxu0 0
    %2869 = vmatpush1.bf16.msra.mxu0 %v1784
    %2870 = vmatprep.subr.bf16.mxu0 0
    %2871 = vmatpush1.bf16.msra.mxu0 %v1791
    %2872 = vmatprep.subr.bf16.mxu0 0
    %2873 = vmatpush1.bf16.msra.mxu0 %v1798
    %2874 = vmatprep.subr.bf16.mxu0 0
    %2875 = vmatpush1.bf16.msra.mxu0 %v1805
    %2876 = vmatprep.subr.bf16.mxu0 0
    %2877 = vmatpush1.bf16.msra.mxu0 %v1812
    %2878 = vmatprep.subr.bf16.mxu0 0
    %2879 = vmatpush1.bf16.msra.mxu0 %v1819
    %2880 = vmatprep.subr.bf16.mxu0 0
    %2881 = vmatpush1.bf16.msra.mxu0 %v1826
    %2882 = vmatprep.subr.bf16.mxu0 0
    %2883 = vmatpush1.bf16.msra.mxu0 %v1833
    %2884 = vmatprep.subr.bf16.mxu0 0
    %2885 = vmatpush1.bf16.msra.mxu0 %v1840
    %2886 = vmatprep.subr.bf16.mxu0 0
    %2887 = vmatpush1.bf16.msra.mxu0 %v1847
    %2888 = vmatprep.subr.bf16.mxu0 0
    %2889 = vmatpush1.bf16.msra.mxu0 %v1854
    %2890 = vmatprep.subr.bf16.mxu0 0
    %2891 = vmatpush1.bf16.msra.mxu0 %v1861
    %2892 = vmatprep.mubr.bf16.mxu0 %v550
    %2893 = vmatmul.mubr.bf16.gmra.mrb[0].mxu0 %v549
    %v2894 = vpop.f32.mrb[0].mxu0
    %v2895 = vadd.f32 %v2855, %v2894
    %v2896 = vpop.f32.mrb[0].mxu0
    %v2897 = vpop.f32.mrb[0].mxu0
    %v2898 = vpop.f32.mrb[0].mxu0
    %2899 = vdwg.mxu0
    %2900 = vmatprep.subr.bf16.mxu0 0
    %2901 = vmatpush1.bf16.msra.mxu0 %v1868
    %2902 = vmatprep.subr.bf16.mxu0 0
    %2903 = vmatpush1.bf16.msra.mxu0 %v1875
    %2904 = vmatprep.subr.bf16.mxu0 0
    %2905 = vmatpush1.bf16.msra.mxu0 %v1882
    %2906 = vmatprep.subr.bf16.mxu0 0
    %2907 = vmatpush1.bf16.msra.mxu0 %v1889
    %2908 = vmatprep.subr.bf16.mxu0 0
    %2909 = vmatpush1.bf16.msra.mxu0 %v1896
    %2910 = vmatprep.subr.bf16.mxu0 0
    %2911 = vmatpush1.bf16.msra.mxu0 %v1903
    %2912 = vmatprep.subr.bf16.mxu0 0
    %2913 = vmatpush1.bf16.msra.mxu0 %v1910
    %2914 = vmatprep.subr.bf16.mxu0 0
    %2915 = vmatpush1.bf16.msra.mxu0 %v1917
    %2916 = vmatprep.subr.bf16.mxu0 0
    %2917 = vmatpush1.bf16.msra.mxu0 %v1924
    %2918 = vmatprep.subr.bf16.mxu0 0
    %2919 = vmatpush1.bf16.msra.mxu0 %v1931
    %2920 = vmatprep.subr.bf16.mxu0 0
    %2921 = vmatpush1.bf16.msra.mxu0 %v1938
    %2922 = vmatprep.subr.bf16.mxu0 0
    %2923 = vmatpush1.bf16.msra.mxu0 %v1945
    %2924 = vmatprep.subr.bf16.mxu0 0
    %2925 = vmatpush1.bf16.msra.mxu0 %v1952
    %2926 = vmatprep.subr.bf16.mxu0 0
    %2927 = vmatpush1.bf16.msra.mxu0 %v1959
    %2928 = vmatprep.subr.bf16.mxu0 0
    %2929 = vmatpush1.bf16.msra.mxu0 %v1966
    %2930 = vmatprep.subr.bf16.mxu0 0
    %2931 = vmatpush1.bf16.msra.mxu0 %v1973
    %2932 = vmatprep.mubr.bf16.mxu0 %v552
    %2933 = vmatmul.mubr.bf16.gmra.mrb[0].mxu0 %v551
    %v2934 = vpop.f32.mrb[0].mxu0
    %v2935 = vadd.f32 %v2895, %v2934
    %v2936 = vpop.f32.mrb[0].mxu0
    %v2937 = vpop.f32.mrb[0].mxu0
    %v2938 = vpop.f32.mrb[0].mxu0
    %2939 = vdwg.mxu0
    %2940 = vmatprep.subr.bf16.mxu0 0
    %2941 = vmatpush1.bf16.msra.mxu0 %v1980
    %2942 = vmatprep.subr.bf16.mxu0 0
    %2943 = vmatpush1.bf16.msra.mxu0 0
    %2944 = vmatprep.subr.bf16.mxu0 0
    %2945 = vmatpush1.bf16.msra.mxu0 0
    %2946 = vmatprep.subr.bf16.mxu0 0
    %2947 = vmatpush1.bf16.msra.mxu0 0
    %2948 = vmatprep.subr.bf16.mxu0 0
    %2949 = vmatpush1.bf16.msra.mxu0 0
    %2950 = vmatprep.subr.bf16.mxu0 0
    %2951 = vmatpush1.bf16.msra.mxu0 0
    %2952 = vmatprep.subr.bf16.mxu0 0
    %2953 = vmatpush1.bf16.msra.mxu0 0
    %2954 = vmatprep.subr.bf16.mxu0 0
    %2955 = vmatpush1.bf16.msra.mxu0 0
    %2956 = vmatprep.subr.bf16.mxu0 0
    %2957 = vmatpush1.bf16.msra.mxu0 0
    %2958 = vmatprep.subr.bf16.mxu0 0
    %2959 = vmatpush1.bf16.msra.mxu0 0
    %2960 = vmatprep.subr.bf16.mxu0 0
    %2961 = vmatpush1.bf16.msra.mxu0 0
    %2962 = vmatprep.subr.bf16.mxu0 0
    %2963 = vmatpush1.bf16.msra.mxu0 0
    %2964 = vmatprep.subr.bf16.mxu0 0
    %2965 = vmatpush1.bf16.msra.mxu0 0
    %2966 = vmatprep.subr.bf16.mxu0 0
    %2967 = vmatpush1.bf16.msra.mxu0 0
    %2968 = vmatprep.subr.bf16.mxu0 0
    %2969 = vmatpush1.bf16.msra.mxu0 0
    %2970 = vmatprep.subr.bf16.mxu0 0
    %2971 = vmatpush1.bf16.msra.mxu0 0
    %2972 = vmatprep.mubr.bf16.mxu0 0
    %2973 = vmatmul.mubr.bf16.gmra.mrb[0].mxu0 %v2326
    %v2974 = vpop.f32.mrb[0].mxu0
    %v2975 = vadd.f32 %v2935, %v2974
    %v2976 = vpop.f32.mrb[0].mxu0
    %v2977 = vpop.f32.mrb[0].mxu0
    %v2978 = vpop.f32.mrb[0].mxu0
    %2979 = vdwg.mxu0
    %v2980 = vmax.f32 %v2486, 0.0
    %v2981 = vmax.f32 %v2488, 0.0
    %v2982 = vmax.f32 %v2650, 0.0
    %v2983 = vmax.f32 %v2652, 0.0
    %v2984 = vmax.f32 %v2814, 0.0
    %v2985 = vmax.f32 %v2816, 0.0
    %v2986 = vmax.f32 %v2975, 0.0
    %v2987 = vpack.c.bf16 %v2980, %v2980
    %v2988 = vpack.c.bf16 %v2981, %v2981
    %v2989 = vpack.c.bf16 %v2982, %v2982
    %v2990 = vpack.c.bf16 %v2983, %v2983
    %v2991 = vpack.c.bf16 %v2984, %v2984
    %v2992 = vpack.c.bf16 %v2985, %v2985
    %v2993 = vpack.c.bf16 %v2986, %v2986
    %v2994 = vld [vmem:[#allocation6] sm:$0xff]
    %v2995 = vld [vmem:[#allocation6 + $0x8] sm:$0xff]
    %v2996 = vld [vmem:[#allocation6 + $0x10] sm:$0xff]
    %v2997 = vld [vmem:[#allocation6 + $0x18] sm:$0xf]
    %v2998 = vld [vmem:[#allocation6 + $0x1c] sm:$0xff]
    %v2999 = vld [vmem:[#allocation6 + $0x24] sm:$0xff]
    %v3000 = vld [vmem:[#allocation6 + $0x2c] sm:$0xff]
    %v3001 = vld [vmem:[#allocation6 + $0x34] sm:$0xf]
    %v3002 = vld [vmem:[#allocation6 + $0x38] sm:$0xff]
    %v3003 = vld [vmem:[#allocation6 + $0x40] sm:$0xff]
    %v3004 = vld [vmem:[#allocation6 + $0x48] sm:$0xff]
    %v3005 = vld [vmem:[#allocation6 + $0x50] sm:$0xf]
    %v3006 = vld [vmem:[#allocation6 + $0x54] sm:$0xff]
    %v3007 = vld [vmem:[#allocation6 + $0x5c] sm:$0xff]
    %v3008 = vld [vmem:[#allocation6 + $0x64] sm:$0xff]
    %v3009 = vld [vmem:[#allocation6 + $0x6c] sm:$0xf]
    %v3010 = vld [vmem:[#allocation6 + $0x70] sm:$0xff]
    %v3011 = vld [vmem:[#allocation6 + $0x78] sm:$0xff]
    %v3012 = vld [vmem:[#allocation6 + $0x80] sm:$0xff]
    %v3013 = vld [vmem:[#allocation6 + $0x88] sm:$0xf]
    %v3014 = vld [vmem:[#allocation6 + $0x8c] sm:$0xff]
    %v3015 = vld [vmem:[#allocation6 + $0x94] sm:$0xff]
    %v3016 = vld [vmem:[#allocation6 + $0x9c] sm:$0xff]
    %v3017 = vld [vmem:[#allocation6 + $0xa4] sm:$0xf]
    %v3018 = vld [vmem:[#allocation6 + $0xa8] sm:$0xff]
    %v3019 = vld [vmem:[#allocation6 + $0xb0] sm:$0xff]
    %v3020 = vld [vmem:[#allocation6 + $0xb8] sm:$0xff]
    %v3021 = vld [vmem:[#allocation6 + $0xc0] sm:$0xf]
    %v3022 = vld [vmem:[#allocation6 + $0xc4] sm:$0xff]
    %v3023 = vld [vmem:[#allocation6 + $0xcc] sm:$0xff]
    %v3024 = vld [vmem:[#allocation6 + $0xd4] sm:$0xff]
    %v3025 = vld [vmem:[#allocation6 + $0xdc] sm:$0xf]
    %v3026 = vld [vmem:[#allocation6 + $0xe0] sm:$0xff]
    %v3027 = vld [vmem:[#allocation6 + $0xe8] sm:$0xff]
    %v3028 = vld [vmem:[#allocation6 + $0xf0] sm:$0xff]
    %v3029 = vld [vmem:[#allocation6 + $0xf8] sm:$0xf]
    %v3030 = vld [vmem:[#allocation6 + $0xfc] sm:$0xff]
    %v3031 = vld [vmem:[#allocation6 + $0x104] sm:$0xff]
    %v3032 = vld [vmem:[#allocation6 + $0x10c] sm:$0xff]
    %v3033 = vld [vmem:[#allocation6 + $0x114] sm:$0xf]
    %v3034 = vld [vmem:[#allocation6 + $0x118] sm:$0xff]
    %v3035 = vld [vmem:[#allocation6 + $0x120] sm:$0xff]
    %v3036 = vld [vmem:[#allocation6 + $0x128] sm:$0xff]
    %v3037 = vld [vmem:[#allocation6 + $0x130] sm:$0xf]
    %v3038 = vld [vmem:[#allocation6 + $0x134] sm:$0xff]
    %v3039 = vld [vmem:[#allocation6 + $0x13c] sm:$0xff]
    %v3040 = vld [vmem:[#allocation6 + $0x144] sm:$0xff]
    %v3041 = vld [vmem:[#allocation6 + $0x14c] sm:$0xf]
    %v3042 = vld [vmem:[#allocation6 + $0x150] sm:$0xff]
    %v3043 = vld [vmem:[#allocation6 + $0x158] sm:$0xff]
    %v3044 = vld [vmem:[#allocation6 + $0x160] sm:$0xff]
    %v3045 = vld [vmem:[#allocation6 + $0x168] sm:$0xf]
    %v3046 = vld [vmem:[#allocation6 + $0x16c] sm:$0xff]
    %v3047 = vld [vmem:[#allocation6 + $0x174] sm:$0xff]
    %v3048 = vld [vmem:[#allocation6 + $0x17c] sm:$0xff]
    %v3049 = vld [vmem:[#allocation6 + $0x184] sm:$0xf]
    %v3050 = vld [vmem:[#allocation6 + $0x188] sm:$0xff]
    %v3051 = vld [vmem:[#allocation6 + $0x190] sm:$0xff]
    %v3052 = vld [vmem:[#allocation6 + $0x198] sm:$0xff]
    %v3053 = vld [vmem:[#allocation6 + $0x1a0] sm:$0xf]
    %v3054 = vld [vmem:[#allocation6 + $0x1a4] sm:$0xff]
    %v3055 = vld [vmem:[#allocation6 + $0x1ac] sm:$0xff]
    %v3056 = vld [vmem:[#allocation6 + $0x1b4] sm:$0xff]
    %v3057 = vld [vmem:[#allocation6 + $0x1bc] sm:$0xf]
    %v3058 = vld [vmem:[#allocation6 + $0x1c0] sm:$0xff]
    %v3059 = vld [vmem:[#allocation6 + $0x1c8] sm:$0xff]
    %v3060 = vld [vmem:[#allocation6 + $0x1d0] sm:$0xff]
    %v3061 = vld [vmem:[#allocation6 + $0x1d8] sm:$0xf]
    %v3062 = vld [vmem:[#allocation6 + $0x1dc] sm:$0xff]
    %v3063 = vld [vmem:[#allocation6 + $0x1e4] sm:$0xff]
    %v3064 = vld [vmem:[#allocation6 + $0x1ec] sm:$0xff]
    %v3065 = vld [vmem:[#allocation6 + $0x1f4] sm:$0xf]
    %v3066 = vld [vmem:[#allocation6 + $0x1f8] sm:$0xff]
    %v3067 = vld [vmem:[#allocation6 + $0x200] sm:$0xff]
    %v3068 = vld [vmem:[#allocation6 + $0x208] sm:$0xff]
    %v3069 = vld [vmem:[#allocation6 + $0x210] sm:$0xf]
    %v3070 = vld [vmem:[#allocation6 + $0x214] sm:$0xff]
    %v3071 = vld [vmem:[#allocation6 + $0x21c] sm:$0xff]
    %v3072 = vld [vmem:[#allocation6 + $0x224] sm:$0xff]
    %v3073 = vld [vmem:[#allocation6 + $0x22c] sm:$0xf]
    %v3074 = vld [vmem:[#allocation6 + $0x230] sm:$0xff]
    %v3075 = vld [vmem:[#allocation6 + $0x238] sm:$0xff]
    %v3076 = vld [vmem:[#allocation6 + $0x240] sm:$0xff]
    %v3077 = vld [vmem:[#allocation6 + $0x248] sm:$0xf]
    %v3078 = vld [vmem:[#allocation6 + $0x24c] sm:$0xff]
    %v3079 = vld [vmem:[#allocation6 + $0x254] sm:$0xff]
    %v3080 = vld [vmem:[#allocation6 + $0x25c] sm:$0xff]
    %v3081 = vld [vmem:[#allocation6 + $0x264] sm:$0xf]
    %v3082 = vld [vmem:[#allocation6 + $0x268] sm:$0xff]
    %v3083 = vld [vmem:[#allocation6 + $0x270] sm:$0xff]
    %v3084 = vld [vmem:[#allocation6 + $0x278] sm:$0xff]
    %v3085 = vld [vmem:[#allocation6 + $0x280] sm:$0xf]
    %v3086 = vld [vmem:[#allocation6 + $0x284] sm:$0xff]
    %v3087 = vld [vmem:[#allocation6 + $0x28c] sm:$0xff]
    %v3088 = vld [vmem:[#allocation6 + $0x294] sm:$0xff]
    %v3089 = vld [vmem:[#allocation6 + $0x29c] sm:$0xf]
    %v3090 = vld [vmem:[#allocation6 + $0x2a0] sm:$0xff]
    %v3091 = vld [vmem:[#allocation6 + $0x2a8] sm:$0xff]
    %v3092 = vld [vmem:[#allocation6 + $0x2b0] sm:$0xff]
    %v3093 = vld [vmem:[#allocation6 + $0x2b8] sm:$0xf]
    %v3094 = vld [vmem:[#allocation6 + $0x2bc] sm:$0xff]
    %v3095 = vld [vmem:[#allocation6 + $0x2c4] sm:$0xff]
    %v3096 = vld [vmem:[#allocation6 + $0x2cc] sm:$0xff]
    %v3097 = vld [vmem:[#allocation6 + $0x2d4] sm:$0xf]
    %v3098 = vld [vmem:[#allocation6 + $0x2d8] sm:$0xff]
    %v3099 = vld [vmem:[#allocation6 + $0x2e0] sm:$0xff]
    %v3100 = vld [vmem:[#allocation6 + $0x2e8] sm:$0xff]
    %v3101 = vld [vmem:[#allocation6 + $0x2f0] sm:$0xf]
    %v3102 = vld [vmem:[#allocation6 + $0x2f4] sm:$0xff]
    %v3103 = vld [vmem:[#allocation6 + $0x2fc] sm:$0xff]
    %v3104 = vld [vmem:[#allocation6 + $0x304] sm:$0xff]
    %v3105 = vld [vmem:[#allocation6 + $0x30c] sm:$0xf]
    %v3106 = vld [vmem:[#allocation6 + $0x310] sm:$0xff]
    %v3107 = vld [vmem:[#allocation6 + $0x318] sm:$0xff]
    %v3108 = vld [vmem:[#allocation6 + $0x320] sm:$0xff]
    %v3109 = vld [vmem:[#allocation6 + $0x328] sm:$0xf]
    %v3110 = vld [vmem:[#allocation6 + $0x32c] sm:$0xff]
    %v3111 = vld [vmem:[#allocation6 + $0x334] sm:$0xff]
    %v3112 = vld [vmem:[#allocation6 + $0x33c] sm:$0xff]
    %v3113 = vld [vmem:[#allocation6 + $0x344] sm:$0xf]
    %v3114 = vld [vmem:[#allocation6 + $0x348] sm:$0xff]
    %v3115 = vld [vmem:[#allocation6 + $0x350] sm:$0xff]
    %v3116 = vld [vmem:[#allocation6 + $0x358] sm:$0xff]
    %v3117 = vld [vmem:[#allocation6 + $0x360] sm:$0xf]
    %v3118 = vld [vmem:[#allocation6 + $0x364] sm:$0xff]
    %v3119 = vld [vmem:[#allocation6 + $0x36c] sm:$0xff]
    %v3120 = vld [vmem:[#allocation6 + $0x374] sm:$0xff]
    %v3121 = vld [vmem:[#allocation6 + $0x37c] sm:$0xf]
    %v3122 = vld [vmem:[#allocation6 + $0x380] sm:$0xff]
    %v3123 = vld [vmem:[#allocation6 + $0x388] sm:$0xff]
    %v3124 = vld [vmem:[#allocation6 + $0x390] sm:$0xff]
    %v3125 = vld [vmem:[#allocation6 + $0x398] sm:$0xf]
    %v3126 = vld [vmem:[#allocation6 + $0x39c] sm:$0xff]
    %v3127 = vld [vmem:[#allocation6 + $0x3a4] sm:$0xff]
    %v3128 = vld [vmem:[#allocation6 + $0x3ac] sm:$0xff]
    %v3129 = vld [vmem:[#allocation6 + $0x3b4] sm:$0xf]
    %v3130 = vld [vmem:[#allocation6 + $0x3b8] sm:$0xff]
    %v3131 = vld [vmem:[#allocation6 + $0x3c0] sm:$0xff]
    %v3132 = vld [vmem:[#allocation6 + $0x3c8] sm:$0xff]
    %v3133 = vld [vmem:[#allocation6 + $0x3d0] sm:$0xf]
    %v3134 = vld [vmem:[#allocation6 + $0x3d4] sm:$0xff]
    %v3135 = vld [vmem:[#allocation6 + $0x3dc] sm:$0xff]
    %v3136 = vld [vmem:[#allocation6 + $0x3e4] sm:$0xff]
    %v3137 = vld [vmem:[#allocation6 + $0x3ec] sm:$0xf]
    %v3138 = vld [vmem:[#allocation6 + $0x3f0] sm:$0xff]
    %v3139 = vld [vmem:[#allocation6 + $0x3f8] sm:$0xff]
    %v3140 = vld [vmem:[#allocation6 + $0x400] sm:$0xff]
    %v3141 = vld [vmem:[#allocation6 + $0x408] sm:$0xf]
    %v3142 = vld [vmem:[#allocation6 + $0x40c] sm:$0xff]
    %v3143 = vld [vmem:[#allocation6 + $0x414] sm:$0xff]
    %v3144 = vld [vmem:[#allocation6 + $0x41c] sm:$0xff]
    %v3145 = vld [vmem:[#allocation6 + $0x424] sm:$0xf]
    %v3146 = vld [vmem:[#allocation6 + $0x428] sm:$0xff]
    %v3147 = vld [vmem:[#allocation6 + $0x430] sm:$0xff]
    %v3148 = vld [vmem:[#allocation6 + $0x438] sm:$0xff]
    %v3149 = vld [vmem:[#allocation6 + $0x440] sm:$0xf]
    %v3150 = vld [vmem:[#allocation6 + $0x444] sm:$0xff]
    %v3151 = vld [vmem:[#allocation6 + $0x44c] sm:$0xff]
    %v3152 = vld [vmem:[#allocation6 + $0x454] sm:$0xff]
    %v3153 = vld [vmem:[#allocation6 + $0x45c] sm:$0xf]
    %v3154 = vld [vmem:[#allocation6 + $0x460] sm:$0xff]
    %v3155 = vld [vmem:[#allocation6 + $0x468] sm:$0xff]
    %v3156 = vld [vmem:[#allocation6 + $0x470] sm:$0xff]
    %v3157 = vld [vmem:[#allocation6 + $0x478] sm:$0xf]
    %v3158 = vld [vmem:[#allocation6 + $0x47c] sm:$0xff]
    %v3159 = vld [vmem:[#allocation6 + $0x484] sm:$0xff]
    %v3160 = vld [vmem:[#allocation6 + $0x48c] sm:$0xff]
    %v3161 = vld [vmem:[#allocation6 + $0x494] sm:$0xf]
    %v3162 = vld [vmem:[#allocation6 + $0x498] sm:$0xff]
    %v3163 = vld [vmem:[#allocation6 + $0x4a0] sm:$0xff]
    %v3164 = vld [vmem:[#allocation6 + $0x4a8] sm:$0xff]
    %v3165 = vld [vmem:[#allocation6 + $0x4b0] sm:$0xf]
    %v3166 = vld [vmem:[#allocation6 + $0x4b4] sm:$0xff]
    %v3167 = vld [vmem:[#allocation6 + $0x4bc] sm:$0xff]
    %v3168 = vld [vmem:[#allocation6 + $0x4c4] sm:$0xff]
    %v3169 = vld [vmem:[#allocation6 + $0x4cc] sm:$0xf]
    %v3170 = vld [vmem:[#allocation6 + $0x4d0] sm:$0xff]
    %v3171 = vld [vmem:[#allocation6 + $0x4d8] sm:$0xff]
    %v3172 = vld [vmem:[#allocation6 + $0x4e0] sm:$0xff]
    %v3173 = vld [vmem:[#allocation6 + $0x4e8] sm:$0xf]
    %v3174 = vld [vmem:[#allocation6 + $0x4ec] sm:$0xff]
    %v3175 = vld [vmem:[#allocation6 + $0x4f4] sm:$0xff]
    %v3176 = vld [vmem:[#allocation6 + $0x4fc] sm:$0xff]
    %v3177 = vld [vmem:[#allocation6 + $0x504] sm:$0xf]
    %v3178 = vld [vmem:[#allocation6 + $0x508] sm:$0xff]
    %v3179 = vld [vmem:[#allocation6 + $0x510] sm:$0xff]
    %v3180 = vld [vmem:[#allocation6 + $0x518] sm:$0xff]
    %v3181 = vld [vmem:[#allocation6 + $0x520] sm:$0xf]
    %v3182 = vld [vmem:[#allocation6 + $0x524] sm:$0xff]
    %v3183 = vld [vmem:[#allocation6 + $0x52c] sm:$0xff]
    %v3184 = vld [vmem:[#allocation6 + $0x534] sm:$0xff]
    %v3185 = vld [vmem:[#allocation6 + $0x53c] sm:$0xf]
    %v3186 = vld [vmem:[#allocation6 + $0x540] sm:$0xff]
    %v3187 = vld [vmem:[#allocation6 + $0x548] sm:$0xff]
    %v3188 = vld [vmem:[#allocation6 + $0x550] sm:$0xff]
    %v3189 = vld [vmem:[#allocation6 + $0x558] sm:$0xf]
    %v3190 = vld [vmem:[#allocation6 + $0x55c] sm:$0xff]
    %v3191 = vld [vmem:[#allocation6 + $0x564] sm:$0xff]
    %v3192 = vld [vmem:[#allocation6 + $0x56c] sm:$0xff]
    %v3193 = vld [vmem:[#allocation6 + $0x574] sm:$0xf]
    %v3194 = vld [vmem:[#allocation6 + $0x578] sm:$0xff]
    %v3195 = vld [vmem:[#allocation6 + $0x580] sm:$0xff]
    %v3196 = vld [vmem:[#allocation6 + $0x588] sm:$0xff]
    %v3197 = vld [vmem:[#allocation6 + $0x590] sm:$0xf]
    %v3198 = vld [vmem:[#allocation6 + $0x594] sm:$0xff]
    %v3199 = vld [vmem:[#allocation6 + $0x59c] sm:$0xff]
    %v3200 = vld [vmem:[#allocation6 + $0x5a4] sm:$0xff]
    %v3201 = vld [vmem:[#allocation6 + $0x5ac] sm:$0xf]
    %v3202 = vld [vmem:[#allocation6 + $0x5b0] sm:$0xff]
    %v3203 = vld [vmem:[#allocation6 + $0x5b8] sm:$0xff]
    %v3204 = vld [vmem:[#allocation6 + $0x5c0] sm:$0xff]
    %v3205 = vld [vmem:[#allocation6 + $0x5c8] sm:$0xf]
    %v3206 = vld [vmem:[#allocation6 + $0x5cc] sm:$0xff]
    %v3207 = vld [vmem:[#allocation6 + $0x5d4] sm:$0xff]
    %v3208 = vld [vmem:[#allocation6 + $0x5dc] sm:$0xff]
    %v3209 = vld [vmem:[#allocation6 + $0x5e4] sm:$0xf]
    %v3210 = vld [vmem:[#allocation6 + $0x5e8] sm:$0xff]
    %v3211 = vld [vmem:[#allocation6 + $0x5f0] sm:$0xff]
    %v3212 = vld [vmem:[#allocation6 + $0x5f8] sm:$0xff]
    %v3213 = vld [vmem:[#allocation6 + $0x600] sm:$0xf]
    %v3214 = vld [vmem:[#allocation6 + $0x604] sm:$0xff]
    %v3215 = vld [vmem:[#allocation6 + $0x60c] sm:$0xff]
    %v3216 = vld [vmem:[#allocation6 + $0x614] sm:$0xff]
    %v3217 = vld [vmem:[#allocation6 + $0x61c] sm:$0xf]
    %v3218 = vld [vmem:[#allocation6 + $0x620] sm:$0xff]
    %v3219 = vld [vmem:[#allocation6 + $0x628] sm:$0xff]
    %v3220 = vld [vmem:[#allocation6 + $0x630] sm:$0xff]
    %v3221 = vld [vmem:[#allocation6 + $0x638] sm:$0xf]
    %v3222 = vld [vmem:[#allocation6 + $0x63c] sm:$0xff]
    %v3223 = vld [vmem:[#allocation6 + $0x644] sm:$0xff]
    %v3224 = vld [vmem:[#allocation6 + $0x64c] sm:$0xff]
    %v3225 = vld [vmem:[#allocation6 + $0x654] sm:$0xf]
    %v3226 = vld [vmem:[#allocation6 + $0x658] sm:$0xff]
    %v3227 = vld [vmem:[#allocation6 + $0x660] sm:$0xff]
    %v3228 = vld [vmem:[#allocation6 + $0x668] sm:$0xff]
    %v3229 = vld [vmem:[#allocation6 + $0x670] sm:$0xf]
    %v3230 = vld [vmem:[#allocation6 + $0x674] sm:$0xff]
    %v3231 = vld [vmem:[#allocation6 + $0x67c] sm:$0xff]
    %v3232 = vld [vmem:[#allocation6 + $0x684] sm:$0xff]
    %v3233 = vld [vmem:[#allocation6 + $0x68c] sm:$0xf]
    %v3234 = vld [vmem:[#allocation6 + $0x690] sm:$0xff]
    %v3235 = vld [vmem:[#allocation6 + $0x698] sm:$0xff]
    %v3236 = vld [vmem:[#allocation6 + $0x6a0] sm:$0xff]
    %v3237 = vld [vmem:[#allocation6 + $0x6a8] sm:$0xf]
    %v3238 = vld [vmem:[#allocation6 + $0x6ac] sm:$0xff]
    %v3239 = vld [vmem:[#allocation6 + $0x6b4] sm:$0xff]
    %v3240 = vld [vmem:[#allocation6 + $0x6bc] sm:$0xff]
    %v3241 = vld [vmem:[#allocation6 + $0x6c4] sm:$0xf]
    %v3242 = vld [vmem:[#allocation6 + $0x6c8] sm:$0xff]
    %v3243 = vld [vmem:[#allocation6 + $0x6d0] sm:$0xff]
    %v3244 = vld [vmem:[#allocation6 + $0x6d8] sm:$0xff]
    %v3245 = vld [vmem:[#allocation6 + $0x6e0] sm:$0xf]
    %v3246 = vld [vmem:[#allocation6 + $0x6e4] sm:$0xff]
    %v3247 = vld [vmem:[#allocation6 + $0x6ec] sm:$0xff]
    %v3248 = vld [vmem:[#allocation6 + $0x6f4] sm:$0xff]
    %v3249 = vld [vmem:[#allocation6 + $0x6fc] sm:$0xf]
    %v3250 = vld [vmem:[#allocation6 + $0x700] sm:$0xff]
    %v3251 = vld [vmem:[#allocation6 + $0x708] sm:$0xff]
    %v3252 = vld [vmem:[#allocation6 + $0x710] sm:$0xff]
    %v3253 = vld [vmem:[#allocation6 + $0x718] sm:$0xf]
    %v3254 = vld [vmem:[#allocation6 + $0x71c] sm:$0xff]
    %v3255 = vld [vmem:[#allocation6 + $0x724] sm:$0xff]
    %v3256 = vld [vmem:[#allocation6 + $0x72c] sm:$0xff]
    %v3257 = vld [vmem:[#allocation6 + $0x734] sm:$0xf]
    %v3258 = vld [vmem:[#allocation6 + $0x738] sm:$0xff]
    %v3259 = vld [vmem:[#allocation6 + $0x740] sm:$0xff]
    %v3260 = vld [vmem:[#allocation6 + $0x748] sm:$0xff]
    %v3261 = vld [vmem:[#allocation6 + $0x750] sm:$0xf]
    %v3262 = vld [vmem:[#allocation6 + $0x754] sm:$0xff]
    %v3263 = vld [vmem:[#allocation6 + $0x75c] sm:$0xff]
    %v3264 = vld [vmem:[#allocation6 + $0x764] sm:$0xff]
    %v3265 = vld [vmem:[#allocation6 + $0x76c] sm:$0xf]
    %v3266 = vld [vmem:[#allocation6 + $0x770] sm:$0xff]
    %v3267 = vld [vmem:[#allocation6 + $0x778] sm:$0xff]
    %v3268 = vld [vmem:[#allocation6 + $0x780] sm:$0xff]
    %v3269 = vld [vmem:[#allocation6 + $0x788] sm:$0xf]
    %v3270 = vld [vmem:[#allocation6 + $0x78c] sm:$0xff]
    %v3271 = vld [vmem:[#allocation6 + $0x794] sm:$0xff]
    %v3272 = vld [vmem:[#allocation6 + $0x79c] sm:$0xff]
    %v3273 = vld [vmem:[#allocation6 + $0x7a4] sm:$0xf]
    %v3274 = vld [vmem:[#allocation6 + $0x7a8] sm:$0xff]
    %v3275 = vld [vmem:[#allocation6 + $0x7b0] sm:$0xff]
    %v3276 = vld [vmem:[#allocation6 + $0x7b8] sm:$0xff]
    %v3277 = vld [vmem:[#allocation6 + $0x7c0] sm:$0xf]
    %v3278 = vld [vmem:[#allocation6 + $0x7c4] sm:$0xff]
    %v3279 = vld [vmem:[#allocation6 + $0x7cc] sm:$0xff]
    %v3280 = vld [vmem:[#allocation6 + $0x7d4] sm:$0xff]
    %v3281 = vld [vmem:[#allocation6 + $0x7dc] sm:$0xf]
    %v3282 = vld [vmem:[#allocation6 + $0x7e0] sm:$0xff]
    %v3283 = vld [vmem:[#allocation6 + $0x7e8] sm:$0xff]
    %v3284 = vld [vmem:[#allocation6 + $0x7f0] sm:$0xff]
    %v3285 = vld [vmem:[#allocation6 + $0x7f8] sm:$0xf]
    %v3286 = vld [vmem:[#allocation6 + $0x7fc] sm:$0xff]
    %v3287 = vld [vmem:[#allocation6 + $0x804] sm:$0xff]
    %v3288 = vld [vmem:[#allocation6 + $0x80c] sm:$0xff]
    %v3289 = vld [vmem:[#allocation6 + $0x814] sm:$0xf]
    %v3290 = vld [vmem:[#allocation6 + $0x818] sm:$0xff]
    %v3291 = vld [vmem:[#allocation6 + $0x820] sm:$0xff]
    %v3292 = vld [vmem:[#allocation6 + $0x828] sm:$0xff]
    %v3293 = vld [vmem:[#allocation6 + $0x830] sm:$0xf]
    %v3294 = vld [vmem:[#allocation6 + $0x834] sm:$0xff]
    %v3295 = vld [vmem:[#allocation6 + $0x83c] sm:$0xff]
    %v3296 = vld [vmem:[#allocation6 + $0x844] sm:$0xff]
    %v3297 = vld [vmem:[#allocation6 + $0x84c] sm:$0xf]
    %v3298 = vld [vmem:[#allocation6 + $0x850] sm:$0xff]
    %v3299 = vld [vmem:[#allocation6 + $0x858] sm:$0xff]
    %v3300 = vld [vmem:[#allocation6 + $0x860] sm:$0xff]
    %v3301 = vld [vmem:[#allocation6 + $0x868] sm:$0xf]
    %v3302 = vld [vmem:[#allocation6 + $0x86c] sm:$0xff]
    %v3303 = vld [vmem:[#allocation6 + $0x874] sm:$0xff]
    %v3304 = vld [vmem:[#allocation6 + $0x87c] sm:$0xff]
    %v3305 = vld [vmem:[#allocation6 + $0x884] sm:$0xf]
    %v3306 = vld [vmem:[#allocation6 + $0x888] sm:$0xff]
    %v3307 = vld [vmem:[#allocation6 + $0x890] sm:$0xff]
    %v3308 = vld [vmem:[#allocation6 + $0x898] sm:$0xff]
    %v3309 = vld [vmem:[#allocation6 + $0x8a0] sm:$0xf]
    %v3310 = vld [vmem:[#allocation6 + $0x8a4] sm:$0xff]
    %v3311 = vld [vmem:[#allocation6 + $0x8ac] sm:$0xff]
    %v3312 = vld [vmem:[#allocation6 + $0x8b4] sm:$0xff]
    %v3313 = vld [vmem:[#allocation6 + $0x8bc] sm:$0xf]
    %v3314 = vld [vmem:[#allocation6 + $0x8c0] sm:$0xff]
    %v3315 = vld [vmem:[#allocation6 + $0x8c8] sm:$0xff]
    %v3316 = vld [vmem:[#allocation6 + $0x8d0] sm:$0xff]
    %v3317 = vld [vmem:[#allocation6 + $0x8d8] sm:$0xf]
    %v3318 = vld [vmem:[#allocation6 + $0x8dc] sm:$0xff]
    %v3319 = vld [vmem:[#allocation6 + $0x8e4] sm:$0xff]
    %v3320 = vld [vmem:[#allocation6 + $0x8ec] sm:$0xff]
    %v3321 = vld [vmem:[#allocation6 + $0x8f4] sm:$0xf]
    %v3322 = vld [vmem:[#allocation6 + $0x8f8] sm:$0xff]
    %v3323 = vld [vmem:[#allocation6 + $0x900] sm:$0xff]
    %v3324 = vld [vmem:[#allocation6 + $0x908] sm:$0xff]
    %v3325 = vld [vmem:[#allocation6 + $0x910] sm:$0xf]
    %v3326 = vld [vmem:[#allocation6 + $0x914] sm:$0xff]
    %v3327 = vld [vmem:[#allocation6 + $0x91c] sm:$0xff]
    %v3328 = vld [vmem:[#allocation6 + $0x924] sm:$0xff]
    %v3329 = vld [vmem:[#allocation6 + $0x92c] sm:$0xf]
    %v3330 = vld [vmem:[#allocation6 + $0x930] sm:$0xff]
    %v3331 = vld [vmem:[#allocation6 + $0x938] sm:$0xff]
    %v3332 = vld [vmem:[#allocation6 + $0x940] sm:$0xff]
    %v3333 = vld [vmem:[#allocation6 + $0x948] sm:$0xf]
    %v3334 = vld [vmem:[#allocation6 + $0x94c] sm:$0xff]
    %v3335 = vld [vmem:[#allocation6 + $0x954] sm:$0xff]
    %v3336 = vld [vmem:[#allocation6 + $0x95c] sm:$0xff]
    %v3337 = vld [vmem:[#allocation6 + $0x964] sm:$0xf]
    %v3338 = vld [vmem:[#allocation6 + $0x968] sm:$0xff]
    %v3339 = vld [vmem:[#allocation6 + $0x970] sm:$0xff]
    %v3340 = vld [vmem:[#allocation6 + $0x978] sm:$0xff]
    %v3341 = vld [vmem:[#allocation6 + $0x980] sm:$0xf]
    %v3342 = vld [vmem:[#allocation6 + $0x984] sm:$0xff]
    %v3343 = vld [vmem:[#allocation6 + $0x98c] sm:$0xff]
    %v3344 = vld [vmem:[#allocation6 + $0x994] sm:$0xff]
    %v3345 = vld [vmem:[#allocation6 + $0x99c] sm:$0xf]
    %v3346 = vld [vmem:[#allocation6 + $0x9a0] sm:$0xff]
    %v3347 = vld [vmem:[#allocation6 + $0x9a8] sm:$0xff]
    %v3348 = vld [vmem:[#allocation6 + $0x9b0] sm:$0xff]
    %v3349 = vld [vmem:[#allocation6 + $0x9b8] sm:$0xf]
    %v3350 = vld [vmem:[#allocation6 + $0x9bc] sm:$0xff]
    %v3351 = vld [vmem:[#allocation6 + $0x9c4] sm:$0xff]
    %v3352 = vld [vmem:[#allocation6 + $0x9cc] sm:$0xff]
    %v3353 = vld [vmem:[#allocation6 + $0x9d4] sm:$0xf]
    %v3354 = vld [vmem:[#allocation6 + $0x9d8] sm:$0xff]
    %v3355 = vld [vmem:[#allocation6 + $0x9e0] sm:$0xff]
    %v3356 = vld [vmem:[#allocation6 + $0x9e8] sm:$0xff]
    %v3357 = vld [vmem:[#allocation6 + $0x9f0] sm:$0xf]
    %v3358 = vld [vmem:[#allocation6 + $0x9f4] sm:$0xff]
    %v3359 = vld [vmem:[#allocation6 + $0x9fc] sm:$0xff]
    %v3360 = vld [vmem:[#allocation6 + $0xa04] sm:$0xff]
    %v3361 = vld [vmem:[#allocation6 + $0xa0c] sm:$0xf]
    %v3362 = vld [vmem:[#allocation6 + $0xa10] sm:$0xff]
    %v3363 = vld [vmem:[#allocation6 + $0xa18] sm:$0xff]
    %v3364 = vld [vmem:[#allocation6 + $0xa20] sm:$0xff]
    %v3365 = vld [vmem:[#allocation6 + $0xa28] sm:$0xf]
    %v3366 = vld [vmem:[#allocation6 + $0xa2c] sm:$0xff]
    %v3367 = vld [vmem:[#allocation6 + $0xa34] sm:$0xff]
    %v3368 = vld [vmem:[#allocation6 + $0xa3c] sm:$0xff]
    %v3369 = vld [vmem:[#allocation6 + $0xa44] sm:$0xf]
    %v3370 = vld [vmem:[#allocation6 + $0xa48] sm:$0xff]
    %v3371 = vld [vmem:[#allocation6 + $0xa50] sm:$0xff]
    %v3372 = vld [vmem:[#allocation6 + $0xa58] sm:$0xff]
    %v3373 = vld [vmem:[#allocation6 + $0xa60] sm:$0xf]
    %v3374 = vld [vmem:[#allocation6 + $0xa64] sm:$0xff]
    %v3375 = vld [vmem:[#allocation6 + $0xa6c] sm:$0xff]
    %v3376 = vld [vmem:[#allocation6 + $0xa74] sm:$0xff]
    %v3377 = vld [vmem:[#allocation6 + $0xa7c] sm:$0xf]
    %v3378 = vld [vmem:[#allocation6 + $0xa80] sm:$0xff]
    %v3379 = vld [vmem:[#allocation6 + $0xa88] sm:$0xff]
    %v3380 = vld [vmem:[#allocation6 + $0xa90] sm:$0xff]
    %v3381 = vld [vmem:[#allocation6 + $0xa98] sm:$0xf]
    %v3382 = vld [vmem:[#allocation6 + $0xa9c] sm:$0xff]
    %v3383 = vld [vmem:[#allocation6 + $0xaa4] sm:$0xff]
    %v3384 = vld [vmem:[#allocation6 + $0xaac] sm:$0xff]
    %v3385 = vld [vmem:[#allocation6 + $0xab4] sm:$0xf]
    %v3386 = vld [vmem:[#allocation6 + $0xab8] sm:$0xff]
    %v3387 = vld [vmem:[#allocation6 + $0xac0] sm:$0xff]
    %v3388 = vld [vmem:[#allocation6 + $0xac8] sm:$0xff]
    %v3389 = vld [vmem:[#allocation6 + $0xad0] sm:$0xf]
    %v3390 = vld [vmem:[#allocation6 + $0xad4] sm:$0xff]
    %v3391 = vld [vmem:[#allocation6 + $0xadc] sm:$0xff]
    %v3392 = vld [vmem:[#allocation6 + $0xae4] sm:$0xff]
    %v3393 = vld [vmem:[#allocation6 + $0xaec] sm:$0xf]
    %v3394 = vld [vmem:[#allocation6 + $0xaf0] sm:$0xff]
    %v3395 = vld [vmem:[#allocation6 + $0xaf8] sm:$0xff]
    %v3396 = vld [vmem:[#allocation6 + $0xb00] sm:$0xff]
    %v3397 = vld [vmem:[#allocation6 + $0xb08] sm:$0xf]
    %v3398 = vld [vmem:[#allocation6 + $0xb0c] sm:$0xff]
    %v3399 = vld [vmem:[#allocation6 + $0xb14] sm:$0xff]
    %v3400 = vld [vmem:[#allocation6 + $0xb1c] sm:$0xff]
    %v3401 = vld [vmem:[#allocation6 + $0xb24] sm:$0xf]
    %v3402 = vld [vmem:[#allocation6 + $0xb28] sm:$0xff]
    %v3403 = vld [vmem:[#allocation6 + $0xb30] sm:$0xff]
    %v3404 = vld [vmem:[#allocation6 + $0xb38] sm:$0xff]
    %v3405 = vld [vmem:[#allocation6 + $0xb40] sm:$0xf]
    %v3406 = vld [vmem:[#allocation6 + $0xb44] sm:$0xff]
    %v3407 = vld [vmem:[#allocation6 + $0xb4c] sm:$0xff]
    %v3408 = vld [vmem:[#allocation6 + $0xb54] sm:$0xff]
    %v3409 = vld [vmem:[#allocation6 + $0xb5c] sm:$0xf]
    %v3410 = vld [vmem:[#allocation6 + $0xb60] sm:$0xff]
    %v3411 = vld [vmem:[#allocation6 + $0xb68] sm:$0xff]
    %v3412 = vld [vmem:[#allocation6 + $0xb70] sm:$0xff]
    %v3413 = vld [vmem:[#allocation6 + $0xb78] sm:$0xf]
    %v3414 = vld [vmem:[#allocation6 + $0xb7c] sm:$0xff]
    %v3415 = vld [vmem:[#allocation6 + $0xb84] sm:$0xff]
    %v3416 = vld [vmem:[#allocation6 + $0xb8c] sm:$0xff]
    %v3417 = vld [vmem:[#allocation6 + $0xb94] sm:$0xf]
    %v3418 = vld [vmem:[#allocation6 + $0xb98] sm:$0xff]
    %v3419 = vld [vmem:[#allocation6 + $0xba0] sm:$0xff]
    %v3420 = vld [vmem:[#allocation6 + $0xba8] sm:$0xff]
    %v3421 = vld [vmem:[#allocation6 + $0xbb0] sm:$0xf]
    %v3422 = vld [vmem:[#allocation6 + $0xbb4] sm:$0xff]
    %v3423 = vld [vmem:[#allocation6 + $0xbbc] sm:$0xff]
    %v3424 = vld [vmem:[#allocation6 + $0xbc4] sm:$0xff]
    %v3425 = vld [vmem:[#allocation6 + $0xbcc] sm:$0xf]
    %v3426 = vld [vmem:[#allocation6 + $0xbd0] sm:$0xff]
    %v3427 = vld [vmem:[#allocation6 + $0xbd8] sm:$0xff]
    %v3428 = vld [vmem:[#allocation6 + $0xbe0] sm:$0xff]
    %v3429 = vld [vmem:[#allocation6 + $0xbe8] sm:$0xf]
    %v3430 = vld [vmem:[#allocation6 + $0xbec] sm:$0xff]
    %v3431 = vld [vmem:[#allocation6 + $0xbf4] sm:$0xff]
    %v3432 = vld [vmem:[#allocation6 + $0xbfc] sm:$0xff]
    %v3433 = vld [vmem:[#allocation6 + $0xc04] sm:$0xf]
    %v3434 = vld [vmem:[#allocation6 + $0xc08] sm:$0xff]
    %v3435 = vld [vmem:[#allocation6 + $0xc10] sm:$0xff]
    %v3436 = vld [vmem:[#allocation6 + $0xc18] sm:$0xff]
    %v3437 = vld [vmem:[#allocation6 + $0xc20] sm:$0xf]
    %v3438 = vld [vmem:[#allocation6 + $0xc24] sm:$0xff]
    %v3439 = vld [vmem:[#allocation6 + $0xc2c] sm:$0xff]
    %v3440 = vld [vmem:[#allocation6 + $0xc34] sm:$0xff]
    %v3441 = vld [vmem:[#allocation6 + $0xc3c] sm:$0xf]
    %v3442 = vld [vmem:[#allocation7] sm:$0xff]
    %v3444 = vlaneseq
    %v3445 = vshrl.u32 %v3444, 7
    %v3446 = vsub.s32 0, %v3445
    %v3447 = vrot.slane %v3442, %v3446
    %v3448 = vlaneseq
    %v3449 = vshrl.u32 %v3448, 7
    %v3450 = vsub.s32 1, %v3449
    %v3451 = vrot.slane %v3442, %v3450
    %v3452 = vlaneseq
    %v3453 = vshrl.u32 %v3452, 7
    %v3454 = vsub.s32 2, %v3453
    %v3455 = vrot.slane %v3442, %v3454
    %v3456 = vlaneseq
    %v3457 = vshrl.u32 %v3456, 7
    %v3458 = vsub.s32 3, %v3457
    %v3459 = vrot.slane %v3442, %v3458
    %v3460 = vlaneseq
    %v3461 = vshrl.u32 %v3460, 7
    %v3462 = vsub.s32 4, %v3461
    %v3463 = vrot.slane %v3442, %v3462
    %v3464 = vlaneseq
    %v3465 = vshrl.u32 %v3464, 7
    %v3466 = vsub.s32 5, %v3465
    %v3467 = vrot.slane %v3442, %v3466
    %v3468 = vlaneseq
    %v3469 = vshrl.u32 %v3468, 7
    %v3470 = vsub.s32 6, %v3469
    %v3471 = vrot.slane %v3442, %v3470
    %v3927 = vunpack.c.l.b16 %v2994
    %v3928 = vunpack.c.h.b16 %v2994
    %v3929 = vunpack.c.l.b16 %v2995
    %v3930 = vunpack.c.h.b16 %v2995
    %v3931 = vunpack.c.l.b16 %v2996
    %v3932 = vunpack.c.h.b16 %v2996
    %v3933 = vunpack.c.l.b16 %v2997
    %v3934 = vunpack.c.l.b16 %v2998
    %v3935 = vunpack.c.h.b16 %v2998
    %v3936 = vunpack.c.l.b16 %v2999
    %v3937 = vunpack.c.h.b16 %v2999
    %v3938 = vunpack.c.l.b16 %v3000
    %v3939 = vunpack.c.h.b16 %v3000
    %v3940 = vunpack.c.l.b16 %v3001
    %v3941 = vunpack.c.l.b16 %v3002
    %v3942 = vunpack.c.h.b16 %v3002
    %v3943 = vunpack.c.l.b16 %v3003
    %v3944 = vunpack.c.h.b16 %v3003
    %v3945 = vunpack.c.l.b16 %v3004
    %v3946 = vunpack.c.h.b16 %v3004
    %v3947 = vunpack.c.l.b16 %v3005
    %v3948 = vunpack.c.l.b16 %v3006
    %v3949 = vunpack.c.h.b16 %v3006
    %v3950 = vunpack.c.l.b16 %v3007
    %v3951 = vunpack.c.h.b16 %v3007
    %v3952 = vunpack.c.l.b16 %v3008
    %v3953 = vunpack.c.h.b16 %v3008
    %v3954 = vunpack.c.l.b16 %v3009
    %v3955 = vunpack.c.l.b16 %v3010
    %v3956 = vunpack.c.h.b16 %v3010
    %v3957 = vunpack.c.l.b16 %v3011
    %v3958 = vunpack.c.h.b16 %v3011
    %v3959 = vunpack.c.l.b16 %v3012
    %v3960 = vunpack.c.h.b16 %v3012
    %v3961 = vunpack.c.l.b16 %v3013
    %v3962 = vunpack.c.l.b16 %v3014
    %v3963 = vunpack.c.h.b16 %v3014
    %v3964 = vunpack.c.l.b16 %v3015
    %v3965 = vunpack.c.h.b16 %v3015
    %v3966 = vunpack.c.l.b16 %v3016
    %v3967 = vunpack.c.h.b16 %v3016
    %v3968 = vunpack.c.l.b16 %v3017
    %v3969 = vunpack.c.l.b16 %v3018
    %v3970 = vunpack.c.h.b16 %v3018
    %v3971 = vunpack.c.l.b16 %v3019
    %v3972 = vunpack.c.h.b16 %v3019
    %v3973 = vunpack.c.l.b16 %v3020
    %v3974 = vunpack.c.h.b16 %v3020
    %v3975 = vunpack.c.l.b16 %v3021
    %v3976 = vunpack.c.l.b16 %v3022
    %v3977 = vunpack.c.h.b16 %v3022
    %v3978 = vunpack.c.l.b16 %v3023
    %v3979 = vunpack.c.h.b16 %v3023
    %v3980 = vunpack.c.l.b16 %v3024
    %v3981 = vunpack.c.h.b16 %v3024
    %v3982 = vunpack.c.l.b16 %v3025
    %v3983 = vunpack.c.l.b16 %v3026
    %v3984 = vunpack.c.h.b16 %v3026
    %v3985 = vunpack.c.l.b16 %v3027
    %v3986 = vunpack.c.h.b16 %v3027
    %v3987 = vunpack.c.l.b16 %v3028
    %v3988 = vunpack.c.h.b16 %v3028
    %v3989 = vunpack.c.l.b16 %v3029
    %v3990 = vunpack.c.l.b16 %v3030
    %v3991 = vunpack.c.h.b16 %v3030
    %v3992 = vunpack.c.l.b16 %v3031
    %v3993 = vunpack.c.h.b16 %v3031
    %v3994 = vunpack.c.l.b16 %v3032
    %v3995 = vunpack.c.h.b16 %v3032
    %v3996 = vunpack.c.l.b16 %v3033
    %v3997 = vunpack.c.l.b16 %v3034
    %v3998 = vunpack.c.h.b16 %v3034
    %v3999 = vunpack.c.l.b16 %v3035
    %v4000 = vunpack.c.h.b16 %v3035
    %v4001 = vunpack.c.l.b16 %v3036
    %v4002 = vunpack.c.h.b16 %v3036
    %v4003 = vunpack.c.l.b16 %v3037
    %v4004 = vunpack.c.l.b16 %v3038
    %v4005 = vunpack.c.h.b16 %v3038
    %v4006 = vunpack.c.l.b16 %v3039
    %v4007 = vunpack.c.h.b16 %v3039
    %v4008 = vunpack.c.l.b16 %v3040
    %v4009 = vunpack.c.h.b16 %v3040
    %v4010 = vunpack.c.l.b16 %v3041
    %v4011 = vunpack.c.l.b16 %v3042
    %v4012 = vunpack.c.h.b16 %v3042
    %v4013 = vunpack.c.l.b16 %v3043
    %v4014 = vunpack.c.h.b16 %v3043
    %v4015 = vunpack.c.l.b16 %v3044
    %v4016 = vunpack.c.h.b16 %v3044
    %v4017 = vunpack.c.l.b16 %v3045
    %v4018 = vunpack.c.l.b16 %v3046
    %v4019 = vunpack.c.h.b16 %v3046
    %v4020 = vunpack.c.l.b16 %v3047
    %v4021 = vunpack.c.h.b16 %v3047
    %v4022 = vunpack.c.l.b16 %v3048
    %v4023 = vunpack.c.h.b16 %v3048
    %v4024 = vunpack.c.l.b16 %v3049
    %v4025 = vunpack.c.l.b16 %v3050
    %v4026 = vunpack.c.h.b16 %v3050
    %v4027 = vunpack.c.l.b16 %v3051
    %v4028 = vunpack.c.h.b16 %v3051
    %v4029 = vunpack.c.l.b16 %v3052
    %v4030 = vunpack.c.h.b16 %v3052
    %v4031 = vunpack.c.l.b16 %v3053
    %v4032 = vunpack.c.l.b16 %v3054
    %v4033 = vunpack.c.h.b16 %v3054
    %v4034 = vunpack.c.l.b16 %v3055
    %v4035 = vunpack.c.h.b16 %v3055
    %v4036 = vunpack.c.l.b16 %v3056
    %v4037 = vunpack.c.h.b16 %v3056
    %v4038 = vunpack.c.l.b16 %v3057
    %v4039 = vunpack.c.l.b16 %v3058
    %v4040 = vunpack.c.h.b16 %v3058
    %v4041 = vunpack.c.l.b16 %v3059
    %v4042 = vunpack.c.h.b16 %v3059
    %v4043 = vunpack.c.l.b16 %v3060
    %v4044 = vunpack.c.h.b16 %v3060
    %v4045 = vunpack.c.l.b16 %v3061
    %v4046 = vunpack.c.l.b16 %v3062
    %v4047 = vunpack.c.h.b16 %v3062
    %v4048 = vunpack.c.l.b16 %v3063
    %v4049 = vunpack.c.h.b16 %v3063
    %v4050 = vunpack.c.l.b16 %v3064
    %v4051 = vunpack.c.h.b16 %v3064
    %v4052 = vunpack.c.l.b16 %v3065
    %v4053 = vunpack.c.l.b16 %v3066
    %v4054 = vunpack.c.h.b16 %v3066
    %v4055 = vunpack.c.l.b16 %v3067
    %v4056 = vunpack.c.h.b16 %v3067
    %v4057 = vunpack.c.l.b16 %v3068
    %v4058 = vunpack.c.h.b16 %v3068
    %v4059 = vunpack.c.l.b16 %v3069
    %v4060 = vunpack.c.l.b16 %v3070
    %v4061 = vunpack.c.h.b16 %v3070
    %v4062 = vunpack.c.l.b16 %v3071
    %v4063 = vunpack.c.h.b16 %v3071
    %v4064 = vunpack.c.l.b16 %v3072
    %v4065 = vunpack.c.h.b16 %v3072
    %v4066 = vunpack.c.l.b16 %v3073
    %v4067 = vunpack.c.l.b16 %v3074
    %v4068 = vunpack.c.h.b16 %v3074
    %v4069 = vunpack.c.l.b16 %v3075
    %v4070 = vunpack.c.h.b16 %v3075
    %v4071 = vunpack.c.l.b16 %v3076
    %v4072 = vunpack.c.h.b16 %v3076
    %v4073 = vunpack.c.l.b16 %v3077
    %v4074 = vunpack.c.l.b16 %v3078
    %v4075 = vunpack.c.h.b16 %v3078
    %v4076 = vunpack.c.l.b16 %v3079
    %v4077 = vunpack.c.h.b16 %v3079
    %v4078 = vunpack.c.l.b16 %v3080
    %v4079 = vunpack.c.h.b16 %v3080
    %v4080 = vunpack.c.l.b16 %v3081
    %v4081 = vunpack.c.l.b16 %v3082
    %v4082 = vunpack.c.h.b16 %v3082
    %v4083 = vunpack.c.l.b16 %v3083
    %v4084 = vunpack.c.h.b16 %v3083
    %v4085 = vunpack.c.l.b16 %v3084
    %v4086 = vunpack.c.h.b16 %v3084
    %v4087 = vunpack.c.l.b16 %v3085
    %v4088 = vunpack.c.l.b16 %v3086
    %v4089 = vunpack.c.h.b16 %v3086
    %v4090 = vunpack.c.l.b16 %v3087
    %v4091 = vunpack.c.h.b16 %v3087
    %v4092 = vunpack.c.l.b16 %v3088
    %v4093 = vunpack.c.h.b16 %v3088
    %v4094 = vunpack.c.l.b16 %v3089
    %v4095 = vunpack.c.l.b16 %v3090
    %v4096 = vunpack.c.h.b16 %v3090
    %v4097 = vunpack.c.l.b16 %v3091
    %v4098 = vunpack.c.h.b16 %v3091
    %v4099 = vunpack.c.l.b16 %v3092
    %v4100 = vunpack.c.h.b16 %v3092
    %v4101 = vunpack.c.l.b16 %v3093
    %v4102 = vunpack.c.l.b16 %v3094
    %v4103 = vunpack.c.h.b16 %v3094
    %v4104 = vunpack.c.l.b16 %v3095
    %v4105 = vunpack.c.h.b16 %v3095
    %v4106 = vunpack.c.l.b16 %v3096
    %v4107 = vunpack.c.h.b16 %v3096
    %v4108 = vunpack.c.l.b16 %v3097
    %v4109 = vunpack.c.l.b16 %v3098
    %v4110 = vunpack.c.h.b16 %v3098
    %v4111 = vunpack.c.l.b16 %v3099
    %v4112 = vunpack.c.h.b16 %v3099
    %v4113 = vunpack.c.l.b16 %v3100
    %v4114 = vunpack.c.h.b16 %v3100
    %v4115 = vunpack.c.l.b16 %v3101
    %v4116 = vunpack.c.l.b16 %v3102
    %v4117 = vunpack.c.h.b16 %v3102
    %v4118 = vunpack.c.l.b16 %v3103
    %v4119 = vunpack.c.h.b16 %v3103
    %v4120 = vunpack.c.l.b16 %v3104
    %v4121 = vunpack.c.h.b16 %v3104
    %v4122 = vunpack.c.l.b16 %v3105
    %v4123 = vunpack.c.l.b16 %v3106
    %v4124 = vunpack.c.h.b16 %v3106
    %v4125 = vunpack.c.l.b16 %v3107
    %v4126 = vunpack.c.h.b16 %v3107
    %v4127 = vunpack.c.l.b16 %v3108
    %v4128 = vunpack.c.h.b16 %v3108
    %v4129 = vunpack.c.l.b16 %v3109
    %v4130 = vunpack.c.l.b16 %v3110
    %v4131 = vunpack.c.h.b16 %v3110
    %v4132 = vunpack.c.l.b16 %v3111
    %v4133 = vunpack.c.h.b16 %v3111
    %v4134 = vunpack.c.l.b16 %v3112
    %v4135 = vunpack.c.h.b16 %v3112
    %v4136 = vunpack.c.l.b16 %v3113
    %v4137 = vunpack.c.l.b16 %v3114
    %v4138 = vunpack.c.h.b16 %v3114
    %v4139 = vunpack.c.l.b16 %v3115
    %v4140 = vunpack.c.h.b16 %v3115
    %v4141 = vunpack.c.l.b16 %v3116
    %v4142 = vunpack.c.h.b16 %v3116
    %v4143 = vunpack.c.l.b16 %v3117
    %v4144 = vunpack.c.l.b16 %v3118
    %v4145 = vunpack.c.h.b16 %v3118
    %v4146 = vunpack.c.l.b16 %v3119
    %v4147 = vunpack.c.h.b16 %v3119
    %v4148 = vunpack.c.l.b16 %v3120
    %v4149 = vunpack.c.h.b16 %v3120
    %v4150 = vunpack.c.l.b16 %v3121
    %v4151 = vunpack.c.l.b16 %v3122
    %v4152 = vunpack.c.h.b16 %v3122
    %v4153 = vunpack.c.l.b16 %v3123
    %v4154 = vunpack.c.h.b16 %v3123
    %v4155 = vunpack.c.l.b16 %v3124
    %v4156 = vunpack.c.h.b16 %v3124
    %v4157 = vunpack.c.l.b16 %v3125
    %v4158 = vunpack.c.l.b16 %v3126
    %v4159 = vunpack.c.h.b16 %v3126
    %v4160 = vunpack.c.l.b16 %v3127
    %v4161 = vunpack.c.h.b16 %v3127
    %v4162 = vunpack.c.l.b16 %v3128
    %v4163 = vunpack.c.h.b16 %v3128
    %v4164 = vunpack.c.l.b16 %v3129
    %v4165 = vunpack.c.l.b16 %v3130
    %v4166 = vunpack.c.h.b16 %v3130
    %v4167 = vunpack.c.l.b16 %v3131
    %v4168 = vunpack.c.h.b16 %v3131
    %v4169 = vunpack.c.l.b16 %v3132
    %v4170 = vunpack.c.h.b16 %v3132
    %v4171 = vunpack.c.l.b16 %v3133
    %v4172 = vunpack.c.l.b16 %v3134
    %v4173 = vunpack.c.h.b16 %v3134
    %v4174 = vunpack.c.l.b16 %v3135
    %v4175 = vunpack.c.h.b16 %v3135
    %v4176 = vunpack.c.l.b16 %v3136
    %v4177 = vunpack.c.h.b16 %v3136
    %v4178 = vunpack.c.l.b16 %v3137
    %v4179 = vunpack.c.l.b16 %v3138
    %v4180 = vunpack.c.h.b16 %v3138
    %v4181 = vunpack.c.l.b16 %v3139
    %v4182 = vunpack.c.h.b16 %v3139
    %v4183 = vunpack.c.l.b16 %v3140
    %v4184 = vunpack.c.h.b16 %v3140
    %v4185 = vunpack.c.l.b16 %v3141
    %v4186 = vunpack.c.l.b16 %v3142
    %v4187 = vunpack.c.h.b16 %v3142
    %v4188 = vunpack.c.l.b16 %v3143
    %v4189 = vunpack.c.h.b16 %v3143
    %v4190 = vunpack.c.l.b16 %v3144
    %v4191 = vunpack.c.h.b16 %v3144
    %v4192 = vunpack.c.l.b16 %v3145
    %v4193 = vunpack.c.l.b16 %v3146
    %v4194 = vunpack.c.h.b16 %v3146
    %v4195 = vunpack.c.l.b16 %v3147
    %v4196 = vunpack.c.h.b16 %v3147
    %v4197 = vunpack.c.l.b16 %v3148
    %v4198 = vunpack.c.h.b16 %v3148
    %v4199 = vunpack.c.l.b16 %v3149
    %v4200 = vunpack.c.l.b16 %v3150
    %v4201 = vunpack.c.h.b16 %v3150
    %v4202 = vunpack.c.l.b16 %v3151
    %v4203 = vunpack.c.h.b16 %v3151
    %v4204 = vunpack.c.l.b16 %v3152
    %v4205 = vunpack.c.h.b16 %v3152
    %v4206 = vunpack.c.l.b16 %v3153
    %v4207 = vunpack.c.l.b16 %v3154
    %v4208 = vunpack.c.h.b16 %v3154
    %v4209 = vunpack.c.l.b16 %v3155
    %v4210 = vunpack.c.h.b16 %v3155
    %v4211 = vunpack.c.l.b16 %v3156
    %v4212 = vunpack.c.h.b16 %v3156
    %v4213 = vunpack.c.l.b16 %v3157
    %v4214 = vunpack.c.l.b16 %v3158
    %v4215 = vunpack.c.h.b16 %v3158
    %v4216 = vunpack.c.l.b16 %v3159
    %v4217 = vunpack.c.h.b16 %v3159
    %v4218 = vunpack.c.l.b16 %v3160
    %v4219 = vunpack.c.h.b16 %v3160
    %v4220 = vunpack.c.l.b16 %v3161
    %v4221 = vunpack.c.l.b16 %v3162
    %v4222 = vunpack.c.h.b16 %v3162
    %v4223 = vunpack.c.l.b16 %v3163
    %v4224 = vunpack.c.h.b16 %v3163
    %v4225 = vunpack.c.l.b16 %v3164
    %v4226 = vunpack.c.h.b16 %v3164
    %v4227 = vunpack.c.l.b16 %v3165
    %v4228 = vunpack.c.l.b16 %v3166
    %v4229 = vunpack.c.h.b16 %v3166
    %v4230 = vunpack.c.l.b16 %v3167
    %v4231 = vunpack.c.h.b16 %v3167
    %v4232 = vunpack.c.l.b16 %v3168
    %v4233 = vunpack.c.h.b16 %v3168
    %v4234 = vunpack.c.l.b16 %v3169
    %v4235 = vunpack.c.l.b16 %v3170
    %v4236 = vunpack.c.h.b16 %v3170
    %v4237 = vunpack.c.l.b16 %v3171
    %v4238 = vunpack.c.h.b16 %v3171
    %v4239 = vunpack.c.l.b16 %v3172
    %v4240 = vunpack.c.h.b16 %v3172
    %v4241 = vunpack.c.l.b16 %v3173
    %v4242 = vunpack.c.l.b16 %v3174
    %v4243 = vunpack.c.h.b16 %v3174
    %v4244 = vunpack.c.l.b16 %v3175
    %v4245 = vunpack.c.h.b16 %v3175
    %v4246 = vunpack.c.l.b16 %v3176
    %v4247 = vunpack.c.h.b16 %v3176
    %v4248 = vunpack.c.l.b16 %v3177
    %v4249 = vunpack.c.l.b16 %v3178
    %v4250 = vunpack.c.h.b16 %v3178
    %v4251 = vunpack.c.l.b16 %v3179
    %v4252 = vunpack.c.h.b16 %v3179
    %v4253 = vunpack.c.l.b16 %v3180
    %v4254 = vunpack.c.h.b16 %v3180
    %v4255 = vunpack.c.l.b16 %v3181
    %v4256 = vunpack.c.l.b16 %v3182
    %v4257 = vunpack.c.h.b16 %v3182
    %v4258 = vunpack.c.l.b16 %v3183
    %v4259 = vunpack.c.h.b16 %v3183
    %v4260 = vunpack.c.l.b16 %v3184
    %v4261 = vunpack.c.h.b16 %v3184
    %v4262 = vunpack.c.l.b16 %v3185
    %v4263 = vunpack.c.l.b16 %v3186
    %v4264 = vunpack.c.h.b16 %v3186
    %v4265 = vunpack.c.l.b16 %v3187
    %v4266 = vunpack.c.h.b16 %v3187
    %v4267 = vunpack.c.l.b16 %v3188
    %v4268 = vunpack.c.h.b16 %v3188
    %v4269 = vunpack.c.l.b16 %v3189
    %v4270 = vunpack.c.l.b16 %v3190
    %v4271 = vunpack.c.h.b16 %v3190
    %v4272 = vunpack.c.l.b16 %v3191
    %v4273 = vunpack.c.h.b16 %v3191
    %v4274 = vunpack.c.l.b16 %v3192
    %v4275 = vunpack.c.h.b16 %v3192
    %v4276 = vunpack.c.l.b16 %v3193
    %v4277 = vunpack.c.l.b16 %v3194
    %v4278 = vunpack.c.h.b16 %v3194
    %v4279 = vunpack.c.l.b16 %v3195
    %v4280 = vunpack.c.h.b16 %v3195
    %v4281 = vunpack.c.l.b16 %v3196
    %v4282 = vunpack.c.h.b16 %v3196
    %v4283 = vunpack.c.l.b16 %v3197
    %v4284 = vunpack.c.l.b16 %v3198
    %v4285 = vunpack.c.h.b16 %v3198
    %v4286 = vunpack.c.l.b16 %v3199
    %v4287 = vunpack.c.h.b16 %v3199
    %v4288 = vunpack.c.l.b16 %v3200
    %v4289 = vunpack.c.h.b16 %v3200
    %v4290 = vunpack.c.l.b16 %v3201
    %v4291 = vunpack.c.l.b16 %v3202
    %v4292 = vunpack.c.h.b16 %v3202
    %v4293 = vunpack.c.l.b16 %v3203
    %v4294 = vunpack.c.h.b16 %v3203
    %v4295 = vunpack.c.l.b16 %v3204
    %v4296 = vunpack.c.h.b16 %v3204
    %v4297 = vunpack.c.l.b16 %v3205
    %v4298 = vunpack.c.l.b16 %v3206
    %v4299 = vunpack.c.h.b16 %v3206
    %v4300 = vunpack.c.l.b16 %v3207
    %v4301 = vunpack.c.h.b16 %v3207
    %v4302 = vunpack.c.l.b16 %v3208
    %v4303 = vunpack.c.h.b16 %v3208
    %v4304 = vunpack.c.l.b16 %v3209
    %v4305 = vunpack.c.l.b16 %v3210
    %v4306 = vunpack.c.h.b16 %v3210
    %v4307 = vunpack.c.l.b16 %v3211
    %v4308 = vunpack.c.h.b16 %v3211
    %v4309 = vunpack.c.l.b16 %v3212
    %v4310 = vunpack.c.h.b16 %v3212
    %v4311 = vunpack.c.l.b16 %v3213
    %v4312 = vunpack.c.l.b16 %v3214
    %v4313 = vunpack.c.h.b16 %v3214
    %v4314 = vunpack.c.l.b16 %v3215
    %v4315 = vunpack.c.h.b16 %v3215
    %v4316 = vunpack.c.l.b16 %v3216
    %v4317 = vunpack.c.h.b16 %v3216
    %v4318 = vunpack.c.l.b16 %v3217
    %v4319 = vunpack.c.l.b16 %v3218
    %v4320 = vunpack.c.h.b16 %v3218
    %v4321 = vunpack.c.l.b16 %v3219
    %v4322 = vunpack.c.h.b16 %v3219
    %v4323 = vunpack.c.l.b16 %v3220
    %v4324 = vunpack.c.h.b16 %v3220
    %v4325 = vunpack.c.l.b16 %v3221
    %v4326 = vunpack.c.l.b16 %v3222
    %v4327 = vunpack.c.h.b16 %v3222
    %v4328 = vunpack.c.l.b16 %v3223
    %v4329 = vunpack.c.h.b16 %v3223
    %v4330 = vunpack.c.l.b16 %v3224
    %v4331 = vunpack.c.h.b16 %v3224
    %v4332 = vunpack.c.l.b16 %v3225
    %v4333 = vunpack.c.l.b16 %v3226
    %v4334 = vunpack.c.h.b16 %v3226
    %v4335 = vunpack.c.l.b16 %v3227
    %v4336 = vunpack.c.h.b16 %v3227
    %v4337 = vunpack.c.l.b16 %v3228
    %v4338 = vunpack.c.h.b16 %v3228
    %v4339 = vunpack.c.l.b16 %v3229
    %v4340 = vunpack.c.l.b16 %v3230
    %v4341 = vunpack.c.h.b16 %v3230
    %v4342 = vunpack.c.l.b16 %v3231
    %v4343 = vunpack.c.h.b16 %v3231
    %v4344 = vunpack.c.l.b16 %v3232
    %v4345 = vunpack.c.h.b16 %v3232
    %v4346 = vunpack.c.l.b16 %v3233
    %v4347 = vunpack.c.l.b16 %v3234
    %v4348 = vunpack.c.h.b16 %v3234
    %v4349 = vunpack.c.l.b16 %v3235
    %v4350 = vunpack.c.h.b16 %v3235
    %v4351 = vunpack.c.l.b16 %v3236
    %v4352 = vunpack.c.h.b16 %v3236
    %v4353 = vunpack.c.l.b16 %v3237
    %v4354 = vunpack.c.l.b16 %v3238
    %v4355 = vunpack.c.h.b16 %v3238
    %v4356 = vunpack.c.l.b16 %v3239
    %v4357 = vunpack.c.h.b16 %v3239
    %v4358 = vunpack.c.l.b16 %v3240
    %v4359 = vunpack.c.h.b16 %v3240
    %v4360 = vunpack.c.l.b16 %v3241
    %v4361 = vunpack.c.l.b16 %v3242
    %v4362 = vunpack.c.h.b16 %v3242
    %v4363 = vunpack.c.l.b16 %v3243
    %v4364 = vunpack.c.h.b16 %v3243
    %v4365 = vunpack.c.l.b16 %v3244
    %v4366 = vunpack.c.h.b16 %v3244
    %v4367 = vunpack.c.l.b16 %v3245
    %v4368 = vunpack.c.l.b16 %v3246
    %v4369 = vunpack.c.h.b16 %v3246
    %v4370 = vunpack.c.l.b16 %v3247
    %v4371 = vunpack.c.h.b16 %v3247
    %v4372 = vunpack.c.l.b16 %v3248
    %v4373 = vunpack.c.h.b16 %v3248
    %v4374 = vunpack.c.l.b16 %v3249
    %v4375 = vunpack.c.l.b16 %v3250
    %v4376 = vunpack.c.h.b16 %v3250
    %v4377 = vunpack.c.l.b16 %v3251
    %v4378 = vunpack.c.h.b16 %v3251
    %v4379 = vunpack.c.l.b16 %v3252
    %v4380 = vunpack.c.h.b16 %v3252
    %v4381 = vunpack.c.l.b16 %v3253
    %v4382 = vunpack.c.l.b16 %v3254
    %v4383 = vunpack.c.h.b16 %v3254
    %v4384 = vunpack.c.l.b16 %v3255
    %v4385 = vunpack.c.h.b16 %v3255
    %v4386 = vunpack.c.l.b16 %v3256
    %v4387 = vunpack.c.h.b16 %v3256
    %v4388 = vunpack.c.l.b16 %v3257
    %v4389 = vunpack.c.l.b16 %v3258
    %v4390 = vunpack.c.h.b16 %v3258
    %v4391 = vunpack.c.l.b16 %v3259
    %v4392 = vunpack.c.h.b16 %v3259
    %v4393 = vunpack.c.l.b16 %v3260
    %v4394 = vunpack.c.h.b16 %v3260
    %v4395 = vunpack.c.l.b16 %v3261
    %v4396 = vunpack.c.l.b16 %v3262
    %v4397 = vunpack.c.h.b16 %v3262
    %v4398 = vunpack.c.l.b16 %v3263
    %v4399 = vunpack.c.h.b16 %v3263
    %v4400 = vunpack.c.l.b16 %v3264
    %v4401 = vunpack.c.h.b16 %v3264
    %v4402 = vunpack.c.l.b16 %v3265
    %v4403 = vunpack.c.l.b16 %v3266
    %v4404 = vunpack.c.h.b16 %v3266
    %v4405 = vunpack.c.l.b16 %v3267
    %v4406 = vunpack.c.h.b16 %v3267
    %v4407 = vunpack.c.l.b16 %v3268
    %v4408 = vunpack.c.h.b16 %v3268
    %v4409 = vunpack.c.l.b16 %v3269
    %v4410 = vunpack.c.l.b16 %v3270
    %v4411 = vunpack.c.h.b16 %v3270
    %v4412 = vunpack.c.l.b16 %v3271
    %v4413 = vunpack.c.h.b16 %v3271
    %v4414 = vunpack.c.l.b16 %v3272
    %v4415 = vunpack.c.h.b16 %v3272
    %v4416 = vunpack.c.l.b16 %v3273
    %v4417 = vunpack.c.l.b16 %v3274
    %v4418 = vunpack.c.h.b16 %v3274
    %v4419 = vunpack.c.l.b16 %v3275
    %v4420 = vunpack.c.h.b16 %v3275
    %v4421 = vunpack.c.l.b16 %v3276
    %v4422 = vunpack.c.h.b16 %v3276
    %v4423 = vunpack.c.l.b16 %v3277
    %v4424 = vunpack.c.l.b16 %v3278
    %v4425 = vunpack.c.h.b16 %v3278
    %v4426 = vunpack.c.l.b16 %v3279
    %v4427 = vunpack.c.h.b16 %v3279
    %v4428 = vunpack.c.l.b16 %v3280
    %v4429 = vunpack.c.h.b16 %v3280
    %v4430 = vunpack.c.l.b16 %v3281
    %v4431 = vunpack.c.l.b16 %v3282
    %v4432 = vunpack.c.h.b16 %v3282
    %v4433 = vunpack.c.l.b16 %v3283
    %v4434 = vunpack.c.h.b16 %v3283
    %v4435 = vunpack.c.l.b16 %v3284
    %v4436 = vunpack.c.h.b16 %v3284
    %v4437 = vunpack.c.l.b16 %v3285
    %v4438 = vunpack.c.l.b16 %v3286
    %v4439 = vunpack.c.h.b16 %v3286
    %v4440 = vunpack.c.l.b16 %v3287
    %v4441 = vunpack.c.h.b16 %v3287
    %v4442 = vunpack.c.l.b16 %v3288
    %v4443 = vunpack.c.h.b16 %v3288
    %v4444 = vunpack.c.l.b16 %v3289
    %v4445 = vunpack.c.l.b16 %v3290
    %v4446 = vunpack.c.h.b16 %v3290
    %v4447 = vunpack.c.l.b16 %v3291
    %v4448 = vunpack.c.h.b16 %v3291
    %v4449 = vunpack.c.l.b16 %v3292
    %v4450 = vunpack.c.h.b16 %v3292
    %v4451 = vunpack.c.l.b16 %v3293
    %v4452 = vunpack.c.l.b16 %v3294
    %v4453 = vunpack.c.h.b16 %v3294
    %v4454 = vunpack.c.l.b16 %v3295
    %v4455 = vunpack.c.h.b16 %v3295
    %v4456 = vunpack.c.l.b16 %v3296
    %v4457 = vunpack.c.h.b16 %v3296
    %v4458 = vunpack.c.l.b16 %v3297
    %v4459 = vunpack.c.l.b16 %v3298
    %v4460 = vunpack.c.h.b16 %v3298
    %v4461 = vunpack.c.l.b16 %v3299
    %v4462 = vunpack.c.h.b16 %v3299
    %v4463 = vunpack.c.l.b16 %v3300
    %v4464 = vunpack.c.h.b16 %v3300
    %v4465 = vunpack.c.l.b16 %v3301
    %v4466 = vunpack.c.l.b16 %v3302
    %v4467 = vunpack.c.h.b16 %v3302
    %v4468 = vunpack.c.l.b16 %v3303
    %v4469 = vunpack.c.h.b16 %v3303
    %v4470 = vunpack.c.l.b16 %v3304
    %v4471 = vunpack.c.h.b16 %v3304
    %v4472 = vunpack.c.l.b16 %v3305
    %v4473 = vunpack.c.l.b16 %v3306
    %v4474 = vunpack.c.h.b16 %v3306
    %v4475 = vunpack.c.l.b16 %v3307
    %v4476 = vunpack.c.h.b16 %v3307
    %v4477 = vunpack.c.l.b16 %v3308
    %v4478 = vunpack.c.h.b16 %v3308
    %v4479 = vunpack.c.l.b16 %v3309
    %v4480 = vunpack.c.l.b16 %v3310
    %v4481 = vunpack.c.h.b16 %v3310
    %v4482 = vunpack.c.l.b16 %v3311
    %v4483 = vunpack.c.h.b16 %v3311
    %v4484 = vunpack.c.l.b16 %v3312
    %v4485 = vunpack.c.h.b16 %v3312
    %v4486 = vunpack.c.l.b16 %v3313
    %v4487 = vunpack.c.l.b16 %v3314
    %v4488 = vunpack.c.h.b16 %v3314
    %v4489 = vunpack.c.l.b16 %v3315
    %v4490 = vunpack.c.h.b16 %v3315
    %v4491 = vunpack.c.l.b16 %v3316
    %v4492 = vunpack.c.h.b16 %v3316
    %v4493 = vunpack.c.l.b16 %v3317
    %v4494 = vunpack.c.l.b16 %v3318
    %v4495 = vunpack.c.h.b16 %v3318
    %v4496 = vunpack.c.l.b16 %v3319
    %v4497 = vunpack.c.h.b16 %v3319
    %v4498 = vunpack.c.l.b16 %v3320
    %v4499 = vunpack.c.h.b16 %v3320
    %v4500 = vunpack.c.l.b16 %v3321
    %v4501 = vunpack.c.l.b16 %v3322
    %v4502 = vunpack.c.h.b16 %v3322
    %v4503 = vunpack.c.l.b16 %v3323
    %v4504 = vunpack.c.h.b16 %v3323
    %v4505 = vunpack.c.l.b16 %v3324
    %v4506 = vunpack.c.h.b16 %v3324
    %v4507 = vunpack.c.l.b16 %v3325
    %v4508 = vunpack.c.l.b16 %v3326
    %v4509 = vunpack.c.h.b16 %v3326
    %v4510 = vunpack.c.l.b16 %v3327
    %v4511 = vunpack.c.h.b16 %v3327
    %v4512 = vunpack.c.l.b16 %v3328
    %v4513 = vunpack.c.h.b16 %v3328
    %v4514 = vunpack.c.l.b16 %v3329
    %v4515 = vunpack.c.l.b16 %v3330
    %v4516 = vunpack.c.h.b16 %v3330
    %v4517 = vunpack.c.l.b16 %v3331
    %v4518 = vunpack.c.h.b16 %v3331
    %v4519 = vunpack.c.l.b16 %v3332
    %v4520 = vunpack.c.h.b16 %v3332
    %v4521 = vunpack.c.l.b16 %v3333
    %v4522 = vunpack.c.l.b16 %v3334
    %v4523 = vunpack.c.h.b16 %v3334
    %v4524 = vunpack.c.l.b16 %v3335
    %v4525 = vunpack.c.h.b16 %v3335
    %v4526 = vunpack.c.l.b16 %v3336
    %v4527 = vunpack.c.h.b16 %v3336
    %v4528 = vunpack.c.l.b16 %v3337
    %v4529 = vunpack.c.l.b16 %v3338
    %v4530 = vunpack.c.h.b16 %v3338
    %v4531 = vunpack.c.l.b16 %v3339
    %v4532 = vunpack.c.h.b16 %v3339
    %v4533 = vunpack.c.l.b16 %v3340
    %v4534 = vunpack.c.h.b16 %v3340
    %v4535 = vunpack.c.l.b16 %v3341
    %v4536 = vunpack.c.l.b16 %v3342
    %v4537 = vunpack.c.h.b16 %v3342
    %v4538 = vunpack.c.l.b16 %v3343
    %v4539 = vunpack.c.h.b16 %v3343
    %v4540 = vunpack.c.l.b16 %v3344
    %v4541 = vunpack.c.h.b16 %v3344
    %v4542 = vunpack.c.l.b16 %v3345
    %v4543 = vunpack.c.l.b16 %v3346
    %v4544 = vunpack.c.h.b16 %v3346
    %v4545 = vunpack.c.l.b16 %v3347
    %v4546 = vunpack.c.h.b16 %v3347
    %v4547 = vunpack.c.l.b16 %v3348
    %v4548 = vunpack.c.h.b16 %v3348
    %v4549 = vunpack.c.l.b16 %v3349
    %v4550 = vunpack.c.l.b16 %v3350
    %v4551 = vunpack.c.h.b16 %v3350
    %v4552 = vunpack.c.l.b16 %v3351
    %v4553 = vunpack.c.h.b16 %v3351
    %v4554 = vunpack.c.l.b16 %v3352
    %v4555 = vunpack.c.h.b16 %v3352
    %v4556 = vunpack.c.l.b16 %v3353
    %v4557 = vunpack.c.l.b16 %v3354
    %v4558 = vunpack.c.h.b16 %v3354
    %v4559 = vunpack.c.l.b16 %v3355
    %v4560 = vunpack.c.h.b16 %v3355
    %v4561 = vunpack.c.l.b16 %v3356
    %v4562 = vunpack.c.h.b16 %v3356
    %v4563 = vunpack.c.l.b16 %v3357
    %v4564 = vunpack.c.l.b16 %v3358
    %v4565 = vunpack.c.h.b16 %v3358
    %v4566 = vunpack.c.l.b16 %v3359
    %v4567 = vunpack.c.h.b16 %v3359
    %v4568 = vunpack.c.l.b16 %v3360
    %v4569 = vunpack.c.h.b16 %v3360
    %v4570 = vunpack.c.l.b16 %v3361
    %v4571 = vunpack.c.l.b16 %v3362
    %v4572 = vunpack.c.h.b16 %v3362
    %v4573 = vunpack.c.l.b16 %v3363
    %v4574 = vunpack.c.h.b16 %v3363
    %v4575 = vunpack.c.l.b16 %v3364
    %v4576 = vunpack.c.h.b16 %v3364
    %v4577 = vunpack.c.l.b16 %v3365
    %v4578 = vunpack.c.l.b16 %v3366
    %v4579 = vunpack.c.h.b16 %v3366
    %v4580 = vunpack.c.l.b16 %v3367
    %v4581 = vunpack.c.h.b16 %v3367
    %v4582 = vunpack.c.l.b16 %v3368
    %v4583 = vunpack.c.h.b16 %v3368
    %v4584 = vunpack.c.l.b16 %v3369
    %v4585 = vunpack.c.l.b16 %v3370
    %v4586 = vunpack.c.h.b16 %v3370
    %v4587 = vunpack.c.l.b16 %v3371
    %v4588 = vunpack.c.h.b16 %v3371
    %v4589 = vunpack.c.l.b16 %v3372
    %v4590 = vunpack.c.h.b16 %v3372
    %v4591 = vunpack.c.l.b16 %v3373
    %v4592 = vunpack.c.l.b16 %v3374
    %v4593 = vunpack.c.h.b16 %v3374
    %v4594 = vunpack.c.l.b16 %v3375
    %v4595 = vunpack.c.h.b16 %v3375
    %v4596 = vunpack.c.l.b16 %v3376
    %v4597 = vunpack.c.h.b16 %v3376
    %v4598 = vunpack.c.l.b16 %v3377
    %v4599 = vunpack.c.l.b16 %v3378
    %v4600 = vunpack.c.h.b16 %v3378
    %v4601 = vunpack.c.l.b16 %v3379
    %v4602 = vunpack.c.h.b16 %v3379
    %v4603 = vunpack.c.l.b16 %v3380
    %v4604 = vunpack.c.h.b16 %v3380
    %v4605 = vunpack.c.l.b16 %v3381
    %v4606 = vunpack.c.l.b16 %v3382
    %v4607 = vunpack.c.h.b16 %v3382
    %v4608 = vunpack.c.l.b16 %v3383
    %v4609 = vunpack.c.h.b16 %v3383
    %v4610 = vunpack.c.l.b16 %v3384
    %v4611 = vunpack.c.h.b16 %v3384
    %v4612 = vunpack.c.l.b16 %v3385
    %v4613 = vunpack.c.l.b16 %v3386
    %v4614 = vunpack.c.h.b16 %v3386
    %v4615 = vunpack.c.l.b16 %v3387
    %v4616 = vunpack.c.h.b16 %v3387
    %v4617 = vunpack.c.l.b16 %v3388
    %v4618 = vunpack.c.h.b16 %v3388
    %v4619 = vunpack.c.l.b16 %v3389
    %v4620 = vunpack.c.l.b16 %v3390
    %v4621 = vunpack.c.h.b16 %v3390
    %v4622 = vunpack.c.l.b16 %v3391
    %v4623 = vunpack.c.h.b16 %v3391
    %v4624 = vunpack.c.l.b16 %v3392
    %v4625 = vunpack.c.h.b16 %v3392
    %v4626 = vunpack.c.l.b16 %v3393
    %v4627 = vunpack.c.l.b16 %v3394
    %v4628 = vunpack.c.h.b16 %v3394
    %v4629 = vunpack.c.l.b16 %v3395
    %v4630 = vunpack.c.h.b16 %v3395
    %v4631 = vunpack.c.l.b16 %v3396
    %v4632 = vunpack.c.h.b16 %v3396
    %v4633 = vunpack.c.l.b16 %v3397
    %v4634 = vunpack.c.l.b16 %v3398
    %v4635 = vunpack.c.h.b16 %v3398
    %v4636 = vunpack.c.l.b16 %v3399
    %v4637 = vunpack.c.h.b16 %v3399
    %v4638 = vunpack.c.l.b16 %v3400
    %v4639 = vunpack.c.h.b16 %v3400
    %v4640 = vunpack.c.l.b16 %v3401
    %v4641 = vunpack.c.l.b16 %v3402
    %v4642 = vunpack.c.h.b16 %v3402
    %v4643 = vunpack.c.l.b16 %v3403
    %v4644 = vunpack.c.h.b16 %v3403
    %v4645 = vunpack.c.l.b16 %v3404
    %v4646 = vunpack.c.h.b16 %v3404
    %v4647 = vunpack.c.l.b16 %v3405
    %v4648 = vunpack.c.l.b16 %v3406
    %v4649 = vunpack.c.h.b16 %v3406
    %v4650 = vunpack.c.l.b16 %v3407
    %v4651 = vunpack.c.h.b16 %v3407
    %v4652 = vunpack.c.l.b16 %v3408
    %v4653 = vunpack.c.h.b16 %v3408
    %v4654 = vunpack.c.l.b16 %v3409
    %v4655 = vunpack.c.l.b16 %v3410
    %v4656 = vunpack.c.h.b16 %v3410
    %v4657 = vunpack.c.l.b16 %v3411
    %v4658 = vunpack.c.h.b16 %v3411
    %v4659 = vunpack.c.l.b16 %v3412
    %v4660 = vunpack.c.h.b16 %v3412
    %v4661 = vunpack.c.l.b16 %v3413
    %v4662 = vunpack.c.l.b16 %v3414
    %v4663 = vunpack.c.h.b16 %v3414
    %v4664 = vunpack.c.l.b16 %v3415
    %v4665 = vunpack.c.h.b16 %v3415
    %v4666 = vunpack.c.l.b16 %v3416
    %v4667 = vunpack.c.h.b16 %v3416
    %v4668 = vunpack.c.l.b16 %v3417
    %v4669 = vunpack.c.l.b16 %v3418
    %v4670 = vunpack.c.h.b16 %v3418
    %v4671 = vunpack.c.l.b16 %v3419
    %v4672 = vunpack.c.h.b16 %v3419
    %v4673 = vunpack.c.l.b16 %v3420
    %v4674 = vunpack.c.h.b16 %v3420
    %v4675 = vunpack.c.l.b16 %v3421
    %v4676 = vunpack.c.l.b16 %v3422
    %v4677 = vunpack.c.h.b16 %v3422
    %v4678 = vunpack.c.l.b16 %v3423
    %v4679 = vunpack.c.h.b16 %v3423
    %v4680 = vunpack.c.l.b16 %v3424
    %v4681 = vunpack.c.h.b16 %v3424
    %v4682 = vunpack.c.l.b16 %v3425
    %v4683 = vunpack.c.l.b16 %v3426
    %v4684 = vunpack.c.h.b16 %v3426
    %v4685 = vunpack.c.l.b16 %v3427
    %v4686 = vunpack.c.h.b16 %v3427
    %v4687 = vunpack.c.l.b16 %v3428
    %v4688 = vunpack.c.h.b16 %v3428
    %v4689 = vunpack.c.l.b16 %v3429
    %v4690 = vunpack.c.l.b16 %v3430
    %v4691 = vunpack.c.h.b16 %v3430
    %v4692 = vunpack.c.l.b16 %v3431
    %v4693 = vunpack.c.h.b16 %v3431
    %v4694 = vunpack.c.l.b16 %v3432
    %v4695 = vunpack.c.h.b16 %v3432
    %v4696 = vunpack.c.l.b16 %v3433
    %v4697 = vunpack.c.l.b16 %v3434
    %v4698 = vunpack.c.h.b16 %v3434
    %v4699 = vunpack.c.l.b16 %v3435
    %v4700 = vunpack.c.h.b16 %v3435
    %v4701 = vunpack.c.l.b16 %v3436
    %v4702 = vunpack.c.h.b16 %v3436
    %v4703 = vunpack.c.l.b16 %v3437
    %v4704 = vunpack.c.l.b16 %v3438
    %v4705 = vunpack.c.h.b16 %v3438
    %v4706 = vunpack.c.l.b16 %v3439
    %v4707 = vunpack.c.h.b16 %v3439
    %v4708 = vunpack.c.l.b16 %v3440
    %v4709 = vunpack.c.h.b16 %v3440
    %v4710 = vunpack.c.l.b16 %v3441
    %v4711 = vpack.c.b16 %v3934, %v3927
    %v4712 = vpack.c.b16 %v3935, %v3928
    %v4713 = vpack.c.b16 %v3936, %v3929
    %v4714 = vpack.c.b16 %v3937, %v3930
    %v4715 = vpack.c.b16 %v3938, %v3931
    %v4716 = vpack.c.b16 %v3939, %v3932
    %v4717 = vpack.c.b16 %v3940, %v3933
    %v4718 = vpack.c.b16 %v3948, %v3941
    %v4719 = vpack.c.b16 %v3949, %v3942
    %v4720 = vpack.c.b16 %v3950, %v3943
    %v4721 = vpack.c.b16 %v3951, %v3944
    %v4722 = vpack.c.b16 %v3952, %v3945
    %v4723 = vpack.c.b16 %v3953, %v3946
    %v4724 = vpack.c.b16 %v3954, %v3947
    %v4725 = vpack.c.b16 %v3962, %v3955
    %v4726 = vpack.c.b16 %v3963, %v3956
    %v4727 = vpack.c.b16 %v3964, %v3957
    %v4728 = vpack.c.b16 %v3965, %v3958
    %v4729 = vpack.c.b16 %v3966, %v3959
    %v4730 = vpack.c.b16 %v3967, %v3960
    %v4731 = vpack.c.b16 %v3968, %v3961
    %v4732 = vpack.c.b16 %v3976, %v3969
    %v4733 = vpack.c.b16 %v3977, %v3970
    %v4734 = vpack.c.b16 %v3978, %v3971
    %v4735 = vpack.c.b16 %v3979, %v3972
    %v4736 = vpack.c.b16 %v3980, %v3973
    %v4737 = vpack.c.b16 %v3981, %v3974
    %v4738 = vpack.c.b16 %v3982, %v3975
    %v4739 = vpack.c.b16 %v3990, %v3983
    %v4740 = vpack.c.b16 %v3991, %v3984
    %v4741 = vpack.c.b16 %v3992, %v3985
    %v4742 = vpack.c.b16 %v3993, %v3986
    %v4743 = vpack.c.b16 %v3994, %v3987
    %v4744 = vpack.c.b16 %v3995, %v3988
    %v4745 = vpack.c.b16 %v3996, %v3989
    %v4746 = vpack.c.b16 %v4004, %v3997
    %v4747 = vpack.c.b16 %v4005, %v3998
    %v4748 = vpack.c.b16 %v4006, %v3999
    %v4749 = vpack.c.b16 %v4007, %v4000
    %v4750 = vpack.c.b16 %v4008, %v4001
    %v4751 = vpack.c.b16 %v4009, %v4002
    %v4752 = vpack.c.b16 %v4010, %v4003
    %v4753 = vpack.c.b16 %v4018, %v4011
    %v4754 = vpack.c.b16 %v4019, %v4012
    %v4755 = vpack.c.b16 %v4020, %v4013
    %v4756 = vpack.c.b16 %v4021, %v4014
    %v4757 = vpack.c.b16 %v4022, %v4015
    %v4758 = vpack.c.b16 %v4023, %v4016
    %v4759 = vpack.c.b16 %v4024, %v4017
    %v4760 = vpack.c.b16 %v4032, %v4025
    %v4761 = vpack.c.b16 %v4033, %v4026
    %v4762 = vpack.c.b16 %v4034, %v4027
    %v4763 = vpack.c.b16 %v4035, %v4028
    %v4764 = vpack.c.b16 %v4036, %v4029
    %v4765 = vpack.c.b16 %v4037, %v4030
    %v4766 = vpack.c.b16 %v4038, %v4031
    %v4767 = vpack.c.b16 %v4046, %v4039
    %v4768 = vpack.c.b16 %v4047, %v4040
    %v4769 = vpack.c.b16 %v4048, %v4041
    %v4770 = vpack.c.b16 %v4049, %v4042
    %v4771 = vpack.c.b16 %v4050, %v4043
    %v4772 = vpack.c.b16 %v4051, %v4044
    %v4773 = vpack.c.b16 %v4052, %v4045
    %v4774 = vpack.c.b16 %v4060, %v4053
    %v4775 = vpack.c.b16 %v4061, %v4054
    %v4776 = vpack.c.b16 %v4062, %v4055
    %v4777 = vpack.c.b16 %v4063, %v4056
    %v4778 = vpack.c.b16 %v4064, %v4057
    %v4779 = vpack.c.b16 %v4065, %v4058
    %v4780 = vpack.c.b16 %v4066, %v4059
    %v4781 = vpack.c.b16 %v4074, %v4067
    %v4782 = vpack.c.b16 %v4075, %v4068
    %v4783 = vpack.c.b16 %v4076, %v4069
    %v4784 = vpack.c.b16 %v4077, %v4070
    %v4785 = vpack.c.b16 %v4078, %v4071
    %v4786 = vpack.c.b16 %v4079, %v4072
    %v4787 = vpack.c.b16 %v4080, %v4073
    %v4788 = vpack.c.b16 %v4088, %v4081
    %v4789 = vpack.c.b16 %v4089, %v4082
    %v4790 = vpack.c.b16 %v4090, %v4083
    %v4791 = vpack.c.b16 %v4091, %v4084
    %v4792 = vpack.c.b16 %v4092, %v4085
    %v4793 = vpack.c.b16 %v4093, %v4086
    %v4794 = vpack.c.b16 %v4094, %v4087
    %v4795 = vpack.c.b16 %v4102, %v4095
    %v4796 = vpack.c.b16 %v4103, %v4096
    %v4797 = vpack.c.b16 %v4104, %v4097
    %v4798 = vpack.c.b16 %v4105, %v4098
    %v4799 = vpack.c.b16 %v4106, %v4099
    %v4800 = vpack.c.b16 %v4107, %v4100
    %v4801 = vpack.c.b16 %v4108, %v4101
    %v4802 = vpack.c.b16 %v4116, %v4109
    %v4803 = vpack.c.b16 %v4117, %v4110
    %v4804 = vpack.c.b16 %v4118, %v4111
    %v4805 = vpack.c.b16 %v4119, %v4112
    %v4806 = vpack.c.b16 %v4120, %v4113
    %v4807 = vpack.c.b16 %v4121, %v4114
    %v4808 = vpack.c.b16 %v4122, %v4115
    %v4809 = vpack.c.b16 %v4130, %v4123
    %v4810 = vpack.c.b16 %v4131, %v4124
    %v4811 = vpack.c.b16 %v4132, %v4125
    %v4812 = vpack.c.b16 %v4133, %v4126
    %v4813 = vpack.c.b16 %v4134, %v4127
    %v4814 = vpack.c.b16 %v4135, %v4128
    %v4815 = vpack.c.b16 %v4136, %v4129
    %v4816 = vpack.c.b16 %v4144, %v4137
    %v4817 = vpack.c.b16 %v4145, %v4138
    %v4818 = vpack.c.b16 %v4146, %v4139
    %v4819 = vpack.c.b16 %v4147, %v4140
    %v4820 = vpack.c.b16 %v4148, %v4141
    %v4821 = vpack.c.b16 %v4149, %v4142
    %v4822 = vpack.c.b16 %v4150, %v4143
    %v4823 = vpack.c.b16 %v4158, %v4151
    %v4824 = vpack.c.b16 %v4159, %v4152
    %v4825 = vpack.c.b16 %v4160, %v4153
    %v4826 = vpack.c.b16 %v4161, %v4154
    %v4827 = vpack.c.b16 %v4162, %v4155
    %v4828 = vpack.c.b16 %v4163, %v4156
    %v4829 = vpack.c.b16 %v4164, %v4157
    %v4830 = vpack.c.b16 %v4172, %v4165
    %v4831 = vpack.c.b16 %v4173, %v4166
    %v4832 = vpack.c.b16 %v4174, %v4167
    %v4833 = vpack.c.b16 %v4175, %v4168
    %v4834 = vpack.c.b16 %v4176, %v4169
    %v4835 = vpack.c.b16 %v4177, %v4170
    %v4836 = vpack.c.b16 %v4178, %v4171
    %v4837 = vpack.c.b16 %v4186, %v4179
    %v4838 = vpack.c.b16 %v4187, %v4180
    %v4839 = vpack.c.b16 %v4188, %v4181
    %v4840 = vpack.c.b16 %v4189, %v4182
    %v4841 = vpack.c.b16 %v4190, %v4183
    %v4842 = vpack.c.b16 %v4191, %v4184
    %v4843 = vpack.c.b16 %v4192, %v4185
    %v4844 = vpack.c.b16 %v4200, %v4193
    %v4845 = vpack.c.b16 %v4201, %v4194
    %v4846 = vpack.c.b16 %v4202, %v4195
    %v4847 = vpack.c.b16 %v4203, %v4196
    %v4848 = vpack.c.b16 %v4204, %v4197
    %v4849 = vpack.c.b16 %v4205, %v4198
    %v4850 = vpack.c.b16 %v4206, %v4199
    %v4851 = vpack.c.b16 %v4214, %v4207
    %v4852 = vpack.c.b16 %v4215, %v4208
    %v4853 = vpack.c.b16 %v4216, %v4209
    %v4854 = vpack.c.b16 %v4217, %v4210
    %v4855 = vpack.c.b16 %v4218, %v4211
    %v4856 = vpack.c.b16 %v4219, %v4212
    %v4857 = vpack.c.b16 %v4220, %v4213
    %v4858 = vpack.c.b16 %v4228, %v4221
    %v4859 = vpack.c.b16 %v4229, %v4222
    %v4860 = vpack.c.b16 %v4230, %v4223
    %v4861 = vpack.c.b16 %v4231, %v4224
    %v4862 = vpack.c.b16 %v4232, %v4225
    %v4863 = vpack.c.b16 %v4233, %v4226
    %v4864 = vpack.c.b16 %v4234, %v4227
    %v4865 = vpack.c.b16 %v4242, %v4235
    %v4866 = vpack.c.b16 %v4243, %v4236
    %v4867 = vpack.c.b16 %v4244, %v4237
    %v4868 = vpack.c.b16 %v4245, %v4238
    %v4869 = vpack.c.b16 %v4246, %v4239
    %v4870 = vpack.c.b16 %v4247, %v4240
    %v4871 = vpack.c.b16 %v4248, %v4241
    %v4872 = vpack.c.b16 %v4256, %v4249
    %v4873 = vpack.c.b16 %v4257, %v4250
    %v4874 = vpack.c.b16 %v4258, %v4251
    %v4875 = vpack.c.b16 %v4259, %v4252
    %v4876 = vpack.c.b16 %v4260, %v4253
    %v4877 = vpack.c.b16 %v4261, %v4254
    %v4878 = vpack.c.b16 %v4262, %v4255
    %v4879 = vpack.c.b16 %v4270, %v4263
    %v4880 = vpack.c.b16 %v4271, %v4264
    %v4881 = vpack.c.b16 %v4272, %v4265
    %v4882 = vpack.c.b16 %v4273, %v4266
    %v4883 = vpack.c.b16 %v4274, %v4267
    %v4884 = vpack.c.b16 %v4275, %v4268
    %v4885 = vpack.c.b16 %v4276, %v4269
    %v4886 = vpack.c.b16 %v4284, %v4277
    %v4887 = vpack.c.b16 %v4285, %v4278
    %v4888 = vpack.c.b16 %v4286, %v4279
    %v4889 = vpack.c.b16 %v4287, %v4280
    %v4890 = vpack.c.b16 %v4288, %v4281
    %v4891 = vpack.c.b16 %v4289, %v4282
    %v4892 = vpack.c.b16 %v4290, %v4283
    %v4893 = vpack.c.b16 %v4298, %v4291
    %v4894 = vpack.c.b16 %v4299, %v4292
    %v4895 = vpack.c.b16 %v4300, %v4293
    %v4896 = vpack.c.b16 %v4301, %v4294
    %v4897 = vpack.c.b16 %v4302, %v4295
    %v4898 = vpack.c.b16 %v4303, %v4296
    %v4899 = vpack.c.b16 %v4304, %v4297
    %v4900 = vpack.c.b16 %v4312, %v4305
    %v4901 = vpack.c.b16 %v4313, %v4306
    %v4902 = vpack.c.b16 %v4314, %v4307
    %v4903 = vpack.c.b16 %v4315, %v4308
    %v4904 = vpack.c.b16 %v4316, %v4309
    %v4905 = vpack.c.b16 %v4317, %v4310
    %v4906 = vpack.c.b16 %v4318, %v4311
    %v4907 = vpack.c.b16 %v4326, %v4319
    %v4908 = vpack.c.b16 %v4327, %v4320
    %v4909 = vpack.c.b16 %v4328, %v4321
    %v4910 = vpack.c.b16 %v4329, %v4322
    %v4911 = vpack.c.b16 %v4330, %v4323
    %v4912 = vpack.c.b16 %v4331, %v4324
    %v4913 = vpack.c.b16 %v4332, %v4325
    %v4914 = vpack.c.b16 %v4340, %v4333
    %v4915 = vpack.c.b16 %v4341, %v4334
    %v4916 = vpack.c.b16 %v4342, %v4335
    %v4917 = vpack.c.b16 %v4343, %v4336
    %v4918 = vpack.c.b16 %v4344, %v4337
    %v4919 = vpack.c.b16 %v4345, %v4338
    %v4920 = vpack.c.b16 %v4346, %v4339
    %v4921 = vpack.c.b16 %v4354, %v4347
    %v4922 = vpack.c.b16 %v4355, %v4348
    %v4923 = vpack.c.b16 %v4356, %v4349
    %v4924 = vpack.c.b16 %v4357, %v4350
    %v4925 = vpack.c.b16 %v4358, %v4351
    %v4926 = vpack.c.b16 %v4359, %v4352
    %v4927 = vpack.c.b16 %v4360, %v4353
    %v4928 = vpack.c.b16 %v4368, %v4361
    %v4929 = vpack.c.b16 %v4369, %v4362
    %v4930 = vpack.c.b16 %v4370, %v4363
    %v4931 = vpack.c.b16 %v4371, %v4364
    %v4932 = vpack.c.b16 %v4372, %v4365
    %v4933 = vpack.c.b16 %v4373, %v4366
    %v4934 = vpack.c.b16 %v4374, %v4367
    %v4935 = vpack.c.b16 %v4382, %v4375
    %v4936 = vpack.c.b16 %v4383, %v4376
    %v4937 = vpack.c.b16 %v4384, %v4377
    %v4938 = vpack.c.b16 %v4385, %v4378
    %v4939 = vpack.c.b16 %v4386, %v4379
    %v4940 = vpack.c.b16 %v4387, %v4380
    %v4941 = vpack.c.b16 %v4388, %v4381
    %v4942 = vpack.c.b16 %v4396, %v4389
    %v4943 = vpack.c.b16 %v4397, %v4390
    %v4944 = vpack.c.b16 %v4398, %v4391
    %v4945 = vpack.c.b16 %v4399, %v4392
    %v4946 = vpack.c.b16 %v4400, %v4393
    %v4947 = vpack.c.b16 %v4401, %v4394
    %v4948 = vpack.c.b16 %v4402, %v4395
    %v4949 = vpack.c.b16 %v4410, %v4403
    %v4950 = vpack.c.b16 %v4411, %v4404
    %v4951 = vpack.c.b16 %v4412, %v4405
    %v4952 = vpack.c.b16 %v4413, %v4406
    %v4953 = vpack.c.b16 %v4414, %v4407
    %v4954 = vpack.c.b16 %v4415, %v4408
    %v4955 = vpack.c.b16 %v4416, %v4409
    %v4956 = vpack.c.b16 %v4424, %v4417
    %v4957 = vpack.c.b16 %v4425, %v4418
    %v4958 = vpack.c.b16 %v4426, %v4419
    %v4959 = vpack.c.b16 %v4427, %v4420
    %v4960 = vpack.c.b16 %v4428, %v4421
    %v4961 = vpack.c.b16 %v4429, %v4422
    %v4962 = vpack.c.b16 %v4430, %v4423
    %v4963 = vpack.c.b16 %v4438, %v4431
    %v4964 = vpack.c.b16 %v4439, %v4432
    %v4965 = vpack.c.b16 %v4440, %v4433
    %v4966 = vpack.c.b16 %v4441, %v4434
    %v4967 = vpack.c.b16 %v4442, %v4435
    %v4968 = vpack.c.b16 %v4443, %v4436
    %v4969 = vpack.c.b16 %v4444, %v4437
    %v4970 = vpack.c.b16 %v4452, %v4445
    %v4971 = vpack.c.b16 %v4453, %v4446
    %v4972 = vpack.c.b16 %v4454, %v4447
    %v4973 = vpack.c.b16 %v4455, %v4448
    %v4974 = vpack.c.b16 %v4456, %v4449
    %v4975 = vpack.c.b16 %v4457, %v4450
    %v4976 = vpack.c.b16 %v4458, %v4451
    %v4977 = vpack.c.b16 %v4466, %v4459
    %v4978 = vpack.c.b16 %v4467, %v4460
    %v4979 = vpack.c.b16 %v4468, %v4461
    %v4980 = vpack.c.b16 %v4469, %v4462
    %v4981 = vpack.c.b16 %v4470, %v4463
    %v4982 = vpack.c.b16 %v4471, %v4464
    %v4983 = vpack.c.b16 %v4472, %v4465
    %v4984 = vpack.c.b16 %v4480, %v4473
    %v4985 = vpack.c.b16 %v4481, %v4474
    %v4986 = vpack.c.b16 %v4482, %v4475
    %v4987 = vpack.c.b16 %v4483, %v4476
    %v4988 = vpack.c.b16 %v4484, %v4477
    %v4989 = vpack.c.b16 %v4485, %v4478
    %v4990 = vpack.c.b16 %v4486, %v4479
    %v4991 = vpack.c.b16 %v4494, %v4487
    %v4992 = vpack.c.b16 %v4495, %v4488
    %v4993 = vpack.c.b16 %v4496, %v4489
    %v4994 = vpack.c.b16 %v4497, %v4490
    %v4995 = vpack.c.b16 %v4498, %v4491
    %v4996 = vpack.c.b16 %v4499, %v4492
    %v4997 = vpack.c.b16 %v4500, %v4493
    %v4998 = vpack.c.b16 %v4508, %v4501
    %v4999 = vpack.c.b16 %v4509, %v4502
    %v5000 = vpack.c.b16 %v4510, %v4503
    %v5001 = vpack.c.b16 %v4511, %v4504
    %v5002 = vpack.c.b16 %v4512, %v4505
    %v5003 = vpack.c.b16 %v4513, %v4506
    %v5004 = vpack.c.b16 %v4514, %v4507
    %v5005 = vpack.c.b16 %v4522, %v4515
    %v5006 = vpack.c.b16 %v4523, %v4516
    %v5007 = vpack.c.b16 %v4524, %v4517
    %v5008 = vpack.c.b16 %v4525, %v4518
    %v5009 = vpack.c.b16 %v4526, %v4519
    %v5010 = vpack.c.b16 %v4527, %v4520
    %v5011 = vpack.c.b16 %v4528, %v4521
    %v5012 = vpack.c.b16 %v4536, %v4529
    %v5013 = vpack.c.b16 %v4537, %v4530
    %v5014 = vpack.c.b16 %v4538, %v4531
    %v5015 = vpack.c.b16 %v4539, %v4532
    %v5016 = vpack.c.b16 %v4540, %v4533
    %v5017 = vpack.c.b16 %v4541, %v4534
    %v5018 = vpack.c.b16 %v4542, %v4535
    %v5019 = vpack.c.b16 %v4550, %v4543
    %v5020 = vpack.c.b16 %v4551, %v4544
    %v5021 = vpack.c.b16 %v4552, %v4545
    %v5022 = vpack.c.b16 %v4553, %v4546
    %v5023 = vpack.c.b16 %v4554, %v4547
    %v5024 = vpack.c.b16 %v4555, %v4548
    %v5025 = vpack.c.b16 %v4556, %v4549
    %v5026 = vpack.c.b16 %v4564, %v4557
    %v5027 = vpack.c.b16 %v4565, %v4558
    %v5028 = vpack.c.b16 %v4566, %v4559
    %v5029 = vpack.c.b16 %v4567, %v4560
    %v5030 = vpack.c.b16 %v4568, %v4561
    %v5031 = vpack.c.b16 %v4569, %v4562
    %v5032 = vpack.c.b16 %v4570, %v4563
    %v5033 = vpack.c.b16 %v4578, %v4571
    %v5034 = vpack.c.b16 %v4579, %v4572
    %v5035 = vpack.c.b16 %v4580, %v4573
    %v5036 = vpack.c.b16 %v4581, %v4574
    %v5037 = vpack.c.b16 %v4582, %v4575
    %v5038 = vpack.c.b16 %v4583, %v4576
    %v5039 = vpack.c.b16 %v4584, %v4577
    %v5040 = vpack.c.b16 %v4592, %v4585
    %v5041 = vpack.c.b16 %v4593, %v4586
    %v5042 = vpack.c.b16 %v4594, %v4587
    %v5043 = vpack.c.b16 %v4595, %v4588
    %v5044 = vpack.c.b16 %v4596, %v4589
    %v5045 = vpack.c.b16 %v4597, %v4590
    %v5046 = vpack.c.b16 %v4598, %v4591
    %v5047 = vpack.c.b16 %v4606, %v4599
    %v5048 = vpack.c.b16 %v4607, %v4600
    %v5049 = vpack.c.b16 %v4608, %v4601
    %v5050 = vpack.c.b16 %v4609, %v4602
    %v5051 = vpack.c.b16 %v4610, %v4603
    %v5052 = vpack.c.b16 %v4611, %v4604
    %v5053 = vpack.c.b16 %v4612, %v4605
    %v5054 = vpack.c.b16 %v4620, %v4613
    %v5055 = vpack.c.b16 %v4621, %v4614
    %v5056 = vpack.c.b16 %v4622, %v4615
    %v5057 = vpack.c.b16 %v4623, %v4616
    %v5058 = vpack.c.b16 %v4624, %v4617
    %v5059 = vpack.c.b16 %v4625, %v4618
    %v5060 = vpack.c.b16 %v4626, %v4619
    %v5061 = vpack.c.b16 %v4634, %v4627
    %v5062 = vpack.c.b16 %v4635, %v4628
    %v5063 = vpack.c.b16 %v4636, %v4629
    %v5064 = vpack.c.b16 %v4637, %v4630
    %v5065 = vpack.c.b16 %v4638, %v4631
    %v5066 = vpack.c.b16 %v4639, %v4632
    %v5067 = vpack.c.b16 %v4640, %v4633
    %v5068 = vpack.c.b16 %v4648, %v4641
    %v5069 = vpack.c.b16 %v4649, %v4642
    %v5070 = vpack.c.b16 %v4650, %v4643
    %v5071 = vpack.c.b16 %v4651, %v4644
    %v5072 = vpack.c.b16 %v4652, %v4645
    %v5073 = vpack.c.b16 %v4653, %v4646
    %v5074 = vpack.c.b16 %v4654, %v4647
    %v5075 = vpack.c.b16 %v4662, %v4655
    %v5076 = vpack.c.b16 %v4663, %v4656
    %v5077 = vpack.c.b16 %v4664, %v4657
    %v5078 = vpack.c.b16 %v4665, %v4658
    %v5079 = vpack.c.b16 %v4666, %v4659
    %v5080 = vpack.c.b16 %v4667, %v4660
    %v5081 = vpack.c.b16 %v4668, %v4661
    %v5082 = vpack.c.b16 %v4676, %v4669
    %v5083 = vpack.c.b16 %v4677, %v4670
    %v5084 = vpack.c.b16 %v4678, %v4671
    %v5085 = vpack.c.b16 %v4679, %v4672
    %v5086 = vpack.c.b16 %v4680, %v4673
    %v5087 = vpack.c.b16 %v4681, %v4674
    %v5088 = vpack.c.b16 %v4682, %v4675
    %v5089 = vpack.c.b16 %v4690, %v4683
    %v5090 = vpack.c.b16 %v4691, %v4684
    %v5091 = vpack.c.b16 %v4692, %v4685
    %v5092 = vpack.c.b16 %v4693, %v4686
    %v5093 = vpack.c.b16 %v4694, %v4687
    %v5094 = vpack.c.b16 %v4695, %v4688
    %v5095 = vpack.c.b16 %v4696, %v4689
    %v5096 = vpack.c.b16 %v4704, %v4697
    %v5097 = vpack.c.b16 %v4705, %v4698
    %v5098 = vpack.c.b16 %v4706, %v4699
    %v5099 = vpack.c.b16 %v4707, %v4700
    %v5100 = vpack.c.b16 %v4708, %v4701
    %v5101 = vpack.c.b16 %v4709, %v4702
    %v5102 = vpack.c.b16 %v4710, %v4703
    %5495 = vmatprep.subr.bf16.mxu0 %v4712
    %5496 = vmatpush1.bf16.msra.mxu0 %v4711
    %5497 = vmatprep.subr.bf16.mxu0 %v4719
    %5498 = vmatpush1.bf16.msra.mxu0 %v4718
    %5499 = vmatprep.subr.bf16.mxu0 %v4726
    %5500 = vmatpush1.bf16.msra.mxu0 %v4725
    %5501 = vmatprep.subr.bf16.mxu0 %v4733
    %5502 = vmatpush1.bf16.msra.mxu0 %v4732
    %5503 = vmatprep.subr.bf16.mxu0 %v4740
    %5504 = vmatpush1.bf16.msra.mxu0 %v4739
    %5505 = vmatprep.subr.bf16.mxu0 %v4747
    %5506 = vmatpush1.bf16.msra.mxu0 %v4746
    %5507 = vmatprep.subr.bf16.mxu0 %v4754
    %5508 = vmatpush1.bf16.msra.mxu0 %v4753
    %5509 = vmatprep.subr.bf16.mxu0 %v4761
    %5510 = vmatpush1.bf16.msra.mxu0 %v4760
    %5511 = vmatprep.subr.bf16.mxu0 %v4768
    %5512 = vmatpush1.bf16.msra.mxu0 %v4767
    %5513 = vmatprep.subr.bf16.mxu0 %v4775
    %5514 = vmatpush1.bf16.msra.mxu0 %v4774
    %5515 = vmatprep.subr.bf16.mxu0 %v4782
    %5516 = vmatpush1.bf16.msra.mxu0 %v4781
    %5517 = vmatprep.subr.bf16.mxu0 %v4789
    %5518 = vmatpush1.bf16.msra.mxu0 %v4788
    %5519 = vmatprep.subr.bf16.mxu0 %v4796
    %5520 = vmatpush1.bf16.msra.mxu0 %v4795
    %5521 = vmatprep.subr.bf16.mxu0 %v4803
    %5522 = vmatpush1.bf16.msra.mxu0 %v4802
    %5523 = vmatprep.subr.bf16.mxu0 %v4810
    %5524 = vmatpush1.bf16.msra.mxu0 %v4809
    %5525 = vmatprep.subr.bf16.mxu0 %v4817
    %5526 = vmatpush1.bf16.msra.mxu0 %v4816
    %5527 = vmatprep.mubr.bf16.mxu0 %v2988
    %5528 = vmatmul.mubr.bf16.gmra.mrb[0].mxu0 %v2987
    %v5529 = vpop.f32.mrb[0].mxu0
    %v5530 = vadd.f32 %v3447, %v5529
    %v5531 = vpop.f32.mrb[0].mxu0
    %v5532 = vadd.f32 %v3451, %v5531
    %v5533 = vpop.f32.mrb[0].mxu0
    %v5534 = vpop.f32.mrb[0].mxu0
    %5535 = vdwg.mxu0
    %5536 = vmatprep.subr.bf16.mxu0 %v4824
    %5537 = vmatpush1.bf16.msra.mxu0 %v4823
    %5538 = vmatprep.subr.bf16.mxu0 %v4831
    %5539 = vmatpush1.bf16.msra.mxu0 %v4830
    %5540 = vmatprep.subr.bf16.mxu0 %v4838
    %5541 = vmatpush1.bf16.msra.mxu0 %v4837
    %5542 = vmatprep.subr.bf16.mxu0 %v4845
    %5543 = vmatpush1.bf16.msra.mxu0 %v4844
    %5544 = vmatprep.subr.bf16.mxu0 %v4852
    %5545 = vmatpush1.bf16.msra.mxu0 %v4851
    %5546 = vmatprep.subr.bf16.mxu0 %v4859
    %5547 = vmatpush1.bf16.msra.mxu0 %v4858
    %5548 = vmatprep.subr.bf16.mxu0 %v4866
    %5549 = vmatpush1.bf16.msra.mxu0 %v4865
    %5550 = vmatprep.subr.bf16.mxu0 %v4873
    %5551 = vmatpush1.bf16.msra.mxu0 %v4872
    %5552 = vmatprep.subr.bf16.mxu0 %v4880
    %5553 = vmatpush1.bf16.msra.mxu0 %v4879
    %5554 = vmatprep.subr.bf16.mxu0 %v4887
    %5555 = vmatpush1.bf16.msra.mxu0 %v4886
    %5556 = vmatprep.subr.bf16.mxu0 %v4894
    %5557 = vmatpush1.bf16.msra.mxu0 %v4893
    %5558 = vmatprep.subr.bf16.mxu0 %v4901
    %5559 = vmatpush1.bf16.msra.mxu0 %v4900
    %5560 = vmatprep.subr.bf16.mxu0 %v4908
    %5561 = vmatpush1.bf16.msra.mxu0 %v4907
    %5562 = vmatprep.subr.bf16.mxu0 %v4915
    %5563 = vmatpush1.bf16.msra.mxu0 %v4914
    %5564 = vmatprep.subr.bf16.mxu0 %v4922
    %5565 = vmatpush1.bf16.msra.mxu0 %v4921
    %5566 = vmatprep.subr.bf16.mxu0 %v4929
    %5567 = vmatpush1.bf16.msra.mxu0 %v4928
    %5568 = vmatprep.mubr.bf16.mxu0 %v2990
    %5569 = vmatmul.mubr.bf16.gmra.mrb[0].mxu0 %v2989
    %v5570 = vpop.f32.mrb[0].mxu0
    %v5571 = vadd.f32 %v5530, %v5570
    %v5572 = vpop.f32.mrb[0].mxu0
    %v5573 = vadd.f32 %v5532, %v5572
    %v5574 = vpop.f32.mrb[0].mxu0
    %v5575 = vpop.f32.mrb[0].mxu0
    %5576 = vdwg.mxu0
    %5577 = vmatprep.subr.bf16.mxu0 %v4936
    %5578 = vmatpush1.bf16.msra.mxu0 %v4935
    %5579 = vmatprep.subr.bf16.mxu0 %v4943
    %5580 = vmatpush1.bf16.msra.mxu0 %v4942
    %5581 = vmatprep.subr.bf16.mxu0 %v4950
    %5582 = vmatpush1.bf16.msra.mxu0 %v4949
    %5583 = vmatprep.subr.bf16.mxu0 %v4957
    %5584 = vmatpush1.bf16.msra.mxu0 %v4956
    %5585 = vmatprep.subr.bf16.mxu0 %v4964
    %5586 = vmatpush1.bf16.msra.mxu0 %v4963
    %5587 = vmatprep.subr.bf16.mxu0 %v4971
    %5588 = vmatpush1.bf16.msra.mxu0 %v4970
    %5589 = vmatprep.subr.bf16.mxu0 %v4978
    %5590 = vmatpush1.bf16.msra.mxu0 %v4977
    %5591 = vmatprep.subr.bf16.mxu0 %v4985
    %5592 = vmatpush1.bf16.msra.mxu0 %v4984
    %5593 = vmatprep.subr.bf16.mxu0 %v4992
    %5594 = vmatpush1.bf16.msra.mxu0 %v4991
    %5595 = vmatprep.subr.bf16.mxu0 %v4999
    %5596 = vmatpush1.bf16.msra.mxu0 %v4998
    %5597 = vmatprep.subr.bf16.mxu0 %v5006
    %5598 = vmatpush1.bf16.msra.mxu0 %v5005
    %5599 = vmatprep.subr.bf16.mxu0 %v5013
    %5600 = vmatpush1.bf16.msra.mxu0 %v5012
    %5601 = vmatprep.subr.bf16.mxu0 %v5020
    %5602 = vmatpush1.bf16.msra.mxu0 %v5019
    %5603 = vmatprep.subr.bf16.mxu0 %v5027
    %5604 = vmatpush1.bf16.msra.mxu0 %v5026
    %5605 = vmatprep.subr.bf16.mxu0 %v5034
    %5606 = vmatpush1.bf16.msra.mxu0 %v5033
    %5607 = vmatprep.subr.bf16.mxu0 %v5041
    %5608 = vmatpush1.bf16.msra.mxu0 %v5040
    %5609 = vmatprep.mubr.bf16.mxu0 %v2992
    %5610 = vmatmul.mubr.bf16.gmra.mrb[0].mxu0 %v2991
    %v5611 = vpop.f32.mrb[0].mxu0
    %v5612 = vadd.f32 %v5571, %v5611
    %v5613 = vpop.f32.mrb[0].mxu0
    %v5614 = vadd.f32 %v5573, %v5613
    %v5615 = vpop.f32.mrb[0].mxu0
    %v5616 = vpop.f32.mrb[0].mxu0
    %5617 = vdwg.mxu0
    %5618 = vmatprep.subr.bf16.mxu0 %v5048
    %5619 = vmatpush1.bf16.msra.mxu0 %v5047
    %5620 = vmatprep.subr.bf16.mxu0 %v5055
    %5621 = vmatpush1.bf16.msra.mxu0 %v5054
    %5622 = vmatprep.subr.bf16.mxu0 %v5062
    %5623 = vmatpush1.bf16.msra.mxu0 %v5061
    %5624 = vmatprep.subr.bf16.mxu0 %v5069
    %5625 = vmatpush1.bf16.msra.mxu0 %v5068
    %5626 = vmatprep.subr.bf16.mxu0 %v5076
    %5627 = vmatpush1.bf16.msra.mxu0 %v5075
    %5628 = vmatprep.subr.bf16.mxu0 %v5083
    %5629 = vmatpush1.bf16.msra.mxu0 %v5082
    %5630 = vmatprep.subr.bf16.mxu0 %v5090
    %5631 = vmatpush1.bf16.msra.mxu0 %v5089
    %5632 = vmatprep.subr.bf16.mxu0 %v5097
    %5633 = vmatpush1.bf16.msra.mxu0 %v5096
    %5634 = vmatprep.subr.bf16.mxu0 0
    %5635 = vmatpush1.bf16.msra.mxu0 0
    %5636 = vmatprep.subr.bf16.mxu0 0
    %5637 = vmatpush1.bf16.msra.mxu0 0
    %5638 = vmatprep.subr.bf16.mxu0 0
    %5639 = vmatpush1.bf16.msra.mxu0 0
    %5640 = vmatprep.subr.bf16.mxu0 0
    %5641 = vmatpush1.bf16.msra.mxu0 0
    %5642 = vmatprep.subr.bf16.mxu0 0
    %5643 = vmatpush1.bf16.msra.mxu0 0
    %5644 = vmatprep.subr.bf16.mxu0 0
    %5645 = vmatpush1.bf16.msra.mxu0 0
    %5646 = vmatprep.subr.bf16.mxu0 0
    %5647 = vmatpush1.bf16.msra.mxu0 0
    %5648 = vmatprep.subr.bf16.mxu0 0
    %5649 = vmatpush1.bf16.msra.mxu0 0
    %5650 = vmatprep.mubr.bf16.mxu0 0
    %5651 = vmatmul.mubr.bf16.gmra.mrb[0].mxu0 %v2993
    %v5652 = vpop.f32.mrb[0].mxu0
    %v5653 = vadd.f32 %v5612, %v5652
    %v5654 = vpop.f32.mrb[0].mxu0
    %v5655 = vadd.f32 %v5614, %v5654
    %v5656 = vpop.f32.mrb[0].mxu0
    %v5657 = vpop.f32.mrb[0].mxu0
    %5658 = vdwg.mxu0
    %5659 = vmatprep.subr.bf16.mxu0 %v4714
    %5660 = vmatpush1.bf16.msra.mxu0 %v4713
    %5661 = vmatprep.subr.bf16.mxu0 %v4721
    %5662 = vmatpush1.bf16.msra.mxu0 %v4720
    %5663 = vmatprep.subr.bf16.mxu0 %v4728
    %5664 = vmatpush1.bf16.msra.mxu0 %v4727
    %5665 = vmatprep.subr.bf16.mxu0 %v4735
    %5666 = vmatpush1.bf16.msra.mxu0 %v4734
    %5667 = vmatprep.subr.bf16.mxu0 %v4742
    %5668 = vmatpush1.bf16.msra.mxu0 %v4741
    %5669 = vmatprep.subr.bf16.mxu0 %v4749
    %5670 = vmatpush1.bf16.msra.mxu0 %v4748
    %5671 = vmatprep.subr.bf16.mxu0 %v4756
    %5672 = vmatpush1.bf16.msra.mxu0 %v4755
    %5673 = vmatprep.subr.bf16.mxu0 %v4763
    %5674 = vmatpush1.bf16.msra.mxu0 %v4762
    %5675 = vmatprep.subr.bf16.mxu0 %v4770
    %5676 = vmatpush1.bf16.msra.mxu0 %v4769
    %5677 = vmatprep.subr.bf16.mxu0 %v4777
    %5678 = vmatpush1.bf16.msra.mxu0 %v4776
    %5679 = vmatprep.subr.bf16.mxu0 %v4784
    %5680 = vmatpush1.bf16.msra.mxu0 %v4783
    %5681 = vmatprep.subr.bf16.mxu0 %v4791
    %5682 = vmatpush1.bf16.msra.mxu0 %v4790
    %5683 = vmatprep.subr.bf16.mxu0 %v4798
    %5684 = vmatpush1.bf16.msra.mxu0 %v4797
    %5685 = vmatprep.subr.bf16.mxu0 %v4805
    %5686 = vmatpush1.bf16.msra.mxu0 %v4804
    %5687 = vmatprep.subr.bf16.mxu0 %v4812
    %5688 = vmatpush1.bf16.msra.mxu0 %v4811
    %5689 = vmatprep.subr.bf16.mxu0 %v4819
    %5690 = vmatpush1.bf16.msra.mxu0 %v4818
    %5691 = vmatprep.mubr.bf16.mxu0 %v2988
    %5692 = vmatmul.mubr.bf16.gmra.mrb[0].mxu0 %v2987
    %v5693 = vpop.f32.mrb[0].mxu0
    %v5694 = vadd.f32 %v3455, %v5693
    %v5695 = vpop.f32.mrb[0].mxu0
    %v5696 = vadd.f32 %v3459, %v5695
    %v5697 = vpop.f32.mrb[0].mxu0
    %v5698 = vpop.f32.mrb[0].mxu0
    %5699 = vdwg.mxu0
    %5700 = vmatprep.subr.bf16.mxu0 %v4826
    %5701 = vmatpush1.bf16.msra.mxu0 %v4825
    %5702 = vmatprep.subr.bf16.mxu0 %v4833
    %5703 = vmatpush1.bf16.msra.mxu0 %v4832
    %5704 = vmatprep.subr.bf16.mxu0 %v4840
    %5705 = vmatpush1.bf16.msra.mxu0 %v4839
    %5706 = vmatprep.subr.bf16.mxu0 %v4847
    %5707 = vmatpush1.bf16.msra.mxu0 %v4846
    %5708 = vmatprep.subr.bf16.mxu0 %v4854
    %5709 = vmatpush1.bf16.msra.mxu0 %v4853
    %5710 = vmatprep.subr.bf16.mxu0 %v4861
    %5711 = vmatpush1.bf16.msra.mxu0 %v4860
    %5712 = vmatprep.subr.bf16.mxu0 %v4868
    %5713 = vmatpush1.bf16.msra.mxu0 %v4867
    %5714 = vmatprep.subr.bf16.mxu0 %v4875
    %5715 = vmatpush1.bf16.msra.mxu0 %v4874
    %5716 = vmatprep.subr.bf16.mxu0 %v4882
    %5717 = vmatpush1.bf16.msra.mxu0 %v4881
    %5718 = vmatprep.subr.bf16.mxu0 %v4889
    %5719 = vmatpush1.bf16.msra.mxu0 %v4888
    %5720 = vmatprep.subr.bf16.mxu0 %v4896
    %5721 = vmatpush1.bf16.msra.mxu0 %v4895
    %5722 = vmatprep.subr.bf16.mxu0 %v4903
    %5723 = vmatpush1.bf16.msra.mxu0 %v4902
    %5724 = vmatprep.subr.bf16.mxu0 %v4910
    %5725 = vmatpush1.bf16.msra.mxu0 %v4909
    %5726 = vmatprep.subr.bf16.mxu0 %v4917
    %5727 = vmatpush1.bf16.msra.mxu0 %v4916
    %5728 = vmatprep.subr.bf16.mxu0 %v4924
    %5729 = vmatpush1.bf16.msra.mxu0 %v4923
    %5730 = vmatprep.subr.bf16.mxu0 %v4931
    %5731 = vmatpush1.bf16.msra.mxu0 %v4930
    %5732 = vmatprep.mubr.bf16.mxu0 %v2990
    %5733 = vmatmul.mubr.bf16.gmra.mrb[0].mxu0 %v2989
    %v5734 = vpop.f32.mrb[0].mxu0
    %v5735 = vadd.f32 %v5694, %v5734
    %v5736 = vpop.f32.mrb[0].mxu0
    %v5737 = vadd.f32 %v5696, %v5736
    %v5738 = vpop.f32.mrb[0].mxu0
    %v5739 = vpop.f32.mrb[0].mxu0
    %5740 = vdwg.mxu0
    %5741 = vmatprep.subr.bf16.mxu0 %v4938
    %5742 = vmatpush1.bf16.msra.mxu0 %v4937
    %5743 = vmatprep.subr.bf16.mxu0 %v4945
    %5744 = vmatpush1.bf16.msra.mxu0 %v4944
    %5745 = vmatprep.subr.bf16.mxu0 %v4952
    %5746 = vmatpush1.bf16.msra.mxu0 %v4951
    %5747 = vmatprep.subr.bf16.mxu0 %v4959
    %5748 = vmatpush1.bf16.msra.mxu0 %v4958
    %5749 = vmatprep.subr.bf16.mxu0 %v4966
    %5750 = vmatpush1.bf16.msra.mxu0 %v4965
    %5751 = vmatprep.subr.bf16.mxu0 %v4973
    %5752 = vmatpush1.bf16.msra.mxu0 %v4972
    %5753 = vmatprep.subr.bf16.mxu0 %v4980
    %5754 = vmatpush1.bf16.msra.mxu0 %v4979
    %5755 = vmatprep.subr.bf16.mxu0 %v4987
    %5756 = vmatpush1.bf16.msra.mxu0 %v4986
    %5757 = vmatprep.subr.bf16.mxu0 %v4994
    %5758 = vmatpush1.bf16.msra.mxu0 %v4993
    %5759 = vmatprep.subr.bf16.mxu0 %v5001
    %5760 = vmatpush1.bf16.msra.mxu0 %v5000
    %5761 = vmatprep.subr.bf16.mxu0 %v5008
    %5762 = vmatpush1.bf16.msra.mxu0 %v5007
    %5763 = vmatprep.subr.bf16.mxu0 %v5015
    %5764 = vmatpush1.bf16.msra.mxu0 %v5014
    %5765 = vmatprep.subr.bf16.mxu0 %v5022
    %5766 = vmatpush1.bf16.msra.mxu0 %v5021
    %5767 = vmatprep.subr.bf16.mxu0 %v5029
    %5768 = vmatpush1.bf16.msra.mxu0 %v5028
    %5769 = vmatprep.subr.bf16.mxu0 %v5036
    %5770 = vmatpush1.bf16.msra.mxu0 %v5035
    %5771 = vmatprep.subr.bf16.mxu0 %v5043
    %5772 = vmatpush1.bf16.msra.mxu0 %v5042
    %5773 = vmatprep.mubr.bf16.mxu0 %v2992
    %5774 = vmatmul.mubr.bf16.gmra.mrb[0].mxu0 %v2991
    %v5775 = vpop.f32.mrb[0].mxu0
    %v5776 = vadd.f32 %v5735, %v5775
    %v5777 = vpop.f32.mrb[0].mxu0
    %v5778 = vadd.f32 %v5737, %v5777
    %v5779 = vpop.f32.mrb[0].mxu0
    %v5780 = vpop.f32.mrb[0].mxu0
    %5781 = vdwg.mxu0
    %5782 = vmatprep.subr.bf16.mxu0 %v5050
    %5783 = vmatpush1.bf16.msra.mxu0 %v5049
    %5784 = vmatprep.subr.bf16.mxu0 %v5057
    %5785 = vmatpush1.bf16.msra.mxu0 %v5056
    %5786 = vmatprep.subr.bf16.mxu0 %v5064
    %5787 = vmatpush1.bf16.msra.mxu0 %v5063
    %5788 = vmatprep.subr.bf16.mxu0 %v5071
    %5789 = vmatpush1.bf16.msra.mxu0 %v5070
    %5790 = vmatprep.subr.bf16.mxu0 %v5078
    %5791 = vmatpush1.bf16.msra.mxu0 %v5077
    %5792 = vmatprep.subr.bf16.mxu0 %v5085
    %5793 = vmatpush1.bf16.msra.mxu0 %v5084
    %5794 = vmatprep.subr.bf16.mxu0 %v5092
    %5795 = vmatpush1.bf16.msra.mxu0 %v5091
    %5796 = vmatprep.subr.bf16.mxu0 %v5099
    %5797 = vmatpush1.bf16.msra.mxu0 %v5098
    %5798 = vmatprep.subr.bf16.mxu0 0
    %5799 = vmatpush1.bf16.msra.mxu0 0
    %5800 = vmatprep.subr.bf16.mxu0 0
    %5801 = vmatpush1.bf16.msra.mxu0 0
    %5802 = vmatprep.subr.bf16.mxu0 0
    %5803 = vmatpush1.bf16.msra.mxu0 0
    %5804 = vmatprep.subr.bf16.mxu0 0
    %5805 = vmatpush1.bf16.msra.mxu0 0
    %5806 = vmatprep.subr.bf16.mxu0 0
    %5807 = vmatpush1.bf16.msra.mxu0 0
    %5808 = vmatprep.subr.bf16.mxu0 0
    %5809 = vmatpush1.bf16.msra.mxu0 0
    %5810 = vmatprep.subr.bf16.mxu0 0
    %5811 = vmatpush1.bf16.msra.mxu0 0
    %5812 = vmatprep.subr.bf16.mxu0 0
    %5813 = vmatpush1.bf16.msra.mxu0 0
    %5814 = vmatprep.mubr.bf16.mxu0 0
    %5815 = vmatmul.mubr.bf16.gmra.mrb[0].mxu0 %v2993
    %v5816 = vpop.f32.mrb[0].mxu0
    %v5817 = vadd.f32 %v5776, %v5816
    %v5818 = vpop.f32.mrb[0].mxu0
    %v5819 = vadd.f32 %v5778, %v5818
    %v5820 = vpop.f32.mrb[0].mxu0
    %v5821 = vpop.f32.mrb[0].mxu0
    %5822 = vdwg.mxu0
    %5823 = vmatprep.subr.bf16.mxu0 %v4716
    %5824 = vmatpush1.bf16.msra.mxu0 %v4715
    %5825 = vmatprep.subr.bf16.mxu0 %v4723
    %5826 = vmatpush1.bf16.msra.mxu0 %v4722
    %5827 = vmatprep.subr.bf16.mxu0 %v4730
    %5828 = vmatpush1.bf16.msra.mxu0 %v4729
    %5829 = vmatprep.subr.bf16.mxu0 %v4737
    %5830 = vmatpush1.bf16.msra.mxu0 %v4736
    %5831 = vmatprep.subr.bf16.mxu0 %v4744
    %5832 = vmatpush1.bf16.msra.mxu0 %v4743
    %5833 = vmatprep.subr.bf16.mxu0 %v4751
    %5834 = vmatpush1.bf16.msra.mxu0 %v4750
    %5835 = vmatprep.subr.bf16.mxu0 %v4758
    %5836 = vmatpush1.bf16.msra.mxu0 %v4757
    %5837 = vmatprep.subr.bf16.mxu0 %v4765
    %5838 = vmatpush1.bf16.msra.mxu0 %v4764
    %5839 = vmatprep.subr.bf16.mxu0 %v4772
    %5840 = vmatpush1.bf16.msra.mxu0 %v4771
    %5841 = vmatprep.subr.bf16.mxu0 %v4779
    %5842 = vmatpush1.bf16.msra.mxu0 %v4778
    %5843 = vmatprep.subr.bf16.mxu0 %v4786
    %5844 = vmatpush1.bf16.msra.mxu0 %v4785
    %5845 = vmatprep.subr.bf16.mxu0 %v4793
    %5846 = vmatpush1.bf16.msra.mxu0 %v4792
    %5847 = vmatprep.subr.bf16.mxu0 %v4800
    %5848 = vmatpush1.bf16.msra.mxu0 %v4799
    %5849 = vmatprep.subr.bf16.mxu0 %v4807
    %5850 = vmatpush1.bf16.msra.mxu0 %v4806
    %5851 = vmatprep.subr.bf16.mxu0 %v4814
    %5852 = vmatpush1.bf16.msra.mxu0 %v4813
    %5853 = vmatprep.subr.bf16.mxu0 %v4821
    %5854 = vmatpush1.bf16.msra.mxu0 %v4820
    %5855 = vmatprep.mubr.bf16.mxu0 %v2988
    %5856 = vmatmul.mubr.bf16.gmra.mrb[0].mxu0 %v2987
    %v5857 = vpop.f32.mrb[0].mxu0
    %v5858 = vadd.f32 %v3463, %v5857
    %v5859 = vpop.f32.mrb[0].mxu0
    %v5860 = vadd.f32 %v3467, %v5859
    %v5861 = vpop.f32.mrb[0].mxu0
    %v5862 = vpop.f32.mrb[0].mxu0
    %5863 = vdwg.mxu0
    %5864 = vmatprep.subr.bf16.mxu0 %v4828
    %5865 = vmatpush1.bf16.msra.mxu0 %v4827
    %5866 = vmatprep.subr.bf16.mxu0 %v4835
    %5867 = vmatpush1.bf16.msra.mxu0 %v4834
    %5868 = vmatprep.subr.bf16.mxu0 %v4842
    %5869 = vmatpush1.bf16.msra.mxu0 %v4841
    %5870 = vmatprep.subr.bf16.mxu0 %v4849
    %5871 = vmatpush1.bf16.msra.mxu0 %v4848
    %5872 = vmatprep.subr.bf16.mxu0 %v4856
    %5873 = vmatpush1.bf16.msra.mxu0 %v4855
    %5874 = vmatprep.subr.bf16.mxu0 %v4863
    %5875 = vmatpush1.bf16.msra.mxu0 %v4862
    %5876 = vmatprep.subr.bf16.mxu0 %v4870
    %5877 = vmatpush1.bf16.msra.mxu0 %v4869
    %5878 = vmatprep.subr.bf16.mxu0 %v4877
    %5879 = vmatpush1.bf16.msra.mxu0 %v4876
    %5880 = vmatprep.subr.bf16.mxu0 %v4884
    %5881 = vmatpush1.bf16.msra.mxu0 %v4883
    %5882 = vmatprep.subr.bf16.mxu0 %v4891
    %5883 = vmatpush1.bf16.msra.mxu0 %v4890
    %5884 = vmatprep.subr.bf16.mxu0 %v4898
    %5885 = vmatpush1.bf16.msra.mxu0 %v4897
    %5886 = vmatprep.subr.bf16.mxu0 %v4905
    %5887 = vmatpush1.bf16.msra.mxu0 %v4904
    %5888 = vmatprep.subr.bf16.mxu0 %v4912
    %5889 = vmatpush1.bf16.msra.mxu0 %v4911
    %5890 = vmatprep.subr.bf16.mxu0 %v4919
    %5891 = vmatpush1.bf16.msra.mxu0 %v4918
    %5892 = vmatprep.subr.bf16.mxu0 %v4926
    %5893 = vmatpush1.bf16.msra.mxu0 %v4925
    %5894 = vmatprep.subr.bf16.mxu0 %v4933
    %5895 = vmatpush1.bf16.msra.mxu0 %v4932
    %5896 = vmatprep.mubr.bf16.mxu0 %v2990
    %5897 = vmatmul.mubr.bf16.gmra.mrb[0].mxu0 %v2989
    %v5898 = vpop.f32.mrb[0].mxu0
    %v5899 = vadd.f32 %v5858, %v5898
    %v5900 = vpop.f32.mrb[0].mxu0
    %v5901 = vadd.f32 %v5860, %v5900
    %v5902 = vpop.f32.mrb[0].mxu0
    %v5903 = vpop.f32.mrb[0].mxu0
    %5904 = vdwg.mxu0
    %5905 = vmatprep.subr.bf16.mxu0 %v4940
    %5906 = vmatpush1.bf16.msra.mxu0 %v4939
    %5907 = vmatprep.subr.bf16.mxu0 %v4947
    %5908 = vmatpush1.bf16.msra.mxu0 %v4946
    %5909 = vmatprep.subr.bf16.mxu0 %v4954
    %5910 = vmatpush1.bf16.msra.mxu0 %v4953
    %5911 = vmatprep.subr.bf16.mxu0 %v4961
    %5912 = vmatpush1.bf16.msra.mxu0 %v4960
    %5913 = vmatprep.subr.bf16.mxu0 %v4968
    %5914 = vmatpush1.bf16.msra.mxu0 %v4967
    %5915 = vmatprep.subr.bf16.mxu0 %v4975
    %5916 = vmatpush1.bf16.msra.mxu0 %v4974
    %5917 = vmatprep.subr.bf16.mxu0 %v4982
    %5918 = vmatpush1.bf16.msra.mxu0 %v4981
    %5919 = vmatprep.subr.bf16.mxu0 %v4989
    %5920 = vmatpush1.bf16.msra.mxu0 %v4988
    %5921 = vmatprep.subr.bf16.mxu0 %v4996
    %5922 = vmatpush1.bf16.msra.mxu0 %v4995
    %5923 = vmatprep.subr.bf16.mxu0 %v5003
    %5924 = vmatpush1.bf16.msra.mxu0 %v5002
    %5925 = vmatprep.subr.bf16.mxu0 %v5010
    %5926 = vmatpush1.bf16.msra.mxu0 %v5009
    %5927 = vmatprep.subr.bf16.mxu0 %v5017
    %5928 = vmatpush1.bf16.msra.mxu0 %v5016
    %5929 = vmatprep.subr.bf16.mxu0 %v5024
    %5930 = vmatpush1.bf16.msra.mxu0 %v5023
    %5931 = vmatprep.subr.bf16.mxu0 %v5031
    %5932 = vmatpush1.bf16.msra.mxu0 %v5030
    %5933 = vmatprep.subr.bf16.mxu0 %v5038
    %5934 = vmatpush1.bf16.msra.mxu0 %v5037
    %5935 = vmatprep.subr.bf16.mxu0 %v5045
    %5936 = vmatpush1.bf16.msra.mxu0 %v5044
    %5937 = vmatprep.mubr.bf16.mxu0 %v2992
    %5938 = vmatmul.mubr.bf16.gmra.mrb[0].mxu0 %v2991
    %v5939 = vpop.f32.mrb[0].mxu0
    %v5940 = vadd.f32 %v5899, %v5939
    %v5941 = vpop.f32.mrb[0].mxu0
    %v5942 = vadd.f32 %v5901, %v5941
    %v5943 = vpop.f32.mrb[0].mxu0
    %v5944 = vpop.f32.mrb[0].mxu0
    %5945 = vdwg.mxu0
    %5946 = vmatprep.subr.bf16.mxu0 %v5052
    %5947 = vmatpush1.bf16.msra.mxu0 %v5051
    %5948 = vmatprep.subr.bf16.mxu0 %v5059
    %5949 = vmatpush1.bf16.msra.mxu0 %v5058
    %5950 = vmatprep.subr.bf16.mxu0 %v5066
    %5951 = vmatpush1.bf16.msra.mxu0 %v5065
    %5952 = vmatprep.subr.bf16.mxu0 %v5073
    %5953 = vmatpush1.bf16.msra.mxu0 %v5072
    %5954 = vmatprep.subr.bf16.mxu0 %v5080
    %5955 = vmatpush1.bf16.msra.mxu0 %v5079
    %5956 = vmatprep.subr.bf16.mxu0 %v5087
    %5957 = vmatpush1.bf16.msra.mxu0 %v5086
    %5958 = vmatprep.subr.bf16.mxu0 %v5094
    %5959 = vmatpush1.bf16.msra.mxu0 %v5093
    %5960 = vmatprep.subr.bf16.mxu0 %v5101
    %5961 = vmatpush1.bf16.msra.mxu0 %v5100
    %5962 = vmatprep.subr.bf16.mxu0 0
    %5963 = vmatpush1.bf16.msra.mxu0 0
    %5964 = vmatprep.subr.bf16.mxu0 0
    %5965 = vmatpush1.bf16.msra.mxu0 0
    %5966 = vmatprep.subr.bf16.mxu0 0
    %5967 = vmatpush1.bf16.msra.mxu0 0
    %5968 = vmatprep.subr.bf16.mxu0 0
    %5969 = vmatpush1.bf16.msra.mxu0 0
    %5970 = vmatprep.subr.bf16.mxu0 0
    %5971 = vmatpush1.bf16.msra.mxu0 0
    %5972 = vmatprep.subr.bf16.mxu0 0
    %5973 = vmatpush1.bf16.msra.mxu0 0
    %5974 = vmatprep.subr.bf16.mxu0 0
    %5975 = vmatpush1.bf16.msra.mxu0 0
    %5976 = vmatprep.subr.bf16.mxu0 0
    %5977 = vmatpush1.bf16.msra.mxu0 0
    %5978 = vmatprep.mubr.bf16.mxu0 0
    %5979 = vmatmul.mubr.bf16.gmra.mrb[0].mxu0 %v2993
    %v5980 = vpop.f32.mrb[0].mxu0
    %v5981 = vadd.f32 %v5940, %v5980
    %v5982 = vpop.f32.mrb[0].mxu0
    %v5983 = vadd.f32 %v5942, %v5982
    %v5984 = vpop.f32.mrb[0].mxu0
    %v5985 = vpop.f32.mrb[0].mxu0
    %5986 = vdwg.mxu0
    %5987 = vmatprep.subr.bf16.mxu0 0
    %5988 = vmatpush1.bf16.msra.mxu0 %v4717
    %5989 = vmatprep.subr.bf16.mxu0 0
    %5990 = vmatpush1.bf16.msra.mxu0 %v4724
    %5991 = vmatprep.subr.bf16.mxu0 0
    %5992 = vmatpush1.bf16.msra.mxu0 %v4731
    %5993 = vmatprep.subr.bf16.mxu0 0
    %5994 = vmatpush1.bf16.msra.mxu0 %v4738
    %5995 = vmatprep.subr.bf16.mxu0 0
    %5996 = vmatpush1.bf16.msra.mxu0 %v4745
    %5997 = vmatprep.subr.bf16.mxu0 0
    %5998 = vmatpush1.bf16.msra.mxu0 %v4752
    %5999 = vmatprep.subr.bf16.mxu0 0
    %6000 = vmatpush1.bf16.msra.mxu0 %v4759
    %6001 = vmatprep.subr.bf16.mxu0 0
    %6002 = vmatpush1.bf16.msra.mxu0 %v4766
    %6003 = vmatprep.subr.bf16.mxu0 0
    %6004 = vmatpush1.bf16.msra.mxu0 %v4773
    %6005 = vmatprep.subr.bf16.mxu0 0
    %6006 = vmatpush1.bf16.msra.mxu0 %v4780
    %6007 = vmatprep.subr.bf16.mxu0 0
    %6008 = vmatpush1.bf16.msra.mxu0 %v4787
    %6009 = vmatprep.subr.bf16.mxu0 0
    %6010 = vmatpush1.bf16.msra.mxu0 %v4794
    %6011 = vmatprep.subr.bf16.mxu0 0
    %6012 = vmatpush1.bf16.msra.mxu0 %v4801
    %6013 = vmatprep.subr.bf16.mxu0 0
    %6014 = vmatpush1.bf16.msra.mxu0 %v4808
    %6015 = vmatprep.subr.bf16.mxu0 0
    %6016 = vmatpush1.bf16.msra.mxu0 %v4815
    %6017 = vmatprep.subr.bf16.mxu0 0
    %6018 = vmatpush1.bf16.msra.mxu0 %v4822
    %6019 = vmatprep.mubr.bf16.mxu0 %v2988
    %6020 = vmatmul.mubr.bf16.gmra.mrb[0].mxu0 %v2987
    %v6021 = vpop.f32.mrb[0].mxu0
    %v6022 = vadd.f32 %v3471, %v6021
    %v6023 = vpop.f32.mrb[0].mxu0
    %v6024 = vpop.f32.mrb[0].mxu0
    %v6025 = vpop.f32.mrb[0].mxu0
    %6026 = vdwg.mxu0
    %6027 = vmatprep.subr.bf16.mxu0 0
    %6028 = vmatpush1.bf16.msra.mxu0 %v4829
    %6029 = vmatprep.subr.bf16.mxu0 0
    %6030 = vmatpush1.bf16.msra.mxu0 %v4836
    %6031 = vmatprep.subr.bf16.mxu0 0
    %6032 = vmatpush1.bf16.msra.mxu0 %v4843
    %6033 = vmatprep.subr.bf16.mxu0 0
    %6034 = vmatpush1.bf16.msra.mxu0 %v4850
    %6035 = vmatprep.subr.bf16.mxu0 0
    %6036 = vmatpush1.bf16.msra.mxu0 %v4857
    %6037 = vmatprep.subr.bf16.mxu0 0
    %6038 = vmatpush1.bf16.msra.mxu0 %v4864
    %6039 = vmatprep.subr.bf16.mxu0 0
    %6040 = vmatpush1.bf16.msra.mxu0 %v4871
    %6041 = vmatprep.subr.bf16.mxu0 0
    %6042 = vmatpush1.bf16.msra.mxu0 %v4878
    %6043 = vmatprep.subr.bf16.mxu0 0
    %6044 = vmatpush1.bf16.msra.mxu0 %v4885
    %6045 = vmatprep.subr.bf16.mxu0 0
    %6046 = vmatpush1.bf16.msra.mxu0 %v4892
    %6047 = vmatprep.subr.bf16.mxu0 0
    %6048 = vmatpush1.bf16.msra.mxu0 %v4899
    %6049 = vmatprep.subr.bf16.mxu0 0
    %6050 = vmatpush1.bf16.msra.mxu0 %v4906
    %6051 = vmatprep.subr.bf16.mxu0 0
    %6052 = vmatpush1.bf16.msra.mxu0 %v4913
    %6053 = vmatprep.subr.bf16.mxu0 0
    %6054 = vmatpush1.bf16.msra.mxu0 %v4920
    %6055 = vmatprep.subr.bf16.mxu0 0
    %6056 = vmatpush1.bf16.msra.mxu0 %v4927
    %6057 = vmatprep.subr.bf16.mxu0 0
    %6058 = vmatpush1.bf16.msra.mxu0 %v4934
    %6059 = vmatprep.mubr.bf16.mxu0 %v2990
    %6060 = vmatmul.mubr.bf16.gmra.mrb[0].mxu0 %v2989
    %v6061 = vpop.f32.mrb[0].mxu0
    %v6062 = vadd.f32 %v6022, %v6061
    %v6063 = vpop.f32.mrb[0].mxu0
    %v6064 = vpop.f32.mrb[0].mxu0
    %v6065 = vpop.f32.mrb[0].mxu0
    %6066 = vdwg.mxu0
    %6067 = vmatprep.subr.bf16.mxu0 0
    %6068 = vmatpush1.bf16.msra.mxu0 %v4941
    %6069 = vmatprep.subr.bf16.mxu0 0
    %6070 = vmatpush1.bf16.msra.mxu0 %v4948
    %6071 = vmatprep.subr.bf16.mxu0 0
    %6072 = vmatpush1.bf16.msra.mxu0 %v4955
    %6073 = vmatprep.subr.bf16.mxu0 0
    %6074 = vmatpush1.bf16.msra.mxu0 %v4962
    %6075 = vmatprep.subr.bf16.mxu0 0
    %6076 = vmatpush1.bf16.msra.mxu0 %v4969
    %6077 = vmatprep.subr.bf16.mxu0 0
    %6078 = vmatpush1.bf16.msra.mxu0 %v4976
    %6079 = vmatprep.subr.bf16.mxu0 0
    %6080 = vmatpush1.bf16.msra.mxu0 %v4983
    %6081 = vmatprep.subr.bf16.mxu0 0
    %6082 = vmatpush1.bf16.msra.mxu0 %v4990
    %6083 = vmatprep.subr.bf16.mxu0 0
    %6084 = vmatpush1.bf16.msra.mxu0 %v4997
    %6085 = vmatprep.subr.bf16.mxu0 0
    %6086 = vmatpush1.bf16.msra.mxu0 %v5004
    %6087 = vmatprep.subr.bf16.mxu0 0
    %6088 = vmatpush1.bf16.msra.mxu0 %v5011
    %6089 = vmatprep.subr.bf16.mxu0 0
    %6090 = vmatpush1.bf16.msra.mxu0 %v5018
    %6091 = vmatprep.subr.bf16.mxu0 0
    %6092 = vmatpush1.bf16.msra.mxu0 %v5025
    %6093 = vmatprep.subr.bf16.mxu0 0
    %6094 = vmatpush1.bf16.msra.mxu0 %v5032
    %6095 = vmatprep.subr.bf16.mxu0 0
    %6096 = vmatpush1.bf16.msra.mxu0 %v5039
    %6097 = vmatprep.subr.bf16.mxu0 0
    %6098 = vmatpush1.bf16.msra.mxu0 %v5046
    %6099 = vmatprep.mubr.bf16.mxu0 %v2992
    %6100 = vmatmul.mubr.bf16.gmra.mrb[0].mxu0 %v2991
    %v6101 = vpop.f32.mrb[0].mxu0
    %v6102 = vadd.f32 %v6062, %v6101
    %v6103 = vpop.f32.mrb[0].mxu0
    %v6104 = vpop.f32.mrb[0].mxu0
    %v6105 = vpop.f32.mrb[0].mxu0
    %6106 = vdwg.mxu0
    %6107 = vmatprep.subr.bf16.mxu0 0
    %6108 = vmatpush1.bf16.msra.mxu0 %v5053
    %6109 = vmatprep.subr.bf16.mxu0 0
    %6110 = vmatpush1.bf16.msra.mxu0 %v5060
    %6111 = vmatprep.subr.bf16.mxu0 0
    %6112 = vmatpush1.bf16.msra.mxu0 %v5067
    %6113 = vmatprep.subr.bf16.mxu0 0
    %6114 = vmatpush1.bf16.msra.mxu0 %v5074
    %6115 = vmatprep.subr.bf16.mxu0 0
    %6116 = vmatpush1.bf16.msra.mxu0 %v5081
    %6117 = vmatprep.subr.bf16.mxu0 0
    %6118 = vmatpush1.bf16.msra.mxu0 %v5088
    %6119 = vmatprep.subr.bf16.mxu0 0
    %6120 = vmatpush1.bf16.msra.mxu0 %v5095
    %6121 = vmatprep.subr.bf16.mxu0 0
    %6122 = vmatpush1.bf16.msra.mxu0 %v5102
    %6123 = vmatprep.subr.bf16.mxu0 0
    %6124 = vmatpush1.bf16.msra.mxu0 0
    %6125 = vmatprep.subr.bf16.mxu0 0
    %6126 = vmatpush1.bf16.msra.mxu0 0
    %6127 = vmatprep.subr.bf16.mxu0 0
    %6128 = vmatpush1.bf16.msra.mxu0 0
    %6129 = vmatprep.subr.bf16.mxu0 0
    %6130 = vmatpush1.bf16.msra.mxu0 0
    %6131 = vmatprep.subr.bf16.mxu0 0
    %6132 = vmatpush1.bf16.msra.mxu0 0
    %6133 = vmatprep.subr.bf16.mxu0 0
    %6134 = vmatpush1.bf16.msra.mxu0 0
    %6135 = vmatprep.subr.bf16.mxu0 0
    %6136 = vmatpush1.bf16.msra.mxu0 0
    %6137 = vmatprep.subr.bf16.mxu0 0
    %6138 = vmatpush1.bf16.msra.mxu0 0
    %6139 = vmatprep.mubr.bf16.mxu0 0
    %6140 = vmatmul.mubr.bf16.gmra.mrb[0].mxu0 %v2993
    %v6141 = vpop.f32.mrb[0].mxu0
    %v6142 = vadd.f32 %v6102, %v6141
    %v6143 = vpop.f32.mrb[0].mxu0
    %v6144 = vpop.f32.mrb[0].mxu0
    %v6145 = vpop.f32.mrb[0].mxu0
    %6146 = vdwg.mxu0
    %v6147 = vmax.f32 %v5653, 0.0
    %v6148 = vmax.f32 %v5655, 0.0
    %v6149 = vmax.f32 %v5817, 0.0
    %v6150 = vmax.f32 %v5819, 0.0
    %v6151 = vmax.f32 %v5981, 0.0
    %v6152 = vmax.f32 %v5983, 0.0
    %v6153 = vmax.f32 %v6142, 0.0
    %v6154 = vpack.c.bf16 %v6147, %v6147
    %v6155 = vpack.c.bf16 %v6148, %v6148
    %v6156 = vpack.c.bf16 %v6149, %v6149
    %v6157 = vpack.c.bf16 %v6150, %v6150
    %v6158 = vpack.c.bf16 %v6151, %v6151
    %v6159 = vpack.c.bf16 %v6152, %v6152
    %v6160 = vpack.c.bf16 %v6153, %v6153
    %v6161 = vld [vmem:[#allocation9] sm:$0xf]
    %v6162 = vld [vmem:[#allocation9 + $0x4] sm:$0xf]
    %v6163 = vld [vmem:[#allocation9 + $0x8] sm:$0xf]
    %v6164 = vld [vmem:[#allocation9 + $0xc] sm:$0xf]
    %v6165 = vld [vmem:[#allocation9 + $0x10] sm:$0xf]
    %v6166 = vld [vmem:[#allocation9 + $0x14] sm:$0xf]
    %v6167 = vld [vmem:[#allocation9 + $0x18] sm:$0xf]
    %v6168 = vld [vmem:[#allocation9 + $0x1c] sm:$0xf]
    %v6169 = vld [vmem:[#allocation9 + $0x20] sm:$0xf]
    %v6170 = vld [vmem:[#allocation9 + $0x24] sm:$0xf]
    %v6171 = vld [vmem:[#allocation9 + $0x28] sm:$0xf]
    %v6172 = vld [vmem:[#allocation9 + $0x2c] sm:$0xf]
    %v6173 = vld [vmem:[#allocation9 + $0x30] sm:$0xf]
    %v6174 = vld [vmem:[#allocation9 + $0x34] sm:$0xf]
    %v6175 = vld [vmem:[#allocation9 + $0x38] sm:$0xf]
    %v6176 = vld [vmem:[#allocation9 + $0x3c] sm:$0xf]
    %v6177 = vld [vmem:[#allocation9 + $0x40] sm:$0xf]
    %v6178 = vld [vmem:[#allocation9 + $0x44] sm:$0xf]
    %v6179 = vld [vmem:[#allocation9 + $0x48] sm:$0xf]
    %v6180 = vld [vmem:[#allocation9 + $0x4c] sm:$0xf]
    %v6181 = vld [vmem:[#allocation9 + $0x50] sm:$0xf]
    %v6182 = vld [vmem:[#allocation9 + $0x54] sm:$0xf]
    %v6183 = vld [vmem:[#allocation9 + $0x58] sm:$0xf]
    %v6184 = vld [vmem:[#allocation9 + $0x5c] sm:$0xf]
    %v6185 = vld [vmem:[#allocation9 + $0x60] sm:$0xf]
    %v6186 = vld [vmem:[#allocation9 + $0x64] sm:$0xf]
    %v6187 = vld [vmem:[#allocation9 + $0x68] sm:$0xf]
    %v6188 = vld [vmem:[#allocation9 + $0x6c] sm:$0xf]
    %v6189 = vld [vmem:[#allocation9 + $0x70] sm:$0xf]
    %v6190 = vld [vmem:[#allocation9 + $0x74] sm:$0xf]
    %v6191 = vld [vmem:[#allocation9 + $0x78] sm:$0xf]
    %v6192 = vld [vmem:[#allocation9 + $0x7c] sm:$0xf]
    %v6193 = vld [vmem:[#allocation9 + $0x80] sm:$0xf]
    %v6194 = vld [vmem:[#allocation9 + $0x84] sm:$0xf]
    %v6195 = vld [vmem:[#allocation9 + $0x88] sm:$0xf]
    %v6196 = vld [vmem:[#allocation9 + $0x8c] sm:$0xf]
    %v6197 = vld [vmem:[#allocation9 + $0x90] sm:$0xf]
    %v6198 = vld [vmem:[#allocation9 + $0x94] sm:$0xf]
    %v6199 = vld [vmem:[#allocation9 + $0x98] sm:$0xf]
    %v6200 = vld [vmem:[#allocation9 + $0x9c] sm:$0xf]
    %v6201 = vld [vmem:[#allocation9 + $0xa0] sm:$0xf]
    %v6202 = vld [vmem:[#allocation9 + $0xa4] sm:$0xf]
    %v6203 = vld [vmem:[#allocation9 + $0xa8] sm:$0xf]
    %v6204 = vld [vmem:[#allocation9 + $0xac] sm:$0xf]
    %v6205 = vld [vmem:[#allocation9 + $0xb0] sm:$0xf]
    %v6206 = vld [vmem:[#allocation9 + $0xb4] sm:$0xf]
    %v6207 = vld [vmem:[#allocation9 + $0xb8] sm:$0xf]
    %v6208 = vld [vmem:[#allocation9 + $0xbc] sm:$0xf]
    %v6209 = vld [vmem:[#allocation9 + $0xc0] sm:$0xf]
    %v6210 = vld [vmem:[#allocation9 + $0xc4] sm:$0xf]
    %v6211 = vld [vmem:[#allocation9 + $0xc8] sm:$0xf]
    %v6212 = vld [vmem:[#allocation9 + $0xcc] sm:$0xf]
    %v6213 = vld [vmem:[#allocation9 + $0xd0] sm:$0xf]
    %v6214 = vld [vmem:[#allocation9 + $0xd4] sm:$0xf]
    %v6215 = vld [vmem:[#allocation9 + $0xd8] sm:$0xf]
    %v6216 = vld [vmem:[#allocation9 + $0xdc] sm:$0xf]
    %v6217 = vld [vmem:[#allocation9 + $0xe0] sm:$0xf]
    %v6218 = vld [vmem:[#allocation9 + $0xe4] sm:$0xf]
    %v6219 = vld [vmem:[#allocation9 + $0xe8] sm:$0xf]
    %v6220 = vld [vmem:[#allocation9 + $0xec] sm:$0xf]
    %v6221 = vld [vmem:[#allocation9 + $0xf0] sm:$0xf]
    %v6222 = vld [vmem:[#allocation9 + $0xf4] sm:$0xf]
    %v6223 = vld [vmem:[#allocation9 + $0xf8] sm:$0xf]
    %v6224 = vld [vmem:[#allocation9 + $0xfc] sm:$0xf]
    %v6225 = vld [vmem:[#allocation9 + $0x100] sm:$0xf]
    %v6226 = vld [vmem:[#allocation9 + $0x104] sm:$0xf]
    %v6227 = vld [vmem:[#allocation9 + $0x108] sm:$0xf]
    %v6228 = vld [vmem:[#allocation9 + $0x10c] sm:$0xf]
    %v6229 = vld [vmem:[#allocation9 + $0x110] sm:$0xf]
    %v6230 = vld [vmem:[#allocation9 + $0x114] sm:$0xf]
    %v6231 = vld [vmem:[#allocation9 + $0x118] sm:$0xf]
    %v6232 = vld [vmem:[#allocation9 + $0x11c] sm:$0xf]
    %v6233 = vld [vmem:[#allocation9 + $0x120] sm:$0xf]
    %v6234 = vld [vmem:[#allocation9 + $0x124] sm:$0xf]
    %v6235 = vld [vmem:[#allocation9 + $0x128] sm:$0xf]
    %v6236 = vld [vmem:[#allocation9 + $0x12c] sm:$0xf]
    %v6237 = vld [vmem:[#allocation9 + $0x130] sm:$0xf]
    %v6238 = vld [vmem:[#allocation9 + $0x134] sm:$0xf]
    %v6239 = vld [vmem:[#allocation9 + $0x138] sm:$0xf]
    %v6240 = vld [vmem:[#allocation9 + $0x13c] sm:$0xf]
    %v6241 = vld [vmem:[#allocation9 + $0x140] sm:$0xf]
    %v6242 = vld [vmem:[#allocation9 + $0x144] sm:$0xf]
    %v6243 = vld [vmem:[#allocation9 + $0x148] sm:$0xf]
    %v6244 = vld [vmem:[#allocation9 + $0x14c] sm:$0xf]
    %v6245 = vld [vmem:[#allocation9 + $0x150] sm:$0xf]
    %v6246 = vld [vmem:[#allocation9 + $0x154] sm:$0xf]
    %v6247 = vld [vmem:[#allocation9 + $0x158] sm:$0xf]
    %v6248 = vld [vmem:[#allocation9 + $0x15c] sm:$0xf]
    %v6249 = vld [vmem:[#allocation9 + $0x160] sm:$0xf]
    %v6250 = vld [vmem:[#allocation9 + $0x164] sm:$0xf]
    %v6251 = vld [vmem:[#allocation9 + $0x168] sm:$0xf]
    %v6252 = vld [vmem:[#allocation9 + $0x16c] sm:$0xf]
    %v6253 = vld [vmem:[#allocation9 + $0x170] sm:$0xf]
    %v6254 = vld [vmem:[#allocation9 + $0x174] sm:$0xf]
    %v6255 = vld [vmem:[#allocation9 + $0x178] sm:$0xf]
    %v6256 = vld [vmem:[#allocation9 + $0x17c] sm:$0xf]
    %v6257 = vld [vmem:[#allocation9 + $0x180] sm:$0xf]
    %v6258 = vld [vmem:[#allocation9 + $0x184] sm:$0xf]
    %v6259 = vld [vmem:[#allocation9 + $0x188] sm:$0xf]
    %v6260 = vld [vmem:[#allocation9 + $0x18c] sm:$0xf]
    %v6261 = vld [vmem:[#allocation9 + $0x190] sm:$0xf]
    %v6262 = vld [vmem:[#allocation9 + $0x194] sm:$0xf]
    %v6263 = vld [vmem:[#allocation9 + $0x198] sm:$0xf]
    %v6264 = vld [vmem:[#allocation9 + $0x19c] sm:$0xf]
    %v6265 = vld [vmem:[#allocation9 + $0x1a0] sm:$0xf]
    %v6266 = vld [vmem:[#allocation9 + $0x1a4] sm:$0xf]
    %v6267 = vld [vmem:[#allocation9 + $0x1a8] sm:$0xf]
    %v6268 = vld [vmem:[#allocation9 + $0x1ac] sm:$0xf]
    %v6269 = vld [vmem:[#allocation9 + $0x1b0] sm:$0xf]
    %v6270 = vld [vmem:[#allocation9 + $0x1b4] sm:$0xf]
    %v6271 = vld [vmem:[#allocation9 + $0x1b8] sm:$0xf]
    %v6272 = vld [vmem:[#allocation9 + $0x1bc] sm:$0xf]
    %v6273 = vld [vmem:[#allocation10] sm:$0x1]
    %v6275 = vlaneseq
    %v6276 = vshrl.u32 %v6275, 7
    %v6277 = vsub.s32 0, %v6276
    %v6278 = vrot.slane %v6273, %v6277
    %v6392 = vunpack.c.l.b16 %v6161
    %v6393 = vunpack.c.l.b16 %v6162
    %v6394 = vunpack.c.l.b16 %v6163
    %v6395 = vunpack.c.l.b16 %v6164
    %v6396 = vunpack.c.l.b16 %v6165
    %v6397 = vunpack.c.l.b16 %v6166
    %v6398 = vunpack.c.l.b16 %v6167
    %v6399 = vunpack.c.l.b16 %v6168
    %v6400 = vunpack.c.l.b16 %v6169
    %v6401 = vunpack.c.l.b16 %v6170
    %v6402 = vunpack.c.l.b16 %v6171
    %v6403 = vunpack.c.l.b16 %v6172
    %v6404 = vunpack.c.l.b16 %v6173
    %v6405 = vunpack.c.l.b16 %v6174
    %v6406 = vunpack.c.l.b16 %v6175
    %v6407 = vunpack.c.l.b16 %v6176
    %v6408 = vunpack.c.l.b16 %v6177
    %v6409 = vunpack.c.l.b16 %v6178
    %v6410 = vunpack.c.l.b16 %v6179
    %v6411 = vunpack.c.l.b16 %v6180
    %v6412 = vunpack.c.l.b16 %v6181
    %v6413 = vunpack.c.l.b16 %v6182
    %v6414 = vunpack.c.l.b16 %v6183
    %v6415 = vunpack.c.l.b16 %v6184
    %v6416 = vunpack.c.l.b16 %v6185
    %v6417 = vunpack.c.l.b16 %v6186
    %v6418 = vunpack.c.l.b16 %v6187
    %v6419 = vunpack.c.l.b16 %v6188
    %v6420 = vunpack.c.l.b16 %v6189
    %v6421 = vunpack.c.l.b16 %v6190
    %v6422 = vunpack.c.l.b16 %v6191
    %v6423 = vunpack.c.l.b16 %v6192
    %v6424 = vunpack.c.l.b16 %v6193
    %v6425 = vunpack.c.l.b16 %v6194
    %v6426 = vunpack.c.l.b16 %v6195
    %v6427 = vunpack.c.l.b16 %v6196
    %v6428 = vunpack.c.l.b16 %v6197
    %v6429 = vunpack.c.l.b16 %v6198
    %v6430 = vunpack.c.l.b16 %v6199
    %v6431 = vunpack.c.l.b16 %v6200
    %v6432 = vunpack.c.l.b16 %v6201
    %v6433 = vunpack.c.l.b16 %v6202
    %v6434 = vunpack.c.l.b16 %v6203
    %v6435 = vunpack.c.l.b16 %v6204
    %v6436 = vunpack.c.l.b16 %v6205
    %v6437 = vunpack.c.l.b16 %v6206
    %v6438 = vunpack.c.l.b16 %v6207
    %v6439 = vunpack.c.l.b16 %v6208
    %v6440 = vunpack.c.l.b16 %v6209
    %v6441 = vunpack.c.l.b16 %v6210
    %v6442 = vunpack.c.l.b16 %v6211
    %v6443 = vunpack.c.l.b16 %v6212
    %v6444 = vunpack.c.l.b16 %v6213
    %v6445 = vunpack.c.l.b16 %v6214
    %v6446 = vunpack.c.l.b16 %v6215
    %v6447 = vunpack.c.l.b16 %v6216
    %v6448 = vunpack.c.l.b16 %v6217
    %v6449 = vunpack.c.l.b16 %v6218
    %v6450 = vunpack.c.l.b16 %v6219
    %v6451 = vunpack.c.l.b16 %v6220
    %v6452 = vunpack.c.l.b16 %v6221
    %v6453 = vunpack.c.l.b16 %v6222
    %v6454 = vunpack.c.l.b16 %v6223
    %v6455 = vunpack.c.l.b16 %v6224
    %v6456 = vunpack.c.l.b16 %v6225
    %v6457 = vunpack.c.l.b16 %v6226
    %v6458 = vunpack.c.l.b16 %v6227
    %v6459 = vunpack.c.l.b16 %v6228
    %v6460 = vunpack.c.l.b16 %v6229
    %v6461 = vunpack.c.l.b16 %v6230
    %v6462 = vunpack.c.l.b16 %v6231
    %v6463 = vunpack.c.l.b16 %v6232
    %v6464 = vunpack.c.l.b16 %v6233
    %v6465 = vunpack.c.l.b16 %v6234
    %v6466 = vunpack.c.l.b16 %v6235
    %v6467 = vunpack.c.l.b16 %v6236
    %v6468 = vunpack.c.l.b16 %v6237
    %v6469 = vunpack.c.l.b16 %v6238
    %v6470 = vunpack.c.l.b16 %v6239
    %v6471 = vunpack.c.l.b16 %v6240
    %v6472 = vunpack.c.l.b16 %v6241
    %v6473 = vunpack.c.l.b16 %v6242
    %v6474 = vunpack.c.l.b16 %v6243
    %v6475 = vunpack.c.l.b16 %v6244
    %v6476 = vunpack.c.l.b16 %v6245
    %v6477 = vunpack.c.l.b16 %v6246
    %v6478 = vunpack.c.l.b16 %v6247
    %v6479 = vunpack.c.l.b16 %v6248
    %v6480 = vunpack.c.l.b16 %v6249
    %v6481 = vunpack.c.l.b16 %v6250
    %v6482 = vunpack.c.l.b16 %v6251
    %v6483 = vunpack.c.l.b16 %v6252
    %v6484 = vunpack.c.l.b16 %v6253
    %v6485 = vunpack.c.l.b16 %v6254
    %v6486 = vunpack.c.l.b16 %v6255
    %v6487 = vunpack.c.l.b16 %v6256
    %v6488 = vunpack.c.l.b16 %v6257
    %v6489 = vunpack.c.l.b16 %v6258
    %v6490 = vunpack.c.l.b16 %v6259
    %v6491 = vunpack.c.l.b16 %v6260
    %v6492 = vunpack.c.l.b16 %v6261
    %v6493 = vunpack.c.l.b16 %v6262
    %v6494 = vunpack.c.l.b16 %v6263
    %v6495 = vunpack.c.l.b16 %v6264
    %v6496 = vunpack.c.l.b16 %v6265
    %v6497 = vunpack.c.l.b16 %v6266
    %v6498 = vunpack.c.l.b16 %v6267
    %v6499 = vunpack.c.l.b16 %v6268
    %v6500 = vunpack.c.l.b16 %v6269
    %v6501 = vunpack.c.l.b16 %v6270
    %v6502 = vunpack.c.l.b16 %v6271
    %v6503 = vunpack.c.l.b16 %v6272
    %v6504 = vpack.c.b16 %v6393, %v6392
    %v6505 = vpack.c.b16 %v6395, %v6394
    %v6506 = vpack.c.b16 %v6397, %v6396
    %v6507 = vpack.c.b16 %v6399, %v6398
    %v6508 = vpack.c.b16 %v6401, %v6400
    %v6509 = vpack.c.b16 %v6403, %v6402
    %v6510 = vpack.c.b16 %v6405, %v6404
    %v6511 = vpack.c.b16 %v6407, %v6406
    %v6512 = vpack.c.b16 %v6409, %v6408
    %v6513 = vpack.c.b16 %v6411, %v6410
    %v6514 = vpack.c.b16 %v6413, %v6412
    %v6515 = vpack.c.b16 %v6415, %v6414
    %v6516 = vpack.c.b16 %v6417, %v6416
    %v6517 = vpack.c.b16 %v6419, %v6418
    %v6518 = vpack.c.b16 %v6421, %v6420
    %v6519 = vpack.c.b16 %v6423, %v6422
    %v6520 = vpack.c.b16 %v6425, %v6424
    %v6521 = vpack.c.b16 %v6427, %v6426
    %v6522 = vpack.c.b16 %v6429, %v6428
    %v6523 = vpack.c.b16 %v6431, %v6430
    %v6524 = vpack.c.b16 %v6433, %v6432
    %v6525 = vpack.c.b16 %v6435, %v6434
    %v6526 = vpack.c.b16 %v6437, %v6436
    %v6527 = vpack.c.b16 %v6439, %v6438
    %v6528 = vpack.c.b16 %v6441, %v6440
    %v6529 = vpack.c.b16 %v6443, %v6442
    %v6530 = vpack.c.b16 %v6445, %v6444
    %v6531 = vpack.c.b16 %v6447, %v6446
    %v6532 = vpack.c.b16 %v6449, %v6448
    %v6533 = vpack.c.b16 %v6451, %v6450
    %v6534 = vpack.c.b16 %v6453, %v6452
    %v6535 = vpack.c.b16 %v6455, %v6454
    %v6536 = vpack.c.b16 %v6457, %v6456
    %v6537 = vpack.c.b16 %v6459, %v6458
    %v6538 = vpack.c.b16 %v6461, %v6460
    %v6539 = vpack.c.b16 %v6463, %v6462
    %v6540 = vpack.c.b16 %v6465, %v6464
    %v6541 = vpack.c.b16 %v6467, %v6466
    %v6542 = vpack.c.b16 %v6469, %v6468
    %v6543 = vpack.c.b16 %v6471, %v6470
    %v6544 = vpack.c.b16 %v6473, %v6472
    %v6545 = vpack.c.b16 %v6475, %v6474
    %v6546 = vpack.c.b16 %v6477, %v6476
    %v6547 = vpack.c.b16 %v6479, %v6478
    %v6548 = vpack.c.b16 %v6481, %v6480
    %v6549 = vpack.c.b16 %v6483, %v6482
    %v6550 = vpack.c.b16 %v6485, %v6484
    %v6551 = vpack.c.b16 %v6487, %v6486
    %v6552 = vpack.c.b16 %v6489, %v6488
    %v6553 = vpack.c.b16 %v6491, %v6490
    %v6554 = vpack.c.b16 %v6493, %v6492
    %v6555 = vpack.c.b16 %v6495, %v6494
    %v6556 = vpack.c.b16 %v6497, %v6496
    %v6557 = vpack.c.b16 %v6499, %v6498
    %v6558 = vpack.c.b16 %v6501, %v6500
    %v6559 = vpack.c.b16 %v6503, %v6502
    %6616 = vmatprep.subr.bf16.mxu0 0
    %6617 = vmatpush1.bf16.msra.mxu0 %v6504
    %6618 = vmatprep.subr.bf16.mxu0 0
    %6619 = vmatpush1.bf16.msra.mxu0 %v6505
    %6620 = vmatprep.subr.bf16.mxu0 0
    %6621 = vmatpush1.bf16.msra.mxu0 %v6506
    %6622 = vmatprep.subr.bf16.mxu0 0
    %6623 = vmatpush1.bf16.msra.mxu0 %v6507
    %6624 = vmatprep.subr.bf16.mxu0 0
    %6625 = vmatpush1.bf16.msra.mxu0 %v6508
    %6626 = vmatprep.subr.bf16.mxu0 0
    %6627 = vmatpush1.bf16.msra.mxu0 %v6509
    %6628 = vmatprep.subr.bf16.mxu0 0
    %6629 = vmatpush1.bf16.msra.mxu0 %v6510
    %6630 = vmatprep.subr.bf16.mxu0 0
    %6631 = vmatpush1.bf16.msra.mxu0 %v6511
    %6632 = vmatprep.subr.bf16.mxu0 0
    %6633 = vmatpush1.bf16.msra.mxu0 %v6512
    %6634 = vmatprep.subr.bf16.mxu0 0
    %6635 = vmatpush1.bf16.msra.mxu0 %v6513
    %6636 = vmatprep.subr.bf16.mxu0 0
    %6637 = vmatpush1.bf16.msra.mxu0 %v6514
    %6638 = vmatprep.subr.bf16.mxu0 0
    %6639 = vmatpush1.bf16.msra.mxu0 %v6515
    %6640 = vmatprep.subr.bf16.mxu0 0
    %6641 = vmatpush1.bf16.msra.mxu0 %v6516
    %6642 = vmatprep.subr.bf16.mxu0 0
    %6643 = vmatpush1.bf16.msra.mxu0 %v6517
    %6644 = vmatprep.subr.bf16.mxu0 0
    %6645 = vmatpush1.bf16.msra.mxu0 %v6518
    %6646 = vmatprep.subr.bf16.mxu0 0
    %6647 = vmatpush1.bf16.msra.mxu0 %v6519
    %6648 = vmatprep.mubr.bf16.mxu0 %v6155
    %6649 = vmatmul.mubr.bf16.gmra.mrb[0].mxu0 %v6154
    %v6650 = vpop.f32.mrb[0].mxu0
    %v6651 = vadd.f32 %v6278, %v6650
    %v6652 = vpop.f32.mrb[0].mxu0
    %v6653 = vpop.f32.mrb[0].mxu0
    %v6654 = vpop.f32.mrb[0].mxu0
    %6655 = vdwg.mxu0
    %6656 = vmatprep.subr.bf16.mxu0 0
    %6657 = vmatpush1.bf16.msra.mxu0 %v6520
    %6658 = vmatprep.subr.bf16.mxu0 0
    %6659 = vmatpush1.bf16.msra.mxu0 %v6521
    %6660 = vmatprep.subr.bf16.mxu0 0
    %6661 = vmatpush1.bf16.msra.mxu0 %v6522
    %6662 = vmatprep.subr.bf16.mxu0 0
    %6663 = vmatpush1.bf16.msra.mxu0 %v6523
    %6664 = vmatprep.subr.bf16.mxu0 0
    %6665 = vmatpush1.bf16.msra.mxu0 %v6524
    %6666 = vmatprep.subr.bf16.mxu0 0
    %6667 = vmatpush1.bf16.msra.mxu0 %v6525
    %6668 = vmatprep.subr.bf16.mxu0 0
    %6669 = vmatpush1.bf16.msra.mxu0 %v6526
    %6670 = vmatprep.subr.bf16.mxu0 0
    %6671 = vmatpush1.bf16.msra.mxu0 %v6527
    %6672 = vmatprep.subr.bf16.mxu0 0
    %6673 = vmatpush1.bf16.msra.mxu0 %v6528
    %6674 = vmatprep.subr.bf16.mxu0 0
    %6675 = vmatpush1.bf16.msra.mxu0 %v6529
    %6676 = vmatprep.subr.bf16.mxu0 0
    %6677 = vmatpush1.bf16.msra.mxu0 %v6530
    %6678 = vmatprep.subr.bf16.mxu0 0
    %6679 = vmatpush1.bf16.msra.mxu0 %v6531
    %6680 = vmatprep.subr.bf16.mxu0 0
    %6681 = vmatpush1.bf16.msra.mxu0 %v6532
    %6682 = vmatprep.subr.bf16.mxu0 0
    %6683 = vmatpush1.bf16.msra.mxu0 %v6533
    %6684 = vmatprep.subr.bf16.mxu0 0
    %6685 = vmatpush1.bf16.msra.mxu0 %v6534
    %6686 = vmatprep.subr.bf16.mxu0 0
    %6687 = vmatpush1.bf16.msra.mxu0 %v6535
    %6688 = vmatprep.mubr.bf16.mxu0 %v6157
    %6689 = vmatmul.mubr.bf16.gmra.mrb[0].mxu0 %v6156
    %v6690 = vpop.f32.mrb[0].mxu0
    %v6691 = vadd.f32 %v6651, %v6690
    %v6692 = vpop.f32.mrb[0].mxu0
    %v6693 = vpop.f32.mrb[0].mxu0
    %v6694 = vpop.f32.mrb[0].mxu0
    %6695 = vdwg.mxu0
    %6696 = vmatprep.subr.bf16.mxu0 0
    %6697 = vmatpush1.bf16.msra.mxu0 %v6536
    %6698 = vmatprep.subr.bf16.mxu0 0
    %6699 = vmatpush1.bf16.msra.mxu0 %v6537
    %6700 = vmatprep.subr.bf16.mxu0 0
    %6701 = vmatpush1.bf16.msra.mxu0 %v6538
    %6702 = vmatprep.subr.bf16.mxu0 0
    %6703 = vmatpush1.bf16.msra.mxu0 %v6539
    %6704 = vmatprep.subr.bf16.mxu0 0
    %6705 = vmatpush1.bf16.msra.mxu0 %v6540
    %6706 = vmatprep.subr.bf16.mxu0 0
    %6707 = vmatpush1.bf16.msra.mxu0 %v6541
    %6708 = vmatprep.subr.bf16.mxu0 0
    %6709 = vmatpush1.bf16.msra.mxu0 %v6542
    %6710 = vmatprep.subr.bf16.mxu0 0
    %6711 = vmatpush1.bf16.msra.mxu0 %v6543
    %6712 = vmatprep.subr.bf16.mxu0 0
    %6713 = vmatpush1.bf16.msra.mxu0 %v6544
    %6714 = vmatprep.subr.bf16.mxu0 0
    %6715 = vmatpush1.bf16.msra.mxu0 %v6545
    %6716 = vmatprep.subr.bf16.mxu0 0
    %6717 = vmatpush1.bf16.msra.mxu0 %v6546
    %6718 = vmatprep.subr.bf16.mxu0 0
    %6719 = vmatpush1.bf16.msra.mxu0 %v6547
    %6720 = vmatprep.subr.bf16.mxu0 0
    %6721 = vmatpush1.bf16.msra.mxu0 %v6548
    %6722 = vmatprep.subr.bf16.mxu0 0
    %6723 = vmatpush1.bf16.msra.mxu0 %v6549
    %6724 = vmatprep.subr.bf16.mxu0 0
    %6725 = vmatpush1.bf16.msra.mxu0 %v6550
    %6726 = vmatprep.subr.bf16.mxu0 0
    %6727 = vmatpush1.bf16.msra.mxu0 %v6551
    %6728 = vmatprep.mubr.bf16.mxu0 %v6159
    %6729 = vmatmul.mubr.bf16.gmra.mrb[0].mxu0 %v6158
    %v6730 = vpop.f32.mrb[0].mxu0
    %v6731 = vadd.f32 %v6691, %v6730
    %v6732 = vpop.f32.mrb[0].mxu0
    %v6733 = vpop.f32.mrb[0].mxu0
    %v6734 = vpop.f32.mrb[0].mxu0
    %6735 = vdwg.mxu0
    %6736 = vmatprep.subr.bf16.mxu0 0
    %6737 = vmatpush1.bf16.msra.mxu0 %v6552
    %6738 = vmatprep.subr.bf16.mxu0 0
    %6739 = vmatpush1.bf16.msra.mxu0 %v6553
    %6740 = vmatprep.subr.bf16.mxu0 0
    %6741 = vmatpush1.bf16.msra.mxu0 %v6554
    %6742 = vmatprep.subr.bf16.mxu0 0
    %6743 = vmatpush1.bf16.msra.mxu0 %v6555
    %6744 = vmatprep.subr.bf16.mxu0 0
    %6745 = vmatpush1.bf16.msra.mxu0 %v6556
    %6746 = vmatprep.subr.bf16.mxu0 0
    %6747 = vmatpush1.bf16.msra.mxu0 %v6557
    %6748 = vmatprep.subr.bf16.mxu0 0
    %6749 = vmatpush1.bf16.msra.mxu0 %v6558
    %6750 = vmatprep.subr.bf16.mxu0 0
    %6751 = vmatpush1.bf16.msra.mxu0 %v6559
    %6752 = vmatprep.subr.bf16.mxu0 0
    %6753 = vmatpush1.bf16.msra.mxu0 0
    %6754 = vmatprep.subr.bf16.mxu0 0
    %6755 = vmatpush1.bf16.msra.mxu0 0
    %6756 = vmatprep.subr.bf16.mxu0 0
    %6757 = vmatpush1.bf16.msra.mxu0 0
    %6758 = vmatprep.subr.bf16.mxu0 0
    %6759 = vmatpush1.bf16.msra.mxu0 0
    %6760 = vmatprep.subr.bf16.mxu0 0
    %6761 = vmatpush1.bf16.msra.mxu0 0
    %6762 = vmatprep.subr.bf16.mxu0 0
    %6763 = vmatpush1.bf16.msra.mxu0 0
    %6764 = vmatprep.subr.bf16.mxu0 0
    %6765 = vmatpush1.bf16.msra.mxu0 0
    %6766 = vmatprep.subr.bf16.mxu0 0
    %6767 = vmatpush1.bf16.msra.mxu0 0
    %6768 = vmatprep.mubr.bf16.mxu0 0
    %6769 = vmatmul.mubr.bf16.gmra.mrb[0].mxu0 %v6160
    %v6770 = vpop.f32.mrb[0].mxu0
    %v6771 = vadd.f32 %v6731, %v6770
    %v6772 = vpop.f32.mrb[0].mxu0
    %v6773 = vpop.f32.mrb[0].mxu0
    %v6774 = vpop.f32.mrb[0].mxu0
    %6775 = vdwg.mxu0
    %6776 = vst [vmem:[%s7] sm:$0xff] %v6771
    // Predicated region
    $region54: #{fc_net2_forward.1} parent=1 // pred_check
      _
    $region55: #{fc_net2_forward.1} parent=1 // pred_check_branch
      %6778 = sbr.rel (0) target = $region57
    $region56: #{fc_net2_forward.1} parent=1 // pred_region
      _
    $region57: #{fc_net2_forward.1} parent=1 // pred_fallthru
      _
    // Predicated region
    $region58: #{fc_net2_forward.1} parent=1 // pred_check
      _
    $region59: #{fc_net2_forward.1} parent=1 // pred_check_branch
      %6780 = sbr.rel (0) target = $region61
    $region60: #{fc_net2_forward.1} parent=1 // pred_region
      _
    $region61: #{fc_net2_forward.1} parent=1 // pred_fallthru
      _
    %6781 = vsyncpa [#allocation3], 1
    %6782 = vsyncpa [#allocation5], 1
    %6783 = vsyncpa [#allocation8], 1
    %6784 = vsyncpa [#allocation11], 1

</llo_original>
